<compile_context>
chip_gen: v7x
topology: tpu7x:2x2x1
jax: 0.10.0
libtpu: 0.0.40
codegen_flags: <defaults>
</compile_context>

<pallas_src>
import functools

import jax
import jax.numpy as jnp
from jax.experimental import pallas as pl
from jax.experimental.pallas import tpu as pltpu

_BN_EPS = 1e-5

_ALL_WEIGHTS = ("wfc1", "wfc2", "wc1", "t1", "wc2", "t2",
                "wse1", "wse2", "ws", "wcat", "tcat")
_STAGE1_WEIGHTS = ("wc1", "t1", "wc2", "t2")
_STAGE2_WEIGHTS = ("wfc1", "wfc2", "wse1", "wse2", "ws", "wcat", "tcat")


# --------------------------------------------------------------------------- #
# In-kernel helpers (shared by the single-pass and two-pass kernels)
# --------------------------------------------------------------------------- #
def _gating_weights(xmean, wfc1, wfc2):
    """y = softmax(fc3(avg_pool(x))) over the 4 gates (exact math, tiny tensors)."""
    f32 = jnp.float32
    h = jnp.maximum(jnp.dot(xmean, wfc1, preferred_element_type=f32), 0.0)
    logits = jnp.dot(h, wfc2, preferred_element_type=f32)
    logits = logits - jnp.max(logits, axis=-1, keepdims=True)
    e = jnp.exp(logits)
    return e / jnp.sum(e, axis=-1, keepdims=True)


def _se_gate(midmean, wse1, wse2):
    """SELayer channel gate: sigmoid(fc(avg_pool(conv2 output)))."""
    f32 = jnp.float32
    h = jnp.maximum(jnp.dot(midmean, wse1, preferred_element_type=f32), 0.0)
    z = jnp.dot(h, wse2, preferred_element_type=f32)
    return 1.0 / (1.0 + jnp.exp(-z))


def _combined_gate_matrix(y, ws):
    """W_g = y0*W1 + y1*W2 + y2*W3 + y3*W4, combined in bf16 (feeds a bf16 matmul)."""
    yb = y.astype(jnp.bfloat16)
    return (yb[:, 0:1, None] * ws[0] + yb[:, 1:2, None] * ws[1]
            + yb[:, 2:3, None] * ws[2] + yb[:, 3:4, None] * ws[3])


def _residual_tail(x2_bf, outm_bf, wcat_ref, tcat_ref, fuse_concat):
    """relu([x | outc] @ [wds; wc3] + (tds + t3))  -- conv3 + downsample fused."""
    f32 = jnp.float32
    tcat = tcat_ref[...]
    if fuse_concat:
        # both pieces are 128-lane aligned -> single MXU contraction over K=Cin+P.
        lhs = jnp.concatenate([x2_bf, outm_bf], axis=-1)
        acc = jnp.dot(lhs, wcat_ref[...], preferred_element_type=f32) + tcat
    else:
        cin = x2_bf.shape[-1]
        p = wcat_ref.shape[0] - cin
        acc = jnp.dot(x2_bf, wcat_ref[pl.ds(0, cin), :],
                      preferred_element_type=f32) + tcat
        acc = acc + jnp.dot(outm_bf, wcat_ref[pl.ds(cin, p), :],
                            preferred_element_type=f32)
    return jnp.maximum(acc, 0.0)


# --------------------------------------------------------------------------- #
# Kernels
# --------------------------------------------------------------------------- #
def _single_pass_kernel(fuse_concat, inv_hw,
                        x_ref, wfc1_ref, wfc2_ref, wc1_ref, t1_ref, wc2_ref, t2_ref,
                        wse1_ref, wse2_ref, ws_ref, wcat_ref, tcat_ref, out_ref):
    f32, bf16 = jnp.float32, jnp.bfloat16

    x3 = x_ref[...]                                   # (bb, HW, Cin) bf16
    bb, hw, cin = x3.shape
    x2 = x3.reshape(bb * hw, cin)                     # merged rows for shared-weight matmuls

    # gating branch (global avg pool with f32 accumulation, no f32 copy of x)
    xmean = jnp.sum(x3, axis=1, dtype=f32) * inv_hw   # (bb, Cin)
    y = _gating_weights(xmean, wfc1_ref[...], wfc2_ref[...])

    # conv1 + bn1 (folded) + relu ; conv2 + bn2 (folded)
    h1 = jnp.dot(x2, wc1_ref[...], preferred_element_type=f32) + t1_ref[...]
    h1 = jnp.maximum(h1, 0.0)
    mid = jnp.dot(h1.astype(bf16), wc2_ref[...], preferred_element_type=f32) + t2_ref[...]
    p = mid.shape[-1]
    mid3_f32 = mid.reshape(bb, hw, p)
    mid3 = mid3_f32.astype(bf16)                      # stored intermediate stays bf16

    # SE channel gate (mean taken straight off the f32 MXU result)
    se = _se_gate(jnp.sum(mid3_f32, axis=1) * inv_hw, wse1_ref[...], wse2_ref[...])

    # four gated 1x1 convs collapsed into ONE per-batch bf16 matmul
    wg = _combined_gate_matrix(y, ws_ref[...])        # (bb, P, P) bf16
    out2 = jnp.einsum("bhp,bpq->bhq", mid3, wg, preferred_element_type=f32)
    outc = (out2 + mid3 * se[:, None, :]).astype(bf16)

    # conv3 + bn3 + downsample + bn_ds + add + relu (fused tail)
    acc = _residual_tail(x2, outc.reshape(bb * hw, p), wcat_ref, tcat_ref, fuse_concat)
    out_ref[...] = acc.reshape(bb, hw, -1).astype(out_ref.dtype)


def _stage1_kernel(x_ref, wc1_ref, t1_ref, wc2_ref, t2_ref,
                   mid_ref, xsum_ref, midsum_ref):
    """Pass 1 of the HW-tiled path: conv1/conv2 + global-pool accumulation."""
    f32, bf16 = jnp.float32, jnp.bfloat16

    @pl.when(pl.program_id(1) == 0)
    def _init():
        xsum_ref[...] = jnp.zeros_like(xsum_ref)
        midsum_ref[...] = jnp.zeros_like(midsum_ref)

    x3 = x_ref[...]                                   # (bb, hwt, Cin) bf16
    bb, hwt, cin = x3.shape
    xsum_ref[...] += jnp.sum(x3, axis=1, keepdims=True, dtype=f32)

    x2 = x3.reshape(bb * hwt, cin)
    h1 = jnp.maximum(
        jnp.dot(x2, wc1_ref[...], preferred_element_type=f32) + t1_ref[...], 0.0)
    mid = jnp.dot(h1.astype(bf16), wc2_ref[...], preferred_element_type=f32) + t2_ref[...]
    mid3 = mid.reshape(bb, hwt, mid.shape[-1])
    midsum_ref[...] += jnp.sum(mid3, axis=1, keepdims=True)
    mid_ref[...] = mid3.astype(mid_ref.dtype)


def _stage2_kernel(fuse_concat, inv_hw,
                   x_ref, mid_ref, xsum_ref, midsum_ref,
                   wfc1_ref, wfc2_ref, wse1_ref, wse2_ref, ws_ref, wcat_ref, tcat_ref,
                   out_ref):
    """Pass 2 of the HW-tiled path: SE / gated convs / conv3+downsample / relu."""
    f32, bf16 = jnp.float32, jnp.bfloat16

    x3 = x_ref[...]                                   # (bb, hwt, Cin) bf16
    mid3 = mid_ref[...]                               # (bb, hwt, P)   bf16
    bb, hwt, cin = x3.shape
    p = mid3.shape[-1]

    xmean = xsum_ref[...][:, 0, :] * inv_hw           # (bb, Cin) f32
    midmean = midsum_ref[...][:, 0, :] * inv_hw       # (bb, P)   f32
    y = _gating_weights(xmean, wfc1_ref[...], wfc2_ref[...])
    se = _se_gate(midmean, wse1_ref[...], wse2_ref[...])

    wg = _combined_gate_matrix(y, ws_ref[...])
    out2 = jnp.einsum("bhp,bpq->bhq", mid3, wg, preferred_element_type=f32)
    outc = (out2 + mid3 * se[:, None, :]).astype(bf16)

    acc = _residual_tail(x3.reshape(bb * hwt, cin), outc.reshape(bb * hwt, p),
                         wcat_ref, tcat_ref, fuse_concat)
    out_ref[...] = acc.reshape(bb, hwt, -1).astype(out_ref.dtype)


# --------------------------------------------------------------------------- #
# VMEM budgeting / tile selection
# --------------------------------------------------------------------------- #
def _nbytes(arrays):
    return sum(int(a.size) * a.dtype.itemsize for a in arrays)


def _vmem_capacity_bytes():
    try:
        cap = int(pltpu.get_tpu_info().vmem_capacity_bytes)
        if cap > 0:
            return cap
    except Exception:
        pass
    return 64 << 20        # conservative: v7x per-TensorCore physical VMEM


def _single_pass_vmem_bytes(bb, hw, cin, p, out_isz, wbytes):
    rows = bb * hw
    io = rows * cin * 2 * 2 + rows * 4 * p * out_isz * 2     # double-buffered x / out
    inter = rows * (34 * p + 4 * cin)                        # live f32/bf16 slabs (upper bound)
    return io + inter + wbytes


def _stage1_vmem_bytes(bb, hwt, cin, p, wbytes):
    rows = bb * hwt
    io = rows * cin * 2 * 2 + rows * p * 2 * 2
    inter = rows * (10 * p + 4 * cin)
    return io + inter + wbytes


def _stage2_vmem_bytes(bb, hwt, cin, p, out_isz, wbytes):
    rows = bb * hwt
    io = rows * (cin + p) * 2 * 2 + rows * 4 * p * out_isz * 2
    inter = rows * (26 * p + 4 * cin) + bb * p * p * 2
    return io + inter + wbytes


def _pick_batch_block(B, fits):
    divs = [d for d in range(B, 0, -1) if B % d == 0]
    ok = [d for d in divs if fits(d)]
    if not ok:
        return None
    if B >= 2:
        # prefer >= 2 grid steps so a dual-TensorCore chip (v7x) shards the batch axis
        split = [d for d in ok if B // d >= 2]
        if split:
            return split[0]
    return ok[0]


def _pick_two_pass_tiles(B, HW, Cin, P, out_isz, wbytes, budget, batch_block, hw_block):
    b_divs = [batch_block] if batch_block is not None else \
        [d for d in range(B, 0, -1) if B % d == 0]
    if hw_block is not None:
        hw_divs = [hw_block]
    else:
        hw_divs = [d for d in range(HW, 0, -1) if HW % d == 0 and (d % 8 == 0 or d == HW)]

    def fits(bb, hwt):
        return (_stage1_vmem_bytes(bb, hwt, Cin, P, wbytes) <= budget
                and _stage2_vmem_bytes(bb, hwt, Cin, P, out_isz, wbytes) <= budget)

    cands = [(bb, hwt) for bb in b_divs for hwt in hw_divs if fits(bb, hwt)]
    if not cands:
        return b_divs[-1], hw_divs[-1]
    split = [c for c in cands if (B // c[0]) * (HW // c[1]) >= 2]
    pool = split if split else cands
    return max(pool, key=lambda c: c[0] * c[1])


def _const_specs(arrays, single_buffer):
    """Full-array BlockSpecs for grid-invariant weights (single-buffered if supported)."""
    specs = []
    for a in arrays:
        zeros = (0,) * a.ndim
        idx = (lambda *_, z=zeros: z)
        if single_buffer:
            try:
                specs.append(pl.BlockSpec(a.shape, idx, pipeline_mode=pl.Buffered(1)))
                continue
            except Exception:
                single_buffer = False
        specs.append(pl.BlockSpec(a.shape, idx))
    return specs


# --------------------------------------------------------------------------- #
# pallas_call builders
# --------------------------------------------------------------------------- #
def _call_single_pass(x, fp, bb, out_dtype, fuse_concat, vmem_limit, single_buffer):
    B, HW, Cin = x.shape
    P = fp["wc1"].shape[1]
    Cout = fp["wcat"].shape[1]
    weights = [fp[k] for k in _ALL_WEIGHTS]
    kernel = functools.partial(_single_pass_kernel, fuse_concat, 1.0 / HW)

    out_isz = jax.dtypes.canonicalize_dtype(out_dtype).itemsize
    flops = 2 * B * HW * (Cin * P + 2 * P * P + (Cin + P) * 4 * P)
    bytes_acc = int(x.size) * x.dtype.itemsize + B * HW * Cout * out_isz + _nbytes(weights)

    return pl.pallas_call(
        kernel,
        out_shape=jax.ShapeDtypeStruct((B, HW, Cout), out_dtype),
        grid=(B // bb,),
        in_specs=[pl.BlockSpec((bb, HW, Cin), lambda b: (b, 0, 0))]
                 + _const_specs(weights, single_buffer),
        out_specs=pl.BlockSpec((bb, HW, Cout), lambda b: (b, 0, 0)),
        compiler_params=pltpu.CompilerParams(
            dimension_semantics=("parallel",),
            vmem_limit_bytes=vmem_limit),
        cost_estimate=pl.CostEstimate(flops=int(flops),
                                      transcendentals=int(B * (P + 8)),
                                      bytes_accessed=int(bytes_acc)),
    )(x, *weights)


def _call_two_pass(x, fp, bb, hwt, out_dtype, fuse_concat, vmem_limit, single_buffer):
    B, HW, Cin = x.shape
    P = fp["wc1"].shape[1]
    Cout = fp["wcat"].shape[1]
    nb, nh = B // bb, HW // hwt
    out_isz = jax.dtypes.canonicalize_dtype(out_dtype).itemsize

    # ---- pass 1: conv1/conv2 per HW tile + pooled-sum accumulation ----
    w1 = [fp[k] for k in _STAGE1_WEIGHTS]
    mid, xsum, midsum = pl.pallas_call(
        _stage1_kernel,
        out_shape=(jax.ShapeDtypeStruct((B, HW, P), jnp.bfloat16),
                   jax.ShapeDtypeStruct((B, 1, Cin), jnp.float32),
                   jax.ShapeDtypeStruct((B, 1, P), jnp.float32)),
        grid=(nb, nh),
        in_specs=[pl.BlockSpec((bb, hwt, Cin), lambda b, h: (b, h, 0))]
                 + _const_specs(w1, single_buffer),
        out_specs=(pl.BlockSpec((bb, hwt, P), lambda b, h: (b, h, 0)),
                   pl.BlockSpec((bb, 1, Cin), lambda b, h: (b, 0, 0)),
                   pl.BlockSpec((bb, 1, P), lambda b, h: (b, 0, 0))),
        compiler_params=pltpu.CompilerParams(
            dimension_semantics=("parallel", "arbitrary"),
            vmem_limit_bytes=vmem_limit),
        cost_estimate=pl.CostEstimate(
            flops=int(2 * B * HW * (Cin * P + P * P)),
            transcendentals=0,
            bytes_accessed=int(int(x.size) * 2 + B * HW * P * 2 + _nbytes(w1))),
    )(x, *w1)

    # ---- pass 2: SE / gated convs / conv3+downsample / relu per HW tile ----
    w2 = [fp[k] for k in _STAGE2_WEIGHTS]
    kernel = functools.partial(_stage2_kernel, fuse_concat, 1.0 / HW)
    out = pl.pallas_call(
        kernel,
        out_shape=jax.ShapeDtypeStruct((B, HW, Cout), out_dtype),
        grid=(nb, nh),
        in_specs=[pl.BlockSpec((bb, hwt, Cin), lambda b, h: (b, h, 0)),
                  pl.BlockSpec((bb, hwt, P), lambda b, h: (b, h, 0)),
                  pl.BlockSpec((bb, 1, Cin), lambda b, h: (b, 0, 0)),
                  pl.BlockSpec((bb, 1, P), lambda b, h: (b, 0, 0))]
                 + _const_specs(w2, single_buffer),
        out_specs=pl.BlockSpec((bb, hwt, Cout), lambda b, h: (b, h, 0)),
        compiler_params=pltpu.CompilerParams(
            dimension_semantics=("parallel", "parallel"),
            vmem_limit_bytes=vmem_limit),
        cost_estimate=pl.CostEstimate(
            flops=int(2 * B * HW * (P * P + (Cin + P) * 4 * P)),
            transcendentals=int(B * (P + 8)),
            bytes_accessed=int(int(x.size) * 2 + B * HW * P * 2
                               + B * HW * Cout * out_isz + _nbytes(w2))),
    )(x, mid, xsum, midsum, *w2)
    return out


# --------------------------------------------------------------------------- #
# Wrappers
# --------------------------------------------------------------------------- #
def atten_block_nhwc(x_nhwc, fp, *, out_dtype=jnp.bfloat16, batch_block=None,
                     hw_block=None, force_two_pass=False, fuse_tail_concat=None):
    """Channel-last entry point (preferred: no layout transposes)."""
    B, H, W, Cin = x_nhwc.shape
    HW = H * W
    P = fp["wc1"].shape[1]
    Cout = fp["wcat"].shape[1]
    assert fp["wcat"].shape[0] == Cin + P
    if batch_block is not None:
        assert B % batch_block == 0
    if hw_block is not None:
        assert HW % hw_block == 0

    if fuse_tail_concat is None:
        # lane-dim concat is a clean relayout only when both pieces are 128-aligned
        fuse_tail_concat = (Cin % 128 == 0) and (P % 128 == 0)

    x = x_nhwc.reshape(B, HW, Cin).astype(jnp.bfloat16)

    cap = _vmem_capacity_bytes()
    fit_budget = int(cap * 0.7)
    vmem_limit = int(cap * 0.9)
    out_isz = jax.dtypes.canonicalize_dtype(out_dtype).itemsize

    def run(single_buffer, fuse_concat):
        wmult = 1 if single_buffer else 2
        wbytes = wmult * _nbytes([fp[k] for k in _ALL_WEIGHTS])

        if not force_two_pass:
            bb = batch_block
            if bb is None:
                bb = _pick_batch_block(
                    B, lambda d: _single_pass_vmem_bytes(d, HW, Cin, P, out_isz, wbytes)
                    <= fit_budget)
            if bb is not None:
                return _call_single_pass(x, fp, bb, out_dtype, fuse_concat,
                                         vmem_limit, single_buffer)

        bb, hwt = _pick_two_pass_tiles(B, HW, Cin, P, out_isz, wbytes, fit_budget,
                                       batch_block, hw_block)
        return _call_two_pass(x, fp, bb, hwt, out_dtype, fuse_concat,
                              vmem_limit, single_buffer)

    # Toolchain fallbacks: (single-buffered weights, fused-concat tail) ->
    # (double-buffered weights) -> (two-dot tail).
    attempts, seen = [], set()
    for a in [(True, fuse_tail_concat), (False, fuse_tail_concat), (False, False)]:
        if a not in seen:
            seen.add(a)
            attempts.append(a)
    out, last_err = None, None
    for sb, fc in attempts:
        try:
            out = run(sb, fc)
            break
        except Exception as e:          # pragma: no cover - toolchain fallback
            last_err = e
    if out is None:
        raise last_err
    return out.reshape(B, H, W, Cout)


def atten_block(x_nchw, fp, **kwargs):
    """PyTorch-layout (NCHW) wrapper around the NHWC kernel."""
    # cast before the transpose: halves the HBM traffic of the layout change.
    x_nhwc = jnp.transpose(x_nchw.astype(jnp.bfloat16), (0, 2, 3, 1))
    out = atten_block_nhwc(x_nhwc, fp, **kwargs)
    return jnp.transpose(out, (0, 3, 1, 2))


# --------------------------------------------------------------------------- #
# Parameter construction / BN folding (glue, done once outside the kernel)
# --------------------------------------------------------------------------- #
def fold_params(p, eps=_BN_EPS):
    """Fold eval-mode BatchNorm into the 1x1 convs, stack the gated-branch weights
    (bf16), and fuse conv3 + downsample into one concatenated-K weight."""
    def fold(w, b, bn_params):
        gamma, beta, mean, var = bn_params
        s = gamma * jax.lax.rsqrt(var + eps)
        w_f = (w * s[None, :]).astype(jnp.bfloat16)
        shift = beta - mean * s
        if b is not None:
            shift = shift + b * s
        return w_f, shift.reshape(1, -1).astype(jnp.float32)

    fp = {}
    fp["wfc1"], fp["wfc2"] = p["wfc1"], p["wfc2"]
    fp["wc1"], fp["t1"] = fold(p["wc1"], p["b1"], p["bn1"])
    fp["wc2"], fp["t2"] = fold(p["wc2"], p["b2"], p["bn2"])
    fp["wse1"], fp["wse2"] = p["wse1"], p["wse2"]
    fp["ws"] = jnp.stack([p["ws1"], p["ws2"], p["ws3"], p["ws4"]],
                         axis=0).astype(jnp.bfloat16)
    wc3, t3 = fold(p["wc3"], p["b3"], p["bn3"])
    wds, tds = fold(p["wds"], None, p["bnds"])
    fp["wcat"] = jnp.concatenate([wds, wc3], axis=0)     # (Cin + P, 4P) bf16
    fp["tcat"] = (tds + t3).astype(jnp.float32)          # (1, 4P)
    return fp


def init_params(key, inplanes, planes, reduction=16):
    # The PyTorch module only shape-checks when inplanes == planes (conv2 is
    # declared with `inplanes` input channels but applied to a `planes`-channel
    # tensor), and the residual add needs a downsample mapping inplanes -> 4P.
    assert inplanes == planes, "AttenBlock only shape-checks when inplanes == planes"
    sq = inplanes // reduction          # fc3 squeeze
    se_sq = planes // reduction         # SELayer squeeze
    keys = jax.random.split(key, 40)
    it = iter(keys)

    def w(shape, scale=0.1):
        return (scale * jax.random.normal(next(it), shape)).astype(jnp.float32)

    def bn(c):
        gamma = (1.0 + 0.1 * jax.random.normal(next(it), (c,))).astype(jnp.float32)
        beta = w((c,))
        mean = w((c,))
        var = jax.random.uniform(next(it), (c,), minval=0.5, maxval=1.5).astype(jnp.float32)
        return (gamma, beta, mean, var)

    p = {}
    p["wfc1"] = w((inplanes, sq))                    # Linear(inplanes, sq, bias=False)
    p["wfc2"] = w((sq, 4))                           # Linear(sq, 4, bias=False)
    p["wc1"] = w((inplanes, planes)); p["b1"] = w((planes,))
    p["bn1"] = bn(planes)
    p["wc2"] = w((planes, planes)); p["b2"] = w((planes,))
    p["bn2"] = bn(planes)
    p["wse1"] = w((planes, se_sq)); p["wse2"] = w((se_sq, planes))
    p["ws1"] = w((planes, planes)); p["ws2"] = w((planes, planes))
    p["ws3"] = w((planes, planes)); p["ws4"] = w((planes, planes))
    p["wc3"] = w((planes, 4 * planes)); p["b3"] = w((4 * planes,))
    p["bn3"] = bn(4 * planes)
    p["wds"] = w((inplanes, 4 * planes))             # standard ResNet downsample conv
    p["bnds"] = bn(4 * planes)
    return p


# --------------------------------------------------------------------------- #
# Pure-JAX f32 reference (mirrors the PyTorch forward, eval-mode BN)
# --------------------------------------------------------------------------- #
def atten_block_reference(x_nchw, p, eps=_BN_EPS):
    B, Cin, H, W = x_nchw.shape
    x = jnp.transpose(x_nchw, (0, 2, 3, 1)).reshape(B, H * W, Cin).astype(jnp.float32)

    def bn(z, bnp):
        gamma, beta, mean, var = bnp
        return (z - mean) * (gamma / jnp.sqrt(var + eps)) + beta

    xp = jnp.mean(x, axis=1)
    y = jax.nn.softmax(jnp.maximum(xp @ p["wfc1"], 0.0) @ p["wfc2"], axis=1)

    out = jnp.maximum(bn(x @ p["wc1"] + p["b1"], p["bn1"]), 0.0)
    out = bn(out @ p["wc2"] + p["b2"], p["bn2"])

    se = jax.nn.sigmoid(jnp.maximum(jnp.mean(out, axis=1) @ p["wse1"], 0.0) @ p["wse2"])
    out1 = out * se[:, None, :]
    out2 = (jnp.einsum("bhp,pq->bhq", out, p["ws1"]) * y[:, 0][:, None, None]
            + jnp.einsum("bhp,pq->bhq", out, p["ws2"]) * y[:, 1][:, None, None]
            + jnp.einsum("bhp,pq->bhq", out, p["ws3"]) * y[:, 2][:, None, None]
            + jnp.einsum("bhp,pq->bhq", out, p["ws4"]) * y[:, 3][:, None, None])
    out = out1 + out2
    out = bn(out @ p["wc3"] + p["b3"], p["bn3"])
    res = bn(x @ p["wds"], p["bnds"])
    out = jnp.maximum(out + res, 0.0)
    return jnp.transpose(out.reshape(B, H, W, -1), (0, 3, 1, 2))


# --------------------------------------------------------------------------- #
if __name__ == "__main__":
    key = jax.random.PRNGKey(0)
    kx, kp, kx2, kp2 = jax.random.split(key, 4)

    # ----- Config A: small shapes (module requires inplanes == planes) -----
    B, inplanes, H, W = 2, 32, 8, 8
    planes, reduction = 32, 16

    x = jax.random.normal(kx, (B, inplanes, H, W), dtype=jnp.float32)
    raw = init_params(kp, inplanes, planes, reduction)
    fp = fold_params(raw)
    ref = atten_block_reference(x, raw)

    # (1) auto path (single-pass fused kernel at this size, grid >= 2 for megacore)
    out = jax.block_until_ready(atten_block(x, fp))
    assert out.shape == (B, 4 * planes, H, W), out.shape
    out_f = out.astype(jnp.float32)
    assert bool(jnp.all(jnp.isfinite(out_f)))
    err = float(jnp.max(jnp.abs(out_f - ref)))
    assert bool(jnp.allclose(out_f, ref, atol=0.15, rtol=0.1)), err

    # (2) forced two-pass HW-tiled path (the large-HW / v7x structure)
    out2 = jax.block_until_ready(
        atten_block(x, fp, force_two_pass=True, batch_block=1, hw_block=16))
    out2_f = out2.astype(jnp.float32)
    err2 = float(jnp.max(jnp.abs(out2_f - ref)))
    assert bool(jnp.allclose(out2_f, ref, atol=0.15, rtol=0.1)), err2

    # ----- Config B: 128 channels exercises the fused concat-K tail -----
    B2, C2 = 2, 128
    xb = jax.random.normal(kx2, (B2, C2, 8, 8), dtype=jnp.float32)
    raw_b = init_params(kp2, C2, C2, reduction)
    fp_b = fold_params(raw_b)
    out_b = jax.block_until_ready(atten_block(xb, fp_b))
    ref_b = atten_block_reference(xb, raw_b)
    err_b = float(jnp.max(jnp.abs(out_b.astype(jnp.float32) - ref_b)))
    assert bool(jnp.allclose(out_b.astype(jnp.float32), ref_b, atol=0.3, rtol=0.1)), err_b

    print("KERNEL_OK")
</pallas_src>

<mosaic_0001>
module attributes {stable_mosaic.version = 11 : i64} {
  func.func @_single_pass_kernel(%arg0: i32, %arg1: memref<1x64x32xbf16, #tpu.memory_space<vmem>>, %arg2: memref<32x2xf32, #tpu.memory_space<vmem>>, %arg3: memref<2x4xf32, #tpu.memory_space<vmem>>, %arg4: memref<32x32xbf16, #tpu.memory_space<vmem>>, %arg5: memref<1x32xf32, #tpu.memory_space<vmem>>, %arg6: memref<32x32xbf16, #tpu.memory_space<vmem>>, %arg7: memref<1x32xf32, #tpu.memory_space<vmem>>, %arg8: memref<32x2xf32, #tpu.memory_space<vmem>>, %arg9: memref<2x32xf32, #tpu.memory_space<vmem>>, %arg10: memref<4x32x32xbf16, #tpu.memory_space<vmem>>, %arg11: memref<64x128xbf16, #tpu.memory_space<vmem>>, %arg12: memref<1x128xf32, #tpu.memory_space<vmem>>, %arg13: memref<1x64x128xbf16, #tpu.memory_space<vmem>>) attributes {dimension_semantics = [#tpu.dimension_semantics<parallel>], iteration_bounds = array<i64: 2>, scalar_prefetch = 0 : i64, scratch_operands = 0 : i64, tpu.core_type = #tpu.core_type<tc>, window_params = [{transform_indices = @transform_0, window_bounds = array<i64: 1, 64, 32>}, {pipeline_mode = #tpu.pipeline_mode<synchronous>, transform_indices = @transform_1, window_bounds = array<i64: 32, 2>}, {pipeline_mode = #tpu.pipeline_mode<synchronous>, transform_indices = @transform_2, window_bounds = array<i64: 2, 4>}, {pipeline_mode = #tpu.pipeline_mode<synchronous>, transform_indices = @transform_3, window_bounds = array<i64: 32, 32>}, {pipeline_mode = #tpu.pipeline_mode<synchronous>, transform_indices = @transform_4, window_bounds = array<i64: 1, 32>}, {pipeline_mode = #tpu.pipeline_mode<synchronous>, transform_indices = @transform_5, window_bounds = array<i64: 32, 32>}, {pipeline_mode = #tpu.pipeline_mode<synchronous>, transform_indices = @transform_6, window_bounds = array<i64: 1, 32>}, {pipeline_mode = #tpu.pipeline_mode<synchronous>, transform_indices = @transform_7, window_bounds = array<i64: 32, 2>}, {pipeline_mode = #tpu.pipeline_mode<synchronous>, transform_indices = @transform_8, window_bounds = array<i64: 2, 32>}, {pipeline_mode = #tpu.pipeline_mode<synchronous>, transform_indices = @transform_9, window_bounds = array<i64: 4, 32, 32>}, {pipeline_mode = #tpu.pipeline_mode<synchronous>, transform_indices = @transform_10, window_bounds = array<i64: 64, 128>}, {pipeline_mode = #tpu.pipeline_mode<synchronous>, transform_indices = @transform_11, window_bounds = array<i64: 1, 128>}, {transform_indices = @transform_12, window_bounds = array<i64: 1, 64, 128>}]} {
    %c0 = arith.constant 0 : index
    %c0_0 = arith.constant 0 : index
    %c0_1 = arith.constant 0 : index
    %0 = vector.load %arg1[%c0, %c0_0, %c0_1] : memref<1x64x32xbf16, #tpu.memory_space<vmem>>, vector<1x64x32xbf16>
    %1 = vector.shape_cast %0 : vector<1x64x32xbf16> to vector<64x32xbf16>
    %2 = arith.extf %0 : vector<1x64x32xbf16> to vector<1x64x32xf32>
    %cst = arith.constant dense<0.000000e+00> : vector<1x32xf32>
    %3 = vector.multi_reduction <add>, %2, %cst [1] : vector<1x64x32xf32> to vector<1x32xf32>
    %cst_2 = arith.constant 1.562500e-02 : f32
    %4 = vector.broadcast %cst_2 : f32 to vector<1x32xf32>
    %5 = arith.mulf %3, %4 : vector<1x32xf32>
    %c0_3 = arith.constant 0 : index
    %c0_4 = arith.constant 0 : index
    %6 = vector.load %arg2[%c0_3, %c0_4] : memref<32x2xf32, #tpu.memory_space<vmem>>, vector<32x2xf32>
    %c0_5 = arith.constant 0 : index
    %c0_6 = arith.constant 0 : index
    %7 = vector.load %arg3[%c0_5, %c0_6] : memref<2x4xf32, #tpu.memory_space<vmem>>, vector<2x4xf32>
    %cst_7 = arith.constant dense<0.000000e+00> : vector<1x2xf32>
    %8 = tpu.matmul %5, %6, %cst_7 {dimension_numbers = #tpu.dot_dimension_numbers<[1], [0], [0], [1], [0, 0, 1, 1], [], []>} : vector<1x32xf32>, vector<32x2xf32>, vector<1x2xf32> -> vector<1x2xf32>
    %cst_8 = arith.constant 0.000000e+00 : f32
    %9 = vector.broadcast %cst_8 : f32 to vector<1x2xf32>
    %10 = arith.maximumf %8, %9 : vector<1x2xf32>
    %cst_9 = arith.constant dense<0.000000e+00> : vector<1x4xf32>
    %11 = tpu.matmul %10, %7, %cst_9 {dimension_numbers = #tpu.dot_dimension_numbers<[1], [0], [0], [1], [0, 0, 1, 1], [], []>} : vector<1x2xf32>, vector<2x4xf32>, vector<1x4xf32> -> vector<1x4xf32>
    %cst_10 = arith.constant dense<0xFF800000> : vector<1xf32>
    %12 = vector.multi_reduction <maximumf>, %11, %cst_10 [1] : vector<1x4xf32> to vector<1xf32>
    %13 = vector.shape_cast %12 : vector<1xf32> to vector<1x1xf32>
    %14 = vector.broadcast %13 : vector<1x1xf32> to vector<1x4xf32>
    %15 = arith.subf %11, %14 : vector<1x4xf32>
    %16 = math.exp %15 : vector<1x4xf32>
    %cst_11 = arith.constant dense<0.000000e+00> : vector<1xf32>
    %17 = vector.multi_reduction <add>, %16, %cst_11 [1] : vector<1x4xf32> to vector<1xf32>
    %18 = vector.shape_cast %17 : vector<1xf32> to vector<1x1xf32>
    %19 = vector.broadcast %18 : vector<1x1xf32> to vector<1x4xf32>
    %20 = arith.divf %16, %19 : vector<1x4xf32>
    %c0_12 = arith.constant 0 : index
    %c0_13 = arith.constant 0 : index
    %21 = vector.load %arg4[%c0_12, %c0_13] : memref<32x32xbf16, #tpu.memory_space<vmem>>, vector<32x32xbf16>
    %cst_14 = arith.constant dense<0.000000e+00> : vector<64x32xf32>
    %22 = tpu.matmul %1, %21, %cst_14 {dimension_numbers = #tpu.dot_dimension_numbers<[1], [0], [0], [1], [0, 0, 1, 1], [], []>} : vector<64x32xbf16>, vector<32x32xbf16>, vector<64x32xf32> -> vector<64x32xf32>
    %c0_15 = arith.constant 0 : index
    %c0_16 = arith.constant 0 : index
    %23 = vector.load %arg5[%c0_15, %c0_16] : memref<1x32xf32, #tpu.memory_space<vmem>>, vector<1x32xf32>
    %24 = vector.broadcast %23 : vector<1x32xf32> to vector<64x32xf32>
    %25 = arith.addf %22, %24 : vector<64x32xf32>
    %cst_17 = arith.constant 0.000000e+00 : f32
    %26 = vector.broadcast %cst_17 : f32 to vector<64x32xf32>
    %27 = arith.maximumf %25, %26 : vector<64x32xf32>
    %28 = arith.truncf %27 : vector<64x32xf32> to vector<64x32xbf16>
    %c0_18 = arith.constant 0 : index
    %c0_19 = arith.constant 0 : index
    %29 = vector.load %arg6[%c0_18, %c0_19] : memref<32x32xbf16, #tpu.memory_space<vmem>>, vector<32x32xbf16>
    %cst_20 = arith.constant dense<0.000000e+00> : vector<64x32xf32>
    %30 = tpu.matmul %28, %29, %cst_20 {dimension_numbers = #tpu.dot_dimension_numbers<[1], [0], [0], [1], [0, 0, 1, 1], [], []>} : vector<64x32xbf16>, vector<32x32xbf16>, vector<64x32xf32> -> vector<64x32xf32>
    %c0_21 = arith.constant 0 : index
    %c0_22 = arith.constant 0 : index
    %31 = vector.load %arg7[%c0_21, %c0_22] : memref<1x32xf32, #tpu.memory_space<vmem>>, vector<1x32xf32>
    %32 = vector.broadcast %31 : vector<1x32xf32> to vector<64x32xf32>
    %33 = arith.addf %30, %32 : vector<64x32xf32>
    %34 = vector.shape_cast %33 : vector<64x32xf32> to vector<1x64x32xf32>
    %35 = arith.truncf %34 : vector<1x64x32xf32> to vector<1x64x32xbf16>
    %cst_23 = arith.constant dense<0.000000e+00> : vector<1x32xf32>
    %36 = vector.multi_reduction <add>, %34, %cst_23 [1] : vector<1x64x32xf32> to vector<1x32xf32>
    %cst_24 = arith.constant 1.562500e-02 : f32
    %37 = vector.broadcast %cst_24 : f32 to vector<1x32xf32>
    %38 = arith.mulf %36, %37 : vector<1x32xf32>
    %c0_25 = arith.constant 0 : index
    %c0_26 = arith.constant 0 : index
    %39 = vector.load %arg8[%c0_25, %c0_26] : memref<32x2xf32, #tpu.memory_space<vmem>>, vector<32x2xf32>
    %c0_27 = arith.constant 0 : index
    %c0_28 = arith.constant 0 : index
    %40 = vector.load %arg9[%c0_27, %c0_28] : memref<2x32xf32, #tpu.memory_space<vmem>>, vector<2x32xf32>
    %cst_29 = arith.constant dense<0.000000e+00> : vector<1x2xf32>
    %41 = tpu.matmul %38, %39, %cst_29 {dimension_numbers = #tpu.dot_dimension_numbers<[1], [0], [0], [1], [0, 0, 1, 1], [], []>} : vector<1x32xf32>, vector<32x2xf32>, vector<1x2xf32> -> vector<1x2xf32>
    %cst_30 = arith.constant 0.000000e+00 : f32
    %42 = vector.broadcast %cst_30 : f32 to vector<1x2xf32>
    %43 = arith.maximumf %41, %42 : vector<1x2xf32>
    %cst_31 = arith.constant dense<0.000000e+00> : vector<1x32xf32>
    %44 = tpu.matmul %43, %40, %cst_31 {dimension_numbers = #tpu.dot_dimension_numbers<[1], [0], [0], [1], [0, 0, 1, 1], [], []>} : vector<1x2xf32>, vector<2x32xf32>, vector<1x32xf32> -> vector<1x32xf32>
    %cst_32 = arith.constant 0.000000e+00 : f32
    %45 = vector.broadcast %cst_32 : f32 to vector<1x32xf32>
    %46 = arith.subf %45, %44 : vector<1x32xf32>
    %47 = math.exp %46 : vector<1x32xf32>
    %cst_33 = arith.constant 1.000000e+00 : f32
    %48 = vector.broadcast %cst_33 : f32 to vector<1x32xf32>
    %49 = arith.addf %48, %47 : vector<1x32xf32>
    %cst_34 = arith.constant 1.000000e+00 : f32
    %50 = vector.broadcast %cst_34 : f32 to vector<1x32xf32>
    %51 = arith.divf %50, %49 : vector<1x32xf32>
    %c0_35 = arith.constant 0 : index
    %c0_36 = arith.constant 0 : index
    %c0_37 = arith.constant 0 : index
    %52 = vector.load %arg10[%c0_35, %c0_36, %c0_37] : memref<4x32x32xbf16, #tpu.memory_space<vmem>>, vector<4x32x32xbf16>
    %53 = arith.truncf %20 : vector<1x4xf32> to vector<1x4xbf16>
    %54 = vector.extract_strided_slice %53 {offsets = [0, 0], sizes = [1, 1], strides = [1, 1]} : vector<1x4xbf16> to vector<1x1xbf16>
    %55 = vector.shape_cast %54 : vector<1x1xbf16> to vector<1x1x1xbf16>
    %56 = vector.extract_strided_slice %52 {offsets = [0, 0, 0], sizes = [1, 32, 32], strides = [1, 1, 1]} : vector<4x32x32xbf16> to vector<1x32x32xbf16>
    %57 = vector.shape_cast %56 : vector<1x32x32xbf16> to vector<32x32xbf16>
    %58 = vector.shape_cast %57 : vector<32x32xbf16> to vector<1x32x32xbf16>
    %59 = vector.broadcast %55 : vector<1x1x1xbf16> to vector<1x32x32xbf16>
    %60 = arith.mulf %59, %58 : vector<1x32x32xbf16>
    %61 = vector.extract_strided_slice %53 {offsets = [0, 1], sizes = [1, 1], strides = [1, 1]} : vector<1x4xbf16> to vector<1x1xbf16>
    %62 = vector.shape_cast %61 : vector<1x1xbf16> to vector<1x1x1xbf16>
    %63 = vector.extract_strided_slice %52 {offsets = [1, 0, 0], sizes = [1, 32, 32], strides = [1, 1, 1]} : vector<4x32x32xbf16> to vector<1x32x32xbf16>
    %64 = vector.shape_cast %63 : vector<1x32x32xbf16> to vector<32x32xbf16>
    %65 = vector.shape_cast %64 : vector<32x32xbf16> to vector<1x32x32xbf16>
    %66 = vector.broadcast %62 : vector<1x1x1xbf16> to vector<1x32x32xbf16>
    %67 = arith.mulf %66, %65 : vector<1x32x32xbf16>
    %68 = arith.addf %60, %67 : vector<1x32x32xbf16>
    %69 = vector.extract_strided_slice %53 {offsets = [0, 2], sizes = [1, 1], strides = [1, 1]} : vector<1x4xbf16> to vector<1x1xbf16>
    %70 = vector.shape_cast %69 : vector<1x1xbf16> to vector<1x1x1xbf16>
    %71 = vector.extract_strided_slice %52 {offsets = [2, 0, 0], sizes = [1, 32, 32], strides = [1, 1, 1]} : vector<4x32x32xbf16> to vector<1x32x32xbf16>
    %72 = vector.shape_cast %71 : vector<1x32x32xbf16> to vector<32x32xbf16>
    %73 = vector.shape_cast %72 : vector<32x32xbf16> to vector<1x32x32xbf16>
    %74 = vector.broadcast %70 : vector<1x1x1xbf16> to vector<1x32x32xbf16>
    %75 = arith.mulf %74, %73 : vector<1x32x32xbf16>
    %76 = arith.addf %68, %75 : vector<1x32x32xbf16>
    %77 = vector.extract_strided_slice %53 {offsets = [0, 3], sizes = [1, 1], strides = [1, 1]} : vector<1x4xbf16> to vector<1x1xbf16>
    %78 = vector.shape_cast %77 : vector<1x1xbf16> to vector<1x1x1xbf16>
    %79 = vector.extract_strided_slice %52 {offsets = [3, 0, 0], sizes = [1, 32, 32], strides = [1, 1, 1]} : vector<4x32x32xbf16> to vector<1x32x32xbf16>
    %80 = vector.shape_cast %79 : vector<1x32x32xbf16> to vector<32x32xbf16>
    %81 = vector.shape_cast %80 : vector<32x32xbf16> to vector<1x32x32xbf16>
    %82 = vector.broadcast %78 : vector<1x1x1xbf16> to vector<1x32x32xbf16>
    %83 = arith.mulf %82, %81 : vector<1x32x32xbf16>
    %84 = arith.addf %76, %83 : vector<1x32x32xbf16>
    "tpu.trace_start"() <{level = 10 : i32, message = "bhp,bpq->bhq"}> : () -> ()
    %cst_38 = arith.constant dense<0.000000e+00> : vector<1x64x32xf32>
    %85 = tpu.matmul %35, %84, %cst_38 {dimension_numbers = #tpu.dot_dimension_numbers<[2], [1], [1], [2], [0, 0, 0, 1, 1, 2], [0], [0]>} : vector<1x64x32xbf16>, vector<1x32x32xbf16>, vector<1x64x32xf32> -> vector<1x64x32xf32>
    "tpu.trace_stop"() : () -> ()
    %86 = vector.shape_cast %51 : vector<1x32xf32> to vector<1x1x32xf32>
    %87 = arith.extf %35 : vector<1x64x32xbf16> to vector<1x64x32xf32>
    %88 = vector.broadcast %86 : vector<1x1x32xf32> to vector<1x64x32xf32>
    %89 = arith.mulf %87, %88 : vector<1x64x32xf32>
    %90 = arith.addf %85, %89 : vector<1x64x32xf32>
    %91 = arith.truncf %90 : vector<1x64x32xf32> to vector<1x64x32xbf16>
    %92 = vector.shape_cast %91 : vector<1x64x32xbf16> to vector<64x32xbf16>
    %c0_39 = arith.constant 0 : index
    %c0_40 = arith.constant 0 : index
    %93 = vector.load %arg12[%c0_39, %c0_40] : memref<1x128xf32, #tpu.memory_space<vmem>>, vector<1x128xf32>
    %c0_41 = arith.constant 0 : index
    %c0_42 = arith.constant 0 : index
    %94 = vector.load %arg11[%c0_41, %c0_42] : memref<64x128xbf16, #tpu.memory_space<vmem>>, vector<32x128xbf16>
    %cst_43 = arith.constant dense<0.000000e+00> : vector<64x128xf32>
    %95 = tpu.matmul %1, %94, %cst_43 {dimension_numbers = #tpu.dot_dimension_numbers<[1], [0], [0], [1], [0, 0, 1, 1], [], []>} : vector<64x32xbf16>, vector<32x128xbf16>, vector<64x128xf32> -> vector<64x128xf32>
    %96 = vector.broadcast %93 : vector<1x128xf32> to vector<64x128xf32>
    %97 = arith.addf %95, %96 : vector<64x128xf32>
    %c32 = arith.constant 32 : index
    %c0_44 = arith.constant 0 : index
    %98 = vector.load %arg11[%c32, %c0_44] : memref<64x128xbf16, #tpu.memory_space<vmem>>, vector<32x128xbf16>
    %cst_45 = arith.constant dense<0.000000e+00> : vector<64x128xf32>
    %99 = tpu.matmul %92, %98, %cst_45 {dimension_numbers = #tpu.dot_dimension_numbers<[1], [0], [0], [1], [0, 0, 1, 1], [], []>} : vector<64x32xbf16>, vector<32x128xbf16>, vector<64x128xf32> -> vector<64x128xf32>
    %100 = arith.addf %97, %99 : vector<64x128xf32>
    %cst_46 = arith.constant 0.000000e+00 : f32
    %101 = vector.broadcast %cst_46 : f32 to vector<64x128xf32>
    %102 = arith.maximumf %100, %101 : vector<64x128xf32>
    %103 = vector.shape_cast %102 : vector<64x128xf32> to vector<1x64x128xf32>
    %104 = arith.truncf %103 : vector<1x64x128xf32> to vector<1x64x128xbf16>
    %c0_47 = arith.constant 0 : index
    %c0_48 = arith.constant 0 : index
    %c0_49 = arith.constant 0 : index
    %105 = vector.load %arg13[%c0_47, %c0_48, %c0_49] : memref<1x64x128xbf16, #tpu.memory_space<vmem>>, vector<1x64x128xbf16>
    tpu.vector_store %arg13[%c0_47, %c0_48, %c0_49], %104 {strides = array<i32>} : memref<1x64x128xbf16, #tpu.memory_space<vmem>>, vector<1x64x128xbf16>,
    return
  }
  func.func @transform_0(%arg0: i32) -> (i32, i32, i32) {
    %c0_i32 = arith.constant 0 : i32
    %c0_i32_0 = arith.constant 0 : i32
    %c0_i32_1 = arith.constant 0 : i32
    return %arg0, %c0_i32, %c0_i32_0 : i32, i32, i32
  }
  func.func @transform_1(%arg0: i32) -> (i32, i32) {
    %c0_i32 = arith.constant 0 : i32
    %c0_i32_0 = arith.constant 0 : i32
    %c0_i32_1 = arith.constant 0 : i32
    return %c0_i32, %c0_i32_0 : i32, i32
  }
  func.func @transform_2(%arg0: i32) -> (i32, i32) {
    %c0_i32 = arith.constant 0 : i32
    %c0_i32_0 = arith.constant 0 : i32
    %c0_i32_1 = arith.constant 0 : i32
    return %c0_i32, %c0_i32_0 : i32, i32
  }
  func.func @transform_3(%arg0: i32) -> (i32, i32) {
    %c0_i32 = arith.constant 0 : i32
    %c0_i32_0 = arith.constant 0 : i32
    %c0_i32_1 = arith.constant 0 : i32
    return %c0_i32, %c0_i32_0 : i32, i32
  }
  func.func @transform_4(%arg0: i32) -> (i32, i32) {
    %c0_i32 = arith.constant 0 : i32
    %c0_i32_0 = arith.constant 0 : i32
    %c0_i32_1 = arith.constant 0 : i32
    return %c0_i32, %c0_i32_0 : i32, i32
  }
  func.func @transform_5(%arg0: i32) -> (i32, i32) {
    %c0_i32 = arith.constant 0 : i32
    %c0_i32_0 = arith.constant 0 : i32
    %c0_i32_1 = arith.constant 0 : i32
    return %c0_i32, %c0_i32_0 : i32, i32
  }
  func.func @transform_6(%arg0: i32) -> (i32, i32) {
    %c0_i32 = arith.constant 0 : i32
    %c0_i32_0 = arith.constant 0 : i32
    %c0_i32_1 = arith.constant 0 : i32
    return %c0_i32, %c0_i32_0 : i32, i32
  }
  func.func @transform_7(%arg0: i32) -> (i32, i32) {
    %c0_i32 = arith.constant 0 : i32
    %c0_i32_0 = arith.constant 0 : i32
    %c0_i32_1 = arith.constant 0 : i32
    return %c0_i32, %c0_i32_0 : i32, i32
  }
  func.func @transform_8(%arg0: i32) -> (i32, i32) {
    %c0_i32 = arith.constant 0 : i32
    %c0_i32_0 = arith.constant 0 : i32
    %c0_i32_1 = arith.constant 0 : i32
    return %c0_i32, %c0_i32_0 : i32, i32
  }
  func.func @transform_9(%arg0: i32) -> (i32, i32, i32) {
    %c0_i32 = arith.constant 0 : i32
    %c0_i32_0 = arith.constant 0 : i32
    %c0_i32_1 = arith.constant 0 : i32
    %c0_i32_2 = arith.constant 0 : i32
    return %c0_i32, %c0_i32_0, %c0_i32_1 : i32, i32, i32
  }
  func.func @transform_10(%arg0: i32) -> (i32, i32) {
    %c0_i32 = arith.constant 0 : i32
    %c0_i32_0 = arith.constant 0 : i32
    %c0_i32_1 = arith.constant 0 : i32
    return %c0_i32, %c0_i32_0 : i32, i32
  }
  func.func @transform_11(%arg0: i32) -> (i32, i32) {
    %c0_i32 = arith.constant 0 : i32
    %c0_i32_0 = arith.constant 0 : i32
    %c0_i32_1 = arith.constant 0 : i32
    return %c0_i32, %c0_i32_0 : i32, i32
  }
  func.func @transform_12(%arg0: i32) -> (i32, i32, i32) {
    %c0_i32 = arith.constant 0 : i32
    %c0_i32_0 = arith.constant 0 : i32
    %c0_i32_1 = arith.constant 0 : i32
    return %arg0, %c0_i32, %c0_i32_0 : i32, i32, i32
  }
}

module attributes {stable_mosaic.version = 11 : i64} {
  func.func @_single_pass_kernel(%arg0: i32, %arg1: memref<1x64x32xbf16, #tpu.memory_space<vmem>>, %arg2: memref<32x2xf32, #tpu.memory_space<vmem>>, %arg3: memref<2x4xf32, #tpu.memory_space<vmem>>, %arg4: memref<32x32xbf16, #tpu.memory_space<vmem>>, %arg5: memref<1x32xf32, #tpu.memory_space<vmem>>, %arg6: memref<32x32xbf16, #tpu.memory_space<vmem>>, %arg7: memref<1x32xf32, #tpu.memory_space<vmem>>, %arg8: memref<32x2xf32, #tpu.memory_space<vmem>>, %arg9: memref<2x32xf32, #tpu.memory_space<vmem>>, %arg10: memref<4x32x32xbf16, #tpu.memory_space<vmem>>, %arg11: memref<64x128xbf16, #tpu.memory_space<vmem>>, %arg12: memref<1x128xf32, #tpu.memory_space<vmem>>, %arg13: memref<1x64x128xbf16, #tpu.memory_space<vmem>>) attributes {dimension_semantics = [#tpu.dimension_semantics<parallel>], iteration_bounds = array<i64: 2>, scalar_prefetch = 0 : i64, scratch_operands = 0 : i64, tpu.core_type = #tpu.core_type<tc>, window_params = [{transform_indices = @transform_0, window_bounds = array<i64: 1, 64, 32>}, {pipeline_mode = #tpu.pipeline_mode<synchronous>, transform_indices = @transform_1, window_bounds = array<i64: 32, 2>}, {pipeline_mode = #tpu.pipeline_mode<synchronous>, transform_indices = @transform_2, window_bounds = array<i64: 2, 4>}, {pipeline_mode = #tpu.pipeline_mode<synchronous>, transform_indices = @transform_3, window_bounds = array<i64: 32, 32>}, {pipeline_mode = #tpu.pipeline_mode<synchronous>, transform_indices = @transform_4, window_bounds = array<i64: 1, 32>}, {pipeline_mode = #tpu.pipeline_mode<synchronous>, transform_indices = @transform_5, window_bounds = array<i64: 32, 32>}, {pipeline_mode = #tpu.pipeline_mode<synchronous>, transform_indices = @transform_6, window_bounds = array<i64: 1, 32>}, {pipeline_mode = #tpu.pipeline_mode<synchronous>, transform_indices = @transform_7, window_bounds = array<i64: 32, 2>}, {pipeline_mode = #tpu.pipeline_mode<synchronous>, transform_indices = @transform_8, window_bounds = array<i64: 2, 32>}, {pipeline_mode = #tpu.pipeline_mode<synchronous>, transform_indices = @transform_9, window_bounds = array<i64: 4, 32, 32>}, {pipeline_mode = #tpu.pipeline_mode<synchronous>, transform_indices = @transform_10, window_bounds = array<i64: 64, 128>}, {pipeline_mode = #tpu.pipeline_mode<synchronous>, transform_indices = @transform_11, window_bounds = array<i64: 1, 128>}, {transform_indices = @transform_12, window_bounds = array<i64: 1, 64, 128>}]} {
    %c0 = arith.constant 0 : index
    %c0_0 = arith.constant 0 : index
    %c0_1 = arith.constant 0 : index
    %0 = vector.load %arg1[%c0, %c0_0, %c0_1] : memref<1x64x32xbf16, #tpu.memory_space<vmem>>, vector<1x64x32xbf16>
    %1 = vector.shape_cast %0 : vector<1x64x32xbf16> to vector<64x32xbf16>
    %2 = arith.extf %0 : vector<1x64x32xbf16> to vector<1x64x32xf32>
    %cst = arith.constant dense<0.000000e+00> : vector<1x32xf32>
    %3 = vector.multi_reduction <add>, %2, %cst [1] : vector<1x64x32xf32> to vector<1x32xf32>
    %cst_2 = arith.constant 1.562500e-02 : f32
    %4 = vector.broadcast %cst_2 : f32 to vector<1x32xf32>
    %5 = arith.mulf %3, %4 : vector<1x32xf32>
    %c0_3 = arith.constant 0 : index
    %c0_4 = arith.constant 0 : index
    %6 = vector.load %arg2[%c0_3, %c0_4] : memref<32x2xf32, #tpu.memory_space<vmem>>, vector<32x2xf32>
    %c0_5 = arith.constant 0 : index
    %c0_6 = arith.constant 0 : index
    %7 = vector.load %arg3[%c0_5, %c0_6] : memref<2x4xf32, #tpu.memory_space<vmem>>, vector<2x4xf32>
    %cst_7 = arith.constant dense<0.000000e+00> : vector<1x2xf32>
    %8 = tpu.matmul %5, %6, %cst_7 {dimension_numbers = #tpu.dot_dimension_numbers<[1], [0], [0], [1], [0, 0, 1, 1], [], []>} : vector<1x32xf32>, vector<32x2xf32>, vector<1x2xf32> -> vector<1x2xf32>
    %cst_8 = arith.constant 0.000000e+00 : f32
    %9 = vector.broadcast %cst_8 : f32 to vector<1x2xf32>
    %10 = arith.maximumf %8, %9 : vector<1x2xf32>
    %cst_9 = arith.constant dense<0.000000e+00> : vector<1x4xf32>
    %11 = tpu.matmul %10, %7, %cst_9 {dimension_numbers = #tpu.dot_dimension_numbers<[1], [0], [0], [1], [0, 0, 1, 1], [], []>} : vector<1x2xf32>, vector<2x4xf32>, vector<1x4xf32> -> vector<1x4xf32>
    %cst_10 = arith.constant dense<0xFF800000> : vector<1xf32>
    %12 = vector.multi_reduction <maximumf>, %11, %cst_10 [1] : vector<1x4xf32> to vector<1xf32>
    %13 = vector.shape_cast %12 : vector<1xf32> to vector<1x1xf32>
    %14 = vector.broadcast %13 : vector<1x1xf32> to vector<1x4xf32>
    %15 = arith.subf %11, %14 : vector<1x4xf32>
    %16 = math.exp %15 : vector<1x4xf32>
    %cst_11 = arith.constant dense<0.000000e+00> : vector<1xf32>
    %17 = vector.multi_reduction <add>, %16, %cst_11 [1] : vector<1x4xf32> to vector<1xf32>
    %18 = vector.shape_cast %17 : vector<1xf32> to vector<1x1xf32>
    %19 = vector.broadcast %18 : vector<1x1xf32> to vector<1x4xf32>
    %20 = arith.divf %16, %19 : vector<1x4xf32>
    %c0_12 = arith.constant 0 : index
    %c0_13 = arith.constant 0 : index
    %21 = vector.load %arg4[%c0_12, %c0_13] : memref<32x32xbf16, #tpu.memory_space<vmem>>, vector<32x32xbf16>
    %cst_14 = arith.constant dense<0.000000e+00> : vector<64x32xf32>
    %22 = tpu.matmul %1, %21, %cst_14 {dimension_numbers = #tpu.dot_dimension_numbers<[1], [0], [0], [1], [0, 0, 1, 1], [], []>} : vector<64x32xbf16>, vector<32x32xbf16>, vector<64x32xf32> -> vector<64x32xf32>
    %c0_15 = arith.constant 0 : index
    %c0_16 = arith.constant 0 : index
    %23 = vector.load %arg5[%c0_15, %c0_16] : memref<1x32xf32, #tpu.memory_space<vmem>>, vector<1x32xf32>
    %24 = vector.broadcast %23 : vector<1x32xf32> to vector<64x32xf32>
    %25 = arith.addf %22, %24 : vector<64x32xf32>
    %cst_17 = arith.constant 0.000000e+00 : f32
    %26 = vector.broadcast %cst_17 : f32 to vector<64x32xf32>
    %27 = arith.maximumf %25, %26 : vector<64x32xf32>
    %28 = arith.truncf %27 : vector<64x32xf32> to vector<64x32xbf16>
    %c0_18 = arith.constant 0 : index
    %c0_19 = arith.constant 0 : index
    %29 = vector.load %arg6[%c0_18, %c0_19] : memref<32x32xbf16, #tpu.memory_space<vmem>>, vector<32x32xbf16>
    %cst_20 = arith.constant dense<0.000000e+00> : vector<64x32xf32>
    %30 = tpu.matmul %28, %29, %cst_20 {dimension_numbers = #tpu.dot_dimension_numbers<[1], [0], [0], [1], [0, 0, 1, 1], [], []>} : vector<64x32xbf16>, vector<32x32xbf16>, vector<64x32xf32> -> vector<64x32xf32>
    %c0_21 = arith.constant 0 : index
    %c0_22 = arith.constant 0 : index
    %31 = vector.load %arg7[%c0_21, %c0_22] : memref<1x32xf32, #tpu.memory_space<vmem>>, vector<1x32xf32>
    %32 = vector.broadcast %31 : vector<1x32xf32> to vector<64x32xf32>
    %33 = arith.addf %30, %32 : vector<64x32xf32>
    %34 = vector.shape_cast %33 : vector<64x32xf32> to vector<1x64x32xf32>
    %35 = arith.truncf %34 : vector<1x64x32xf32> to vector<1x64x32xbf16>
    %cst_23 = arith.constant dense<0.000000e+00> : vector<1x32xf32>
    %36 = vector.multi_reduction <add>, %34, %cst_23 [1] : vector<1x64x32xf32> to vector<1x32xf32>
    %cst_24 = arith.constant 1.562500e-02 : f32
    %37 = vector.broadcast %cst_24 : f32 to vector<1x32xf32>
    %38 = arith.mulf %36, %37 : vector<1x32xf32>
    %c0_25 = arith.constant 0 : index
    %c0_26 = arith.constant 0 : index
    %39 = vector.load %arg8[%c0_25, %c0_26] : memref<32x2xf32, #tpu.memory_space<vmem>>, vector<32x2xf32>
    %c0_27 = arith.constant 0 : index
    %c0_28 = arith.constant 0 : index
    %40 = vector.load %arg9[%c0_27, %c0_28] : memref<2x32xf32, #tpu.memory_space<vmem>>, vector<2x32xf32>
    %cst_29 = arith.constant dense<0.000000e+00> : vector<1x2xf32>
    %41 = tpu.matmul %38, %39, %cst_29 {dimension_numbers = #tpu.dot_dimension_numbers<[1], [0], [0], [1], [0, 0, 1, 1], [], []>} : vector<1x32xf32>, vector<32x2xf32>, vector<1x2xf32> -> vector<1x2xf32>
    %cst_30 = arith.constant 0.000000e+00 : f32
    %42 = vector.broadcast %cst_30 : f32 to vector<1x2xf32>
    %43 = arith.maximumf %41, %42 : vector<1x2xf32>
    %cst_31 = arith.constant dense<0.000000e+00> : vector<1x32xf32>
    %44 = tpu.matmul %43, %40, %cst_31 {dimension_numbers = #tpu.dot_dimension_numbers<[1], [0], [0], [1], [0, 0, 1, 1], [], []>} : vector<1x2xf32>, vector<2x32xf32>, vector<1x32xf32> -> vector<1x32xf32>
    %cst_32 = arith.constant 0.000000e+00 : f32
    %45 = vector.broadcast %cst_32 : f32 to vector<1x32xf32>
    %46 = arith.subf %45, %44 : vector<1x32xf32>
    %47 = math.exp %46 : vector<1x32xf32>
    %cst_33 = arith.constant 1.000000e+00 : f32
    %48 = vector.broadcast %cst_33 : f32 to vector<1x32xf32>
    %49 = arith.addf %48, %47 : vector<1x32xf32>
    %cst_34 = arith.constant 1.000000e+00 : f32
    %50 = vector.broadcast %cst_34 : f32 to vector<1x32xf32>
    %51 = arith.divf %50, %49 : vector<1x32xf32>
    %c0_35 = arith.constant 0 : index
    %c0_36 = arith.constant 0 : index
    %c0_37 = arith.constant 0 : index
    %52 = vector.load %arg10[%c0_35, %c0_36, %c0_37] : memref<4x32x32xbf16, #tpu.memory_space<vmem>>, vector<4x32x32xbf16>
    %53 = arith.truncf %20 : vector<1x4xf32> to vector<1x4xbf16>
    %54 = vector.extract_strided_slice %53 {offsets = [0, 0], sizes = [1, 1], strides = [1, 1]} : vector<1x4xbf16> to vector<1x1xbf16>
    %55 = vector.shape_cast %54 : vector<1x1xbf16> to vector<1x1x1xbf16>
    %56 = vector.extract_strided_slice %52 {offsets = [0, 0, 0], sizes = [1, 32, 32], strides = [1, 1, 1]} : vector<4x32x32xbf16> to vector<1x32x32xbf16>
    %57 = vector.shape_cast %56 : vector<1x32x32xbf16> to vector<32x32xbf16>
    %58 = vector.shape_cast %57 : vector<32x32xbf16> to vector<1x32x32xbf16>
    %59 = vector.broadcast %55 : vector<1x1x1xbf16> to vector<1x32x32xbf16>
    %60 = arith.mulf %59, %58 : vector<1x32x32xbf16>
    %61 = vector.extract_strided_slice %53 {offsets = [0, 1], sizes = [1, 1], strides = [1, 1]} : vector<1x4xbf16> to vector<1x1xbf16>
    %62 = vector.shape_cast %61 : vector<1x1xbf16> to vector<1x1x1xbf16>
    %63 = vector.extract_strided_slice %52 {offsets = [1, 0, 0], sizes = [1, 32, 32], strides = [1, 1, 1]} : vector<4x32x32xbf16> to vector<1x32x32xbf16>
    %64 = vector.shape_cast %63 : vector<1x32x32xbf16> to vector<32x32xbf16>
    %65 = vector.shape_cast %64 : vector<32x32xbf16> to vector<1x32x32xbf16>
    %66 = vector.broadcast %62 : vector<1x1x1xbf16> to vector<1x32x32xbf16>
    %67 = arith.mulf %66, %65 : vector<1x32x32xbf16>
    %68 = arith.addf %60, %67 : vector<1x32x32xbf16>
    %69 = vector.extract_strided_slice %53 {offsets = [0, 2], sizes = [1, 1], strides = [1, 1]} : vector<1x4xbf16> to vector<1x1xbf16>
    %70 = vector.shape_cast %69 : vector<1x1xbf16> to vector<1x1x1xbf16>
    %71 = vector.extract_strided_slice %52 {offsets = [2, 0, 0], sizes = [1, 32, 32], strides = [1, 1, 1]} : vector<4x32x32xbf16> to vector<1x32x32xbf16>
    %72 = vector.shape_cast %71 : vector<1x32x32xbf16> to vector<32x32xbf16>
    %73 = vector.shape_cast %72 : vector<32x32xbf16> to vector<1x32x32xbf16>
    %74 = vector.broadcast %70 : vector<1x1x1xbf16> to vector<1x32x32xbf16>
    %75 = arith.mulf %74, %73 : vector<1x32x32xbf16>
    %76 = arith.addf %68, %75 : vector<1x32x32xbf16>
    %77 = vector.extract_strided_slice %53 {offsets = [0, 3], sizes = [1, 1], strides = [1, 1]} : vector<1x4xbf16> to vector<1x1xbf16>
    %78 = vector.shape_cast %77 : vector<1x1xbf16> to vector<1x1x1xbf16>
    %79 = vector.extract_strided_slice %52 {offsets = [3, 0, 0], sizes = [1, 32, 32], strides = [1, 1, 1]} : vector<4x32x32xbf16> to vector<1x32x32xbf16>
    %80 = vector.shape_cast %79 : vector<1x32x32xbf16> to vector<32x32xbf16>
    %81 = vector.shape_cast %80 : vector<32x32xbf16> to vector<1x32x32xbf16>
    %82 = vector.broadcast %78 : vector<1x1x1xbf16> to vector<1x32x32xbf16>
    %83 = arith.mulf %82, %81 : vector<1x32x32xbf16>
    %84 = arith.addf %76, %83 : vector<1x32x32xbf16>
    "tpu.trace_start"() <{level = 10 : i32, message = "bhp,bpq->bhq"}> : () -> ()
    %cst_38 = arith.constant dense<0.000000e+00> : vector<1x64x32xf32>
    %85 = tpu.matmul %35, %84, %cst_38 {dimension_numbers = #tpu.dot_dimension_numbers<[2], [1], [1], [2], [0, 0, 0, 1, 1, 2], [0], [0]>} : vector<1x64x32xbf16>, vector<1x32x32xbf16>, vector<1x64x32xf32> -> vector<1x64x32xf32>
    "tpu.trace_stop"() : () -> ()
    %86 = vector.shape_cast %51 : vector<1x32xf32> to vector<1x1x32xf32>
    %87 = arith.extf %35 : vector<1x64x32xbf16> to vector<1x64x32xf32>
    %88 = vector.broadcast %86 : vector<1x1x32xf32> to vector<1x64x32xf32>
    %89 = arith.mulf %87, %88 : vector<1x64x32xf32>
    %90 = arith.addf %85, %89 : vector<1x64x32xf32>
    %91 = arith.truncf %90 : vector<1x64x32xf32> to vector<1x64x32xbf16>
    %92 = vector.shape_cast %91 : vector<1x64x32xbf16> to vector<64x32xbf16>
    %c0_39 = arith.constant 0 : index
    %c0_40 = arith.constant 0 : index
    %93 = vector.load %arg12[%c0_39, %c0_40] : memref<1x128xf32, #tpu.memory_space<vmem>>, vector<1x128xf32>
    %c0_41 = arith.constant 0 : index
    %c0_42 = arith.constant 0 : index
    %94 = vector.load %arg11[%c0_41, %c0_42] : memref<64x128xbf16, #tpu.memory_space<vmem>>, vector<32x128xbf16>
    %cst_43 = arith.constant dense<0.000000e+00> : vector<64x128xf32>
    %95 = tpu.matmul %1, %94, %cst_43 {dimension_numbers = #tpu.dot_dimension_numbers<[1], [0], [0], [1], [0, 0, 1, 1], [], []>} : vector<64x32xbf16>, vector<32x128xbf16>, vector<64x128xf32> -> vector<64x128xf32>
    %96 = vector.broadcast %93 : vector<1x128xf32> to vector<64x128xf32>
    %97 = arith.addf %95, %96 : vector<64x128xf32>
    %c32 = arith.constant 32 : index
    %c0_44 = arith.constant 0 : index
    %98 = vector.load %arg11[%c32, %c0_44] : memref<64x128xbf16, #tpu.memory_space<vmem>>, vector<32x128xbf16>
    %cst_45 = arith.constant dense<0.000000e+00> : vector<64x128xf32>
    %99 = tpu.matmul %92, %98, %cst_45 {dimension_numbers = #tpu.dot_dimension_numbers<[1], [0], [0], [1], [0, 0, 1, 1], [], []>} : vector<64x32xbf16>, vector<32x128xbf16>, vector<64x128xf32> -> vector<64x128xf32>
    %100 = arith.addf %97, %99 : vector<64x128xf32>
    %cst_46 = arith.constant 0.000000e+00 : f32
    %101 = vector.broadcast %cst_46 : f32 to vector<64x128xf32>
    %102 = arith.maximumf %100, %101 : vector<64x128xf32>
    %103 = vector.shape_cast %102 : vector<64x128xf32> to vector<1x64x128xf32>
    %104 = arith.truncf %103 : vector<1x64x128xf32> to vector<1x64x128xbf16>
    %c0_47 = arith.constant 0 : index
    %c0_48 = arith.constant 0 : index
    %c0_49 = arith.constant 0 : index
    %105 = vector.load %arg13[%c0_47, %c0_48, %c0_49] : memref<1x64x128xbf16, #tpu.memory_space<vmem>>, vector<1x64x128xbf16>
    tpu.vector_store %arg13[%c0_47, %c0_48, %c0_49], %104 {strides = array<i32>} : memref<1x64x128xbf16, #tpu.memory_space<vmem>>, vector<1x64x128xbf16>,
    return
  }
  func.func @transform_0(%arg0: i32) -> (i32, i32, i32) {
    %c0_i32 = arith.constant 0 : i32
    %c0_i32_0 = arith.constant 0 : i32
    %c0_i32_1 = arith.constant 0 : i32
    return %arg0, %c0_i32, %c0_i32_0 : i32, i32, i32
  }
  func.func @transform_1(%arg0: i32) -> (i32, i32) {
    %c0_i32 = arith.constant 0 : i32
    %c0_i32_0 = arith.constant 0 : i32
    %c0_i32_1 = arith.constant 0 : i32
    return %c0_i32, %c0_i32_0 : i32, i32
  }
  func.func @transform_2(%arg0: i32) -> (i32, i32) {
    %c0_i32 = arith.constant 0 : i32
    %c0_i32_0 = arith.constant 0 : i32
    %c0_i32_1 = arith.constant 0 : i32
    return %c0_i32, %c0_i32_0 : i32, i32
  }
  func.func @transform_3(%arg0: i32) -> (i32, i32) {
    %c0_i32 = arith.constant 0 : i32
    %c0_i32_0 = arith.constant 0 : i32
    %c0_i32_1 = arith.constant 0 : i32
    return %c0_i32, %c0_i32_0 : i32, i32
  }
  func.func @transform_4(%arg0: i32) -> (i32, i32) {
    %c0_i32 = arith.constant 0 : i32
    %c0_i32_0 = arith.constant 0 : i32
    %c0_i32_1 = arith.constant 0 : i32
    return %c0_i32, %c0_i32_0 : i32, i32
  }
  func.func @transform_5(%arg0: i32) -> (i32, i32) {
    %c0_i32 = arith.constant 0 : i32
    %c0_i32_0 = arith.constant 0 : i32
    %c0_i32_1 = arith.constant 0 : i32
    return %c0_i32, %c0_i32_0 : i32, i32
  }
  func.func @transform_6(%arg0: i32) -> (i32, i32) {
    %c0_i32 = arith.constant 0 : i32
    %c0_i32_0 = arith.constant 0 : i32
    %c0_i32_1 = arith.constant 0 : i32
    return %c0_i32, %c0_i32_0 : i32, i32
  }
  func.func @transform_7(%arg0: i32) -> (i32, i32) {
    %c0_i32 = arith.constant 0 : i32
    %c0_i32_0 = arith.constant 0 : i32
    %c0_i32_1 = arith.constant 0 : i32
    return %c0_i32, %c0_i32_0 : i32, i32
  }
  func.func @transform_8(%arg0: i32) -> (i32, i32) {
    %c0_i32 = arith.constant 0 : i32
    %c0_i32_0 = arith.constant 0 : i32
    %c0_i32_1 = arith.constant 0 : i32
    return %c0_i32, %c0_i32_0 : i32, i32
  }
  func.func @transform_9(%arg0: i32) -> (i32, i32, i32) {
    %c0_i32 = arith.constant 0 : i32
    %c0_i32_0 = arith.constant 0 : i32
    %c0_i32_1 = arith.constant 0 : i32
    %c0_i32_2 = arith.constant 0 : i32
    return %c0_i32, %c0_i32_0, %c0_i32_1 : i32, i32, i32
  }
  func.func @transform_10(%arg0: i32) -> (i32, i32) {
    %c0_i32 = arith.constant 0 : i32
    %c0_i32_0 = arith.constant 0 : i32
    %c0_i32_1 = arith.constant 0 : i32
    return %c0_i32, %c0_i32_0 : i32, i32
  }
  func.func @transform_11(%arg0: i32) -> (i32, i32) {
    %c0_i32 = arith.constant 0 : i32
    %c0_i32_0 = arith.constant 0 : i32
    %c0_i32_1 = arith.constant 0 : i32
    return %c0_i32, %c0_i32_0 : i32, i32
  }
  func.func @transform_12(%arg0: i32) -> (i32, i32, i32) {
    %c0_i32 = arith.constant 0 : i32
    %c0_i32_0 = arith.constant 0 : i32
    %c0_i32_1 = arith.constant 0 : i32
    return %arg0, %c0_i32, %c0_i32_0 : i32, i32, i32
  }
}

</mosaic_0001>

<llo_original>
// kernel: tpu_custom_call.1
$region0: #{tpu_custom_call.1}
  #allocation0 [shape = 'u32[]', space=smem, size = 0x4, offset = 0x4, fixed_abs, tag = 'smem constant byte address 0x4 - core index']
  #allocation1 [shape = 'u32[144,128]{1,0:T(1,128)}', space=vmem, size = 0x12000, scoped, tag = 'internal scratch']
  %s0 = inlined_call_operand.vmem [shape: bf16[2,64,32], index: 0, kind: input, shape index: {}]
  %s1 = inlined_call_operand.vmem [shape: f32[32,2], index: 1, kind: input, shape index: {}]
  %s2 = inlined_call_operand.vmem [shape: f32[2,4], index: 2, kind: input, shape index: {}]
  %s3 = inlined_call_operand.vmem [shape: bf16[32,32], index: 3, kind: input, shape index: {}]
  %s4 = inlined_call_operand.vmem [shape: f32[1,32], index: 4, kind: input, shape index: {}]
  %s5 = inlined_call_operand.vmem [shape: bf16[32,32], index: 5, kind: input, shape index: {}]
  %s6 = inlined_call_operand.vmem [shape: f32[1,32], index: 6, kind: input, shape index: {}]
  %s7 = inlined_call_operand.vmem [shape: f32[32,2], index: 7, kind: input, shape index: {}]
  %s8 = inlined_call_operand.vmem [shape: f32[2,32], index: 8, kind: input, shape index: {}]
  %s9 = inlined_call_operand.vmem [shape: bf16[4,32,32], index: 9, kind: input, shape index: {}]
  %s10 = inlined_call_operand.vmem [shape: bf16[64,128], index: 10, kind: input, shape index: {}]
  %s11 = inlined_call_operand.vmem [shape: f32[1,128], index: 11, kind: input, shape index: {}]
  %s12 = inlined_call_operand.hbm [shape: bf16[2,64,128], index: 12, kind: output, shape index: {}]
  %s13 = sld [smem:[#allocation0]]
  $region81: #{tpu_custom_call.1} parent=0
    _
  %s15 = ssub.s32 1, %s13
  %s16 = scalar_select 0, %s15, %s13
  $region1: #{tpu_custom_call.1} parent=0
    #allocation2 [shape = 'u8[32768]{0}', space=vmem, size = 0x8000, scoped, tag = 'output window, operand 0']
    #allocation3 [shape = 's32[2]{0}', space=sflag, size = 0x8, scoped, tag = 'scoped memory for tpu_custom_call.1']
    %17 = vsyncpa [#allocation3], 0
    %s18 = scalar_lea.sflag [#allocation3], 1
    %19 = vsyncpa %s18, 0
    loop: start=0, step=1, limit=4
    $region2: #{tpu_custom_call.1} parent=1 // loop_pre_header
      _
    $region3: #{tpu_custom_call.1} parent=1 // loop_header
      %s21 = sphi 0, %s25
      %p22 = scmp.ge.s32.totalorder %s21, 4
      %s31 = sphi 0, %s33
      %s34 = sphi 0, %s31
      %s35 = sphi 0, %s34
      %s51 = sphi 0, %s35
      %s55 = sphi 0, %s55
      %s57 = sphi 0, %s55
      %s58 = sphi 0, %s57
      %s72 = sphi 0, %s58
      %s76 = sphi 0, %s76
      %s78 = sphi 0, %s76
      %s79 = sphi 0, %s78
      %s93 = sphi 0, %s79
      %s97 = sphi 0, %s97
      %s99 = sphi 0, %s97
      %s100 = sphi 0, %s99
      %s114 = sphi 0, %s100
      %s118 = sphi 0, %s118
      %s120 = sphi 0, %s118
      %s121 = sphi 0, %s120
      %s135 = sphi 0, %s121
      %s139 = sphi 0, %s139
      %s141 = sphi 0, %s139
      %s142 = sphi 0, %s141
      %s156 = sphi 0, %s142
      %s160 = sphi 0, %s160
      %s162 = sphi 0, %s160
      %s163 = sphi 0, %s162
      %s177 = sphi 0, %s163
      %s181 = sphi 0, %s181
      %s183 = sphi 0, %s181
      %s184 = sphi 0, %s183
      %s198 = sphi 0, %s184
      %s202 = sphi 0, %s202
      %s204 = sphi 0, %s202
      %s205 = sphi 0, %s204
      %s219 = sphi 0, %s205
      %s223 = sphi 0, %s223
      %s225 = sphi 0, %s223
      %s226 = sphi 0, %s225
      %s240 = sphi 0, %s226
      %s244 = sphi 0, %s244
      %s246 = sphi 0, %s244
      %s247 = sphi 0, %s246
      %s261 = sphi 0, %s247
      %s265 = sphi 0, %s265
      %s267 = sphi 0, %s265
      %s268 = sphi 0, %s267
      %s282 = sphi 0, %s268
      %s288 = sphi 0, %s290
      %s291 = sphi 0, %s288
      %s292 = sphi 0, %s291
      %s308 = sphi 0, %s292
    $region4: #{tpu_custom_call.1} parent=1 // loop_header_branch
      %24 = sbr.rel (%p22) target = $region8
    $region5: #{tpu_custom_call.1} parent=1 // loop_body
      %s26 = ssub.s32 %s21, 1
      %s27 = ssub.s32 %s21, 2
      %s28 = sadd.s32 %s21, 1
      %s29 = ssub.s32 %s21, %s28
      %p30 = scmp.eq.s32.totalorder %s29, 0
      %s32 = sadd.s32 %s31, 1
      %s33 = scalar_select %p30, %s31, %s32
      %p36 = pneg %p30
      %p37 = scmp.eq.s32.totalorder %s21, 1
      %p38 = por %p36, %p37
      %p39 = scmp.ne.s32.totalorder %s31, %s34
      %p40 = scmp.eq.s32.totalorder %s21, 0
      %p41 = por %p39, %p40
      %p42 = scmp.ne.s32.totalorder %s31, %s34
      %p43 = scmp.eq.s32.totalorder %s26, 1
      %p44 = por %p42, %p43
      %p45 = scmp.ne.s32.totalorder %s34, %s35
      %p46 = scmp.eq.s32.totalorder %s26, 0
      %p47 = por %p45, %p46
      %p48 = scmp.ne.s32.totalorder %s34, %s35
      %p49 = scmp.eq.s32.totalorder %s27, 1
      %p50 = por %p48, %p49
      %p52 = scmp.ne.s32.totalorder %s35, %s51
      %p53 = scmp.eq.s32.totalorder %s27, 0
      %p54 = por %p52, %p53
      %s56 = sadd.s32 %s55, 1
      %p59 = scmp.eq.s32.totalorder %s21, 1
      %p60 = scmp.ne.s32.totalorder %s55, %s57
      %p61 = scmp.eq.s32.totalorder %s21, 0
      %p62 = por %p60, %p61
      %p63 = scmp.ne.s32.totalorder %s55, %s57
      %p64 = scmp.eq.s32.totalorder %s26, 1
      %p65 = por %p63, %p64
      %p66 = scmp.ne.s32.totalorder %s57, %s58
      %p67 = scmp.eq.s32.totalorder %s26, 0
      %p68 = por %p66, %p67
      %p69 = scmp.ne.s32.totalorder %s57, %s58
      %p70 = scmp.eq.s32.totalorder %s27, 1
      %p71 = por %p69, %p70
      %p73 = scmp.ne.s32.totalorder %s58, %s72
      %p74 = scmp.eq.s32.totalorder %s27, 0
      %p75 = por %p73, %p74
      %s77 = sadd.s32 %s76, 1
      %p80 = scmp.eq.s32.totalorder %s21, 1
      %p81 = scmp.ne.s32.totalorder %s76, %s78
      %p82 = scmp.eq.s32.totalorder %s21, 0
      %p83 = por %p81, %p82
      %p84 = scmp.ne.s32.totalorder %s76, %s78
      %p85 = scmp.eq.s32.totalorder %s26, 1
      %p86 = por %p84, %p85
      %p87 = scmp.ne.s32.totalorder %s78, %s79
      %p88 = scmp.eq.s32.totalorder %s26, 0
      %p89 = por %p87, %p88
      %p90 = scmp.ne.s32.totalorder %s78, %s79
      %p91 = scmp.eq.s32.totalorder %s27, 1
      %p92 = por %p90, %p91
      %p94 = scmp.ne.s32.totalorder %s79, %s93
      %p95 = scmp.eq.s32.totalorder %s27, 0
      %p96 = por %p94, %p95
      %s98 = sadd.s32 %s97, 1
      %p101 = scmp.eq.s32.totalorder %s21, 1
      %p102 = scmp.ne.s32.totalorder %s97, %s99
      %p103 = scmp.eq.s32.totalorder %s21, 0
      %p104 = por %p102, %p103
      %p105 = scmp.ne.s32.totalorder %s97, %s99
      %p106 = scmp.eq.s32.totalorder %s26, 1
      %p107 = por %p105, %p106
      %p108 = scmp.ne.s32.totalorder %s99, %s100
      %p109 = scmp.eq.s32.totalorder %s26, 0
      %p110 = por %p108, %p109
      %p111 = scmp.ne.s32.totalorder %s99, %s100
      %p112 = scmp.eq.s32.totalorder %s27, 1
      %p113 = por %p111, %p112
      %p115 = scmp.ne.s32.totalorder %s100, %s114
      %p116 = scmp.eq.s32.totalorder %s27, 0
      %p117 = por %p115, %p116
      %s119 = sadd.s32 %s118, 1
      %p122 = scmp.eq.s32.totalorder %s21, 1
      %p123 = scmp.ne.s32.totalorder %s118, %s120
      %p124 = scmp.eq.s32.totalorder %s21, 0
      %p125 = por %p123, %p124
      %p126 = scmp.ne.s32.totalorder %s118, %s120
      %p127 = scmp.eq.s32.totalorder %s26, 1
      %p128 = por %p126, %p127
      %p129 = scmp.ne.s32.totalorder %s120, %s121
      %p130 = scmp.eq.s32.totalorder %s26, 0
      %p131 = por %p129, %p130
      %p132 = scmp.ne.s32.totalorder %s120, %s121
      %p133 = scmp.eq.s32.totalorder %s27, 1
      %p134 = por %p132, %p133
      %p136 = scmp.ne.s32.totalorder %s121, %s135
      %p137 = scmp.eq.s32.totalorder %s27, 0
      %p138 = por %p136, %p137
      %s140 = sadd.s32 %s139, 1
      %p143 = scmp.eq.s32.totalorder %s21, 1
      %p144 = scmp.ne.s32.totalorder %s139, %s141
      %p145 = scmp.eq.s32.totalorder %s21, 0
      %p146 = por %p144, %p145
      %p147 = scmp.ne.s32.totalorder %s139, %s141
      %p148 = scmp.eq.s32.totalorder %s26, 1
      %p149 = por %p147, %p148
      %p150 = scmp.ne.s32.totalorder %s141, %s142
      %p151 = scmp.eq.s32.totalorder %s26, 0
      %p152 = por %p150, %p151
      %p153 = scmp.ne.s32.totalorder %s141, %s142
      %p154 = scmp.eq.s32.totalorder %s27, 1
      %p155 = por %p153, %p154
      %p157 = scmp.ne.s32.totalorder %s142, %s156
      %p158 = scmp.eq.s32.totalorder %s27, 0
      %p159 = por %p157, %p158
      %s161 = sadd.s32 %s160, 1
      %p164 = scmp.eq.s32.totalorder %s21, 1
      %p165 = scmp.ne.s32.totalorder %s160, %s162
      %p166 = scmp.eq.s32.totalorder %s21, 0
      %p167 = por %p165, %p166
      %p168 = scmp.ne.s32.totalorder %s160, %s162
      %p169 = scmp.eq.s32.totalorder %s26, 1
      %p170 = por %p168, %p169
      %p171 = scmp.ne.s32.totalorder %s162, %s163
      %p172 = scmp.eq.s32.totalorder %s26, 0
      %p173 = por %p171, %p172
      %p174 = scmp.ne.s32.totalorder %s162, %s163
      %p175 = scmp.eq.s32.totalorder %s27, 1
      %p176 = por %p174, %p175
      %p178 = scmp.ne.s32.totalorder %s163, %s177
      %p179 = scmp.eq.s32.totalorder %s27, 0
      %p180 = por %p178, %p179
      %s182 = sadd.s32 %s181, 1
      %p185 = scmp.eq.s32.totalorder %s21, 1
      %p186 = scmp.ne.s32.totalorder %s181, %s183
      %p187 = scmp.eq.s32.totalorder %s21, 0
      %p188 = por %p186, %p187
      %p189 = scmp.ne.s32.totalorder %s181, %s183
      %p190 = scmp.eq.s32.totalorder %s26, 1
      %p191 = por %p189, %p190
      %p192 = scmp.ne.s32.totalorder %s183, %s184
      %p193 = scmp.eq.s32.totalorder %s26, 0
      %p194 = por %p192, %p193
      %p195 = scmp.ne.s32.totalorder %s183, %s184
      %p196 = scmp.eq.s32.totalorder %s27, 1
      %p197 = por %p195, %p196
      %p199 = scmp.ne.s32.totalorder %s184, %s198
      %p200 = scmp.eq.s32.totalorder %s27, 0
      %p201 = por %p199, %p200
      %s203 = sadd.s32 %s202, 1
      %p206 = scmp.eq.s32.totalorder %s21, 1
      %p207 = scmp.ne.s32.totalorder %s202, %s204
      %p208 = scmp.eq.s32.totalorder %s21, 0
      %p209 = por %p207, %p208
      %p210 = scmp.ne.s32.totalorder %s202, %s204
      %p211 = scmp.eq.s32.totalorder %s26, 1
      %p212 = por %p210, %p211
      %p213 = scmp.ne.s32.totalorder %s204, %s205
      %p214 = scmp.eq.s32.totalorder %s26, 0
      %p215 = por %p213, %p214
      %p216 = scmp.ne.s32.totalorder %s204, %s205
      %p217 = scmp.eq.s32.totalorder %s27, 1
      %p218 = por %p216, %p217
      %p220 = scmp.ne.s32.totalorder %s205, %s219
      %p221 = scmp.eq.s32.totalorder %s27, 0
      %p222 = por %p220, %p221
      %s224 = sadd.s32 %s223, 1
      %p227 = scmp.eq.s32.totalorder %s21, 1
      %p228 = scmp.ne.s32.totalorder %s223, %s225
      %p229 = scmp.eq.s32.totalorder %s21, 0
      %p230 = por %p228, %p229
      %p231 = scmp.ne.s32.totalorder %s223, %s225
      %p232 = scmp.eq.s32.totalorder %s26, 1
      %p233 = por %p231, %p232
      %p234 = scmp.ne.s32.totalorder %s225, %s226
      %p235 = scmp.eq.s32.totalorder %s26, 0
      %p236 = por %p234, %p235
      %p237 = scmp.ne.s32.totalorder %s225, %s226
      %p238 = scmp.eq.s32.totalorder %s27, 1
      %p239 = por %p237, %p238
      %p241 = scmp.ne.s32.totalorder %s226, %s240
      %p242 = scmp.eq.s32.totalorder %s27, 0
      %p243 = por %p241, %p242
      %s245 = sadd.s32 %s244, 1
      %p248 = scmp.eq.s32.totalorder %s21, 1
      %p249 = scmp.ne.s32.totalorder %s244, %s246
      %p250 = scmp.eq.s32.totalorder %s21, 0
      %p251 = por %p249, %p250
      %p252 = scmp.ne.s32.totalorder %s244, %s246
      %p253 = scmp.eq.s32.totalorder %s26, 1
      %p254 = por %p252, %p253
      %p255 = scmp.ne.s32.totalorder %s246, %s247
      %p256 = scmp.eq.s32.totalorder %s26, 0
      %p257 = por %p255, %p256
      %p258 = scmp.ne.s32.totalorder %s246, %s247
      %p259 = scmp.eq.s32.totalorder %s27, 1
      %p260 = por %p258, %p259
      %p262 = scmp.ne.s32.totalorder %s247, %s261
      %p263 = scmp.eq.s32.totalorder %s27, 0
      %p264 = por %p262, %p263
      %s266 = sadd.s32 %s265, 1
      %p269 = scmp.eq.s32.totalorder %s21, 1
      %p270 = scmp.ne.s32.totalorder %s265, %s267
      %p271 = scmp.eq.s32.totalorder %s21, 0
      %p272 = por %p270, %p271
      %p273 = scmp.ne.s32.totalorder %s265, %s267
      %p274 = scmp.eq.s32.totalorder %s26, 1
      %p275 = por %p273, %p274
      %p276 = scmp.ne.s32.totalorder %s267, %s268
      %p277 = scmp.eq.s32.totalorder %s26, 0
      %p278 = por %p276, %p277
      %p279 = scmp.ne.s32.totalorder %s267, %s268
      %p280 = scmp.eq.s32.totalorder %s27, 1
      %p281 = por %p279, %p280
      %p283 = scmp.ne.s32.totalorder %s268, %s282
      %p284 = scmp.eq.s32.totalorder %s27, 0
      %p285 = por %p283, %p284
      %s286 = ssub.s32 %s21, %s28
      %p287 = scmp.eq.s32.totalorder %s286, 0
      %s289 = sadd.s32 %s288, 1
      %s290 = scalar_select %p287, %s288, %s289
      %p293 = pneg %p287
      %p294 = scmp.eq.s32.totalorder %s21, 1
      %p295 = por %p293, %p294
      %p296 = scmp.ne.s32.totalorder %s288, %s291
      %p297 = scmp.eq.s32.totalorder %s21, 0
      %p298 = por %p296, %p297
      %p299 = scmp.ne.s32.totalorder %s288, %s291
      %p300 = scmp.eq.s32.totalorder %s26, 1
      %p301 = por %p299, %p300
      %p302 = scmp.ne.s32.totalorder %s291, %s292
      %p303 = scmp.eq.s32.totalorder %s26, 0
      %p304 = por %p302, %p303
      %p305 = scmp.ne.s32.totalorder %s291, %s292
      %p306 = scmp.eq.s32.totalorder %s27, 1
      %p307 = por %p305, %p306
      %p309 = scmp.ne.s32.totalorder %s292, %s308
      %p310 = scmp.eq.s32.totalorder %s27, 0
      %p311 = por %p309, %p310
      %p312 = scmp.le.s32.totalorder 1, %s21
      %p313 = scmp.lt.s32.totalorder %s21, 3
      %p314 = pnand %p312, %p313
      %p315 = pneg %p314
      // Predicated region
      $region9: #{tpu_custom_call.1} parent=5 // pred_check
        _
      $region10: #{tpu_custom_call.1} parent=5 // pred_check_branch
        %317 = sbr.rel (%p314) target = $region12
      $region11: #{tpu_custom_call.1} parent=5 // pred_region
        %s318 = ssub.s32 %s21, 1
        // Predicated region
        $region13: #{tpu_custom_call.1} parent=11 // pred_check
          %p319 = pneg %p68
        $region14: #{tpu_custom_call.1} parent=11 // pred_check_branch
          %321 = sbr.rel (%p319) target = $region16
        $region15: #{tpu_custom_call.1} parent=11 // pred_region
          _
        $region16: #{tpu_custom_call.1} parent=11 // pred_fallthru
          _
        // Predicated region
        $region17: #{tpu_custom_call.1} parent=11 // pred_check
          %p322 = pneg %p89
        $region18: #{tpu_custom_call.1} parent=11 // pred_check_branch
          %324 = sbr.rel (%p322) target = $region20
        $region19: #{tpu_custom_call.1} parent=11 // pred_region
          _
        $region20: #{tpu_custom_call.1} parent=11 // pred_fallthru
          _
        // Predicated region
        $region21: #{tpu_custom_call.1} parent=11 // pred_check
          %p325 = pneg %p110
        $region22: #{tpu_custom_call.1} parent=11 // pred_check_branch
          %327 = sbr.rel (%p325) target = $region24
        $region23: #{tpu_custom_call.1} parent=11 // pred_region
          _
        $region24: #{tpu_custom_call.1} parent=11 // pred_fallthru
          _
        // Predicated region
        $region25: #{tpu_custom_call.1} parent=11 // pred_check
          %p328 = pneg %p131
        $region26: #{tpu_custom_call.1} parent=11 // pred_check_branch
          %330 = sbr.rel (%p328) target = $region28
        $region27: #{tpu_custom_call.1} parent=11 // pred_region
          _
        $region28: #{tpu_custom_call.1} parent=11 // pred_fallthru
          _
        // Predicated region
        $region29: #{tpu_custom_call.1} parent=11 // pred_check
          %p331 = pneg %p152
        $region30: #{tpu_custom_call.1} parent=11 // pred_check_branch
          %333 = sbr.rel (%p331) target = $region32
        $region31: #{tpu_custom_call.1} parent=11 // pred_region
          _
        $region32: #{tpu_custom_call.1} parent=11 // pred_fallthru
          _
        // Predicated region
        $region33: #{tpu_custom_call.1} parent=11 // pred_check
          %p334 = pneg %p173
        $region34: #{tpu_custom_call.1} parent=11 // pred_check_branch
          %336 = sbr.rel (%p334) target = $region36
        $region35: #{tpu_custom_call.1} parent=11 // pred_region
          _
        $region36: #{tpu_custom_call.1} parent=11 // pred_fallthru
          _
        // Predicated region
        $region37: #{tpu_custom_call.1} parent=11 // pred_check
          %p337 = pneg %p194
        $region38: #{tpu_custom_call.1} parent=11 // pred_check_branch
          %339 = sbr.rel (%p337) target = $region40
        $region39: #{tpu_custom_call.1} parent=11 // pred_region
          _
        $region40: #{tpu_custom_call.1} parent=11 // pred_fallthru
          _
        // Predicated region
        $region41: #{tpu_custom_call.1} parent=11 // pred_check
          %p340 = pneg %p215
        $region42: #{tpu_custom_call.1} parent=11 // pred_check_branch
          %342 = sbr.rel (%p340) target = $region44
        $region43: #{tpu_custom_call.1} parent=11 // pred_region
          _
        $region44: #{tpu_custom_call.1} parent=11 // pred_fallthru
          _
        // Predicated region
        $region45: #{tpu_custom_call.1} parent=11 // pred_check
          %p343 = pneg %p236
        $region46: #{tpu_custom_call.1} parent=11 // pred_check_branch
          %345 = sbr.rel (%p343) target = $region48
        $region47: #{tpu_custom_call.1} parent=11 // pred_region
          _
        $region48: #{tpu_custom_call.1} parent=11 // pred_fallthru
          _
        // Predicated region
        $region49: #{tpu_custom_call.1} parent=11 // pred_check
          %p346 = pneg %p257
        $region50: #{tpu_custom_call.1} parent=11 // pred_check_branch
          %348 = sbr.rel (%p346) target = $region52
        $region51: #{tpu_custom_call.1} parent=11 // pred_region
          _
        $region52: #{tpu_custom_call.1} parent=11 // pred_fallthru
          _
        // Predicated region
        $region53: #{tpu_custom_call.1} parent=11 // pred_check
          %p349 = pneg %p278
        $region54: #{tpu_custom_call.1} parent=11 // pred_check_branch
          %351 = sbr.rel (%p349) target = $region56
        $region55: #{tpu_custom_call.1} parent=11 // pred_region
          _
        $region56: #{tpu_custom_call.1} parent=11 // pred_fallthru
          _
      $region12: #{tpu_custom_call.1} parent=5 // pred_fallthru
        _
      %p352 = scmp.lt.s32.totalorder %s21, 2
      // Predicated region
      $region57: #{tpu_custom_call.1} parent=5 // pred_check
        %p353 = pneg %p352
      $region58: #{tpu_custom_call.1} parent=5 // pred_check_branch
        %355 = sbr.rel (%p353) target = $region60
      $region59: #{tpu_custom_call.1} parent=5 // pred_region
        // Predicated region
        $region61: #{tpu_custom_call.1} parent=59 // pred_check
          %p356 = pneg %p41
        $region62: #{tpu_custom_call.1} parent=59 // pred_check_branch
          %358 = sbr.rel (%p356) target = $region64
        $region63: #{tpu_custom_call.1} parent=59 // pred_region
          %p359 = scmp.lt.s32.totalorder %s21, 1
          %s360 = scalar_select %p359, %s21, 1
          %s361 = smul.addr %s360, 8
          %s362 = smul.addr %s361, 4
          %s363 = scalar_lea.vmem %s0, %s362
        $region64: #{tpu_custom_call.1} parent=59 // pred_fallthru
          _
      $region60: #{tpu_custom_call.1} parent=5 // pred_fallthru
        _
      %p364 = scmp.le.s32.totalorder 1, %s21
      %p365 = scmp.lt.s32.totalorder %s21, 3
      %p366 = pnand %p364, %p365
      %p367 = pneg %p366
      // Predicated region
      $region65: #{tpu_custom_call.1} parent=5 // pred_check
        _
      $region66: #{tpu_custom_call.1} parent=5 // pred_check_branch
        %369 = sbr.rel (%p366) target = $region68
      $region67: #{tpu_custom_call.1} parent=5 // pred_region
        %s370 = ssub.s32 %s21, 1
        %p371 = scmp.lt.s32.totalorder %s26, 1
        %s372 = scalar_select %p371, %s26, 1
        %s373 = smul.addr %s372, 8
        %s374 = smul.addr %s373, 4
        %s375 = scalar_lea.vmem %s0, %s374
        %p376 = pneg %p47
        %p377 = pneg %p44
        %p378 = pneg %p68
        %p379 = pneg %p65
        %p380 = pneg %p89
        %p381 = pneg %p86
        %p382 = pneg %p110
        %p383 = pneg %p107
        %p384 = pneg %p131
        %p385 = pneg %p128
        %p386 = pneg %p152
        %p387 = pneg %p149
        %p388 = pneg %p173
        %p389 = pneg %p170
        %p390 = pneg %p194
        %p391 = pneg %p191
        %p392 = pneg %p215
        %p393 = pneg %p212
        %p394 = pneg %p236
        %p395 = pneg %p233
        %p396 = pneg %p257
        %p397 = pneg %p254
        %p398 = pneg %p278
        %p399 = pneg %p275
        %p400 = pneg %p304
        %p401 = pneg %p301
        %s402 = sand.u32 %s291, 1
        %s403 = scalar_lea.sflag [#allocation3], %s402
        %s404 = sand.u32 %s291, 1
        %s405 = smul.addr %s404, 32
        %s406 = scalar_lea.vmem [#allocation2], %s405
        %p407 = scmp.lt.s32.totalorder %s26, 1
        %s408 = scalar_select %p407, %s26, 1
        %s409 = smul.addr %s408, 8
        %s410 = smul.addr %s409, 4
        %s411 = scalar_lea.vmem %s0, %s410
        %v413 = vld [vmem:[%s411] sm:$0xf]
        %v414 = vld [vmem:[%s411 + $0x4] sm:$0xf]
        %v415 = vld [vmem:[%s411 + $0x8] sm:$0xf]
        %v416 = vld [vmem:[%s411 + $0xc] sm:$0xf]
        %v417 = vld [vmem:[%s411 + $0x10] sm:$0xf]
        %v418 = vld [vmem:[%s411 + $0x14] sm:$0xf]
        %v419 = vld [vmem:[%s411 + $0x18] sm:$0xf]
        %v420 = vld [vmem:[%s411 + $0x1c] sm:$0xf]
        %v421 = vunpack.c.l.bf16 %v413
        %v422 = vunpack.c.l.bf16 %v414
        %v423 = vunpack.c.l.bf16 %v415
        %v424 = vunpack.c.l.bf16 %v416
        %v425 = vunpack.c.l.bf16 %v417
        %v426 = vunpack.c.l.bf16 %v418
        %v427 = vunpack.c.l.bf16 %v419
        %v428 = vunpack.c.l.bf16 %v420
        %vm429 = vcmask 261120
        %v430 = vsel %vm429, %v421, 0.0
        %v431 = vsel %vm429, %v422, 0.0
        %v432 = vadd.f32 %v430, %v431
        %v433 = vsel %vm429, %v423, 0.0
        %v434 = vadd.f32 %v432, %v433
        %v435 = vsel %vm429, %v424, 0.0
        %v436 = vadd.f32 %v434, %v435
        %v437 = vsel %vm429, %v425, 0.0
        %v438 = vadd.f32 %v436, %v437
        %v439 = vsel %vm429, %v426, 0.0
        %v440 = vadd.f32 %v438, %v439
        %v441 = vsel %vm429, %v427, 0.0
        %v442 = vadd.f32 %v440, %v441
        %v443 = vsel %vm429, %v428, 0.0
        %v444 = vadd.f32 %v442, %v443
        %v445 = vrot.slane %v444, 4
        %v446 = vadd.f32 %v444, %v445
        %v447 = vrot.slane %v446, 2
        %v448 = vadd.f32 %v446, %v447
        %v449 = vrot.slane %v448, 1
        %v450 = vadd.f32 %v448, %v449
        %v451 = vmul.f32 %v450, 0.015625
        %v452 = vld [vmem:[%s1] sm:$0xff]
        %v453 = vld [vmem:[%s1 + $0x8] sm:$0xff]
        %v454 = vld [vmem:[%s1 + $0x10] sm:$0xff]
        %v455 = vld [vmem:[%s1 + $0x18] sm:$0xff]
        %v456 = vld [vmem:[%s2] sm:$0x3]
        %v458 = vsel %vm429, %v451, 0
        %460 = vmatprep.subr.mxu0 0.0
        %461 = vmatpush1.msra.mxu0 %v452
        %462 = vmatprep.subr.mxu0 0.0
        %463 = vmatpush1.msra.mxu0 %v453
        %464 = vmatprep.subr.mxu0 0.0
        %465 = vmatpush1.msra.mxu0 %v454
        %466 = vmatprep.subr.mxu0 0.0
        %467 = vmatpush1.msra.mxu0 %v455
        %468 = vmatprep.subr.mxu0 0.0
        %469 = vmatpush1.msra.mxu0 0.0
        %470 = vmatprep.subr.mxu0 0.0
        %471 = vmatpush1.msra.mxu0 0.0
        %472 = vmatprep.subr.mxu0 0.0
        %473 = vmatpush1.msra.mxu0 0.0
        %474 = vmatprep.subr.mxu0 0.0
        %475 = vmatpush1.msra.mxu0 0.0
        %476 = vmatprep.subr.mxu0 0.0
        %477 = vmatpush1.msra.mxu0 0.0
        %478 = vmatprep.subr.mxu0 0.0
        %479 = vmatpush1.msra.mxu0 0.0
        %480 = vmatprep.subr.mxu0 0.0
        %481 = vmatpush1.msra.mxu0 0.0
        %482 = vmatprep.subr.mxu0 0.0
        %483 = vmatpush1.msra.mxu0 0.0
        %484 = vmatprep.subr.mxu0 0.0
        %485 = vmatpush1.msra.mxu0 0.0
        %486 = vmatprep.subr.mxu0 0.0
        %487 = vmatpush1.msra.mxu0 0.0
        %488 = vmatprep.subr.mxu0 0.0
        %489 = vmatpush1.msra.mxu0 0.0
        %490 = vmatprep.subr.mxu0 0.0
        %491 = vmatpush1.msra.mxu0 0.0
        %492 = vmatprep.subr.mxu0 0.0
        %493 = vmatpush1.msra.mxu0 0.0
        %494 = vmatprep.subr.mxu0 0.0
        %495 = vmatpush1.msra.mxu0 0.0
        %496 = vmatprep.subr.mxu0 0.0
        %497 = vmatpush1.msra.mxu0 0.0
        %498 = vmatprep.subr.mxu0 0.0
        %499 = vmatpush1.msra.mxu0 0.0
        %500 = vmatprep.subr.mxu0 0.0
        %501 = vmatpush1.msra.mxu0 0.0
        %502 = vmatprep.subr.mxu0 0.0
        %503 = vmatpush1.msra.mxu0 0.0
        %504 = vmatprep.subr.mxu0 0.0
        %505 = vmatpush1.msra.mxu0 0.0
        %506 = vmatprep.subr.mxu0 0.0
        %507 = vmatpush1.msra.mxu0 0.0
        %508 = vmatprep.subr.mxu0 0.0
        %509 = vmatpush1.msra.mxu0 0.0
        %510 = vmatprep.subr.mxu0 0.0
        %511 = vmatpush1.msra.mxu0 0.0
        %512 = vmatprep.subr.mxu0 0.0
        %513 = vmatpush1.msra.mxu0 0.0
        %514 = vmatprep.subr.mxu0 0.0
        %515 = vmatpush1.msra.mxu0 0.0
        %516 = vmatprep.subr.mxu0 0.0
        %517 = vmatpush1.msra.mxu0 0.0
        %518 = vmatprep.subr.mxu0 0.0
        %519 = vmatpush1.msra.mxu0 0.0
        %520 = vmatprep.subr.mxu0 0.0
        %521 = vmatpush1.msra.mxu0 0.0
        %522 = vmatprep.subr.mxu0 0.0
        %523 = vmatpush1.msra.mxu0 0.0
        %524 = vmatprep.mubr.f32.mxu0 0.0
        %525 = vmatmul.mubr.f32.gmra.mrb[0].mxu0 %v458
        %v526 = vpop.f32.mrb[0].mxu0
        %v527 = vadd.f32 0.0, %v526
        %v528 = vpop.f32.mrb[0].mxu0
        %529 = vdwg.mxu0
        %v530 = vmax.f32 %v527, 0.0
        %vm531 = vcmask 15360
        %v533 = vsel %vm531, %v530, 0
        %vm535 = vcmask 1041408
        %v537 = vsel %vm535, %v456, 0
        %539 = vmatprep.subr.mxu0 0.0
        %540 = vmatpush1.msra.mxu0 %v537
        %541 = vmatprep.subr.mxu0 0.0
        %542 = vmatpush1.msra.mxu0 0.0
        %543 = vmatprep.subr.mxu0 0.0
        %544 = vmatpush1.msra.mxu0 0.0
        %545 = vmatprep.subr.mxu0 0.0
        %546 = vmatpush1.msra.mxu0 0.0
        %547 = vmatprep.subr.mxu0 0.0
        %548 = vmatpush1.msra.mxu0 0.0
        %549 = vmatprep.subr.mxu0 0.0
        %550 = vmatpush1.msra.mxu0 0.0
        %551 = vmatprep.subr.mxu0 0.0
        %552 = vmatpush1.msra.mxu0 0.0
        %553 = vmatprep.subr.mxu0 0.0
        %554 = vmatpush1.msra.mxu0 0.0
        %555 = vmatprep.subr.mxu0 0.0
        %556 = vmatpush1.msra.mxu0 0.0
        %557 = vmatprep.subr.mxu0 0.0
        %558 = vmatpush1.msra.mxu0 0.0
        %559 = vmatprep.subr.mxu0 0.0
        %560 = vmatpush1.msra.mxu0 0.0
        %561 = vmatprep.subr.mxu0 0.0
        %562 = vmatpush1.msra.mxu0 0.0
        %563 = vmatprep.subr.mxu0 0.0
        %564 = vmatpush1.msra.mxu0 0.0
        %565 = vmatprep.subr.mxu0 0.0
        %566 = vmatpush1.msra.mxu0 0.0
        %567 = vmatprep.subr.mxu0 0.0
        %568 = vmatpush1.msra.mxu0 0.0
        %569 = vmatprep.subr.mxu0 0.0
        %570 = vmatpush1.msra.mxu0 0.0
        %571 = vmatprep.subr.mxu0 0.0
        %572 = vmatpush1.msra.mxu0 0.0
        %573 = vmatprep.subr.mxu0 0.0
        %574 = vmatpush1.msra.mxu0 0.0
        %575 = vmatprep.subr.mxu0 0.0
        %576 = vmatpush1.msra.mxu0 0.0
        %577 = vmatprep.subr.mxu0 0.0
        %578 = vmatpush1.msra.mxu0 0.0
        %579 = vmatprep.subr.mxu0 0.0
        %580 = vmatpush1.msra.mxu0 0.0
        %581 = vmatprep.subr.mxu0 0.0
        %582 = vmatpush1.msra.mxu0 0.0
        %583 = vmatprep.subr.mxu0 0.0
        %584 = vmatpush1.msra.mxu0 0.0
        %585 = vmatprep.subr.mxu0 0.0
        %586 = vmatpush1.msra.mxu0 0.0
        %587 = vmatprep.subr.mxu0 0.0
        %588 = vmatpush1.msra.mxu0 0.0
        %589 = vmatprep.subr.mxu0 0.0
        %590 = vmatpush1.msra.mxu0 0.0
        %591 = vmatprep.subr.mxu0 0.0
        %592 = vmatpush1.msra.mxu0 0.0
        %593 = vmatprep.subr.mxu0 0.0
        %594 = vmatpush1.msra.mxu0 0.0
        %595 = vmatprep.subr.mxu0 0.0
        %596 = vmatpush1.msra.mxu0 0.0
        %597 = vmatprep.subr.mxu0 0.0
        %598 = vmatpush1.msra.mxu0 0.0
        %599 = vmatprep.subr.mxu0 0.0
        %600 = vmatpush1.msra.mxu0 0.0
        %601 = vmatprep.subr.mxu0 0.0
        %602 = vmatpush1.msra.mxu0 0.0
        %603 = vmatprep.mubr.f32.mxu0 0.0
        %604 = vmatmul.mubr.f32.gmra.mrb[0].mxu0 %v533
        %v605 = vpop.f32.mrb[0].mxu0
        %v606 = vadd.f32 0.0, %v605
        %v607 = vpop.f32.mrb[0].mxu0
        %608 = vdwg.mxu0
        %vm609 = vcmask 24576
        %v610 = vsel %vm609, %v606, -inf
        %611 = vmax.xlane.f32.xlu0 %v610
        %v612 = vpop.xlane.xlu0 %611
        %v613 = vsub.f32 %v606, %v612
        %v614 = vmul.f32 %v613, 1.442695
        %v615 = vpow.pop %v614
        %v616 = vsel %vm609, %v615, 0.0
        %617 = vadd.xlane.f32.xlu0 %v616
        %v618 = vpop.xlane.xlu0 %617
        %v619 = vrcp.pop %v618
        %v620 = vmul.f32 %v615, %v619
        %v621 = vld [vmem:[%s3] sm:$0xf]
        %v622 = vld [vmem:[%s3 + $0x4] sm:$0xf]
        %v623 = vld [vmem:[%s3 + $0x8] sm:$0xf]
        %v624 = vld [vmem:[%s3 + $0xc] sm:$0xf]
        %v625 = vld [vmem:[%s4] sm:$0x1]
        %v627 = vlaneseq
        %v628 = vshrl.u32 %v627, 7
        %v629 = vsub.s32 0, %v628
        %v630 = vrot.slane %v625, %v629
        %v640 = vunpack.c.l.b16 %v413
        %v641 = vunpack.c.l.b16 %v414
        %v642 = vunpack.c.l.b16 %v415
        %v643 = vunpack.c.l.b16 %v416
        %v644 = vunpack.c.l.b16 %v417
        %v645 = vunpack.c.l.b16 %v418
        %v646 = vunpack.c.l.b16 %v419
        %v647 = vunpack.c.l.b16 %v420
        %v648 = vpack.c.b16 %v641, %v640
        %v649 = vpack.c.b16 %v643, %v642
        %v650 = vpack.c.b16 %v645, %v644
        %v651 = vpack.c.b16 %v647, %v646
        %v656 = vunpack.c.l.b16 %v621
        %v657 = vunpack.c.l.b16 %v622
        %v658 = vunpack.c.l.b16 %v623
        %v659 = vunpack.c.l.b16 %v624
        %v660 = vpack.c.b16 %v657, %v656
        %v661 = vpack.c.b16 %v659, %v658
        %v665 = vsel %vm429, %v648, 0
        %v668 = vsel %vm429, %v649, 0
        %v671 = vsel %vm429, %v650, 0
        %v674 = vsel %vm429, %v651, 0
        %676 = vmatprep.subr.bf16.mxu0 0
        %677 = vmatpush1.bf16.msra.mxu0 %v660
        %678 = vmatprep.subr.bf16.mxu0 0
        %679 = vmatpush1.bf16.msra.mxu0 %v661
        %680 = vmatprep.subr.bf16.mxu0 0
        %681 = vmatpush1.bf16.msra.mxu0 0
        %682 = vmatprep.subr.bf16.mxu0 0
        %683 = vmatpush1.bf16.msra.mxu0 0
        %684 = vmatprep.subr.bf16.mxu0 0
        %685 = vmatpush1.bf16.msra.mxu0 0
        %686 = vmatprep.subr.bf16.mxu0 0
        %687 = vmatpush1.bf16.msra.mxu0 0
        %688 = vmatprep.subr.bf16.mxu0 0
        %689 = vmatpush1.bf16.msra.mxu0 0
        %690 = vmatprep.subr.bf16.mxu0 0
        %691 = vmatpush1.bf16.msra.mxu0 0
        %692 = vmatprep.subr.bf16.mxu0 0
        %693 = vmatpush1.bf16.msra.mxu0 0
        %694 = vmatprep.subr.bf16.mxu0 0
        %695 = vmatpush1.bf16.msra.mxu0 0
        %696 = vmatprep.subr.bf16.mxu0 0
        %697 = vmatpush1.bf16.msra.mxu0 0
        %698 = vmatprep.subr.bf16.mxu0 0
        %699 = vmatpush1.bf16.msra.mxu0 0
        %700 = vmatprep.subr.bf16.mxu0 0
        %701 = vmatpush1.bf16.msra.mxu0 0
        %702 = vmatprep.subr.bf16.mxu0 0
        %703 = vmatpush1.bf16.msra.mxu0 0
        %704 = vmatprep.subr.bf16.mxu0 0
        %705 = vmatpush1.bf16.msra.mxu0 0
        %706 = vmatprep.subr.bf16.mxu0 0
        %707 = vmatpush1.bf16.msra.mxu0 0
        %708 = vmatprep.mubr.bf16.mxu0 0
        %709 = vmatmul.mubr.bf16.gmra.mrb[0].mxu0 %v665
        %v710 = vpop.f32.mrb[0].mxu0
        %v711 = vadd.f32 %v630, %v710
        %v712 = vpop.f32.mrb[0].mxu0
        %v713 = vpop.f32.mrb[0].mxu0
        %v714 = vadd.f32 %v630, %v713
        %v715 = vpop.f32.mrb[0].mxu0
        %716 = vmatprep.mubr.bf16.mxu0 0
        %717 = vmatmul.mubr.bf16.gmra.mrb[0].mxu0 %v668
        %v718 = vpop.f32.mrb[0].mxu0
        %v719 = vadd.f32 %v630, %v718
        %v720 = vpop.f32.mrb[0].mxu0
        %v721 = vpop.f32.mrb[0].mxu0
        %v722 = vadd.f32 %v630, %v721
        %v723 = vpop.f32.mrb[0].mxu0
        %724 = vmatprep.mubr.bf16.mxu0 0
        %725 = vmatmul.mubr.bf16.gmra.mrb[0].mxu0 %v671
        %v726 = vpop.f32.mrb[0].mxu0
        %v727 = vadd.f32 %v630, %v726
        %v728 = vpop.f32.mrb[0].mxu0
        %v729 = vpop.f32.mrb[0].mxu0
        %v730 = vadd.f32 %v630, %v729
        %v731 = vpop.f32.mrb[0].mxu0
        %732 = vmatprep.mubr.bf16.mxu0 0
        %733 = vmatmul.mubr.bf16.gmra.mrb[0].mxu0 %v674
        %v734 = vpop.f32.mrb[0].mxu0
        %v735 = vadd.f32 %v630, %v734
        %v736 = vpop.f32.mrb[0].mxu0
        %v737 = vpop.f32.mrb[0].mxu0
        %v738 = vadd.f32 %v630, %v737
        %v739 = vpop.f32.mrb[0].mxu0
        %740 = vdwg.mxu0
        %v741 = vmax.f32 %v711, 0.0
        %v742 = vmax.f32 %v714, 0.0
        %v743 = vmax.f32 %v719, 0.0
        %v744 = vmax.f32 %v722, 0.0
        %v745 = vmax.f32 %v727, 0.0
        %v746 = vmax.f32 %v730, 0.0
        %v747 = vmax.f32 %v735, 0.0
        %v748 = vmax.f32 %v738, 0.0
        %v749 = vpack.c.bf16 %v742, %v741
        %v750 = vpack.c.bf16 %v744, %v743
        %v751 = vpack.c.bf16 %v746, %v745
        %v752 = vpack.c.bf16 %v748, %v747
        %v753 = vld [vmem:[%s5] sm:$0xf]
        %v754 = vld [vmem:[%s5 + $0x4] sm:$0xf]
        %v755 = vld [vmem:[%s5 + $0x8] sm:$0xf]
        %v756 = vld [vmem:[%s5 + $0xc] sm:$0xf]
        %v757 = vld [vmem:[%s6] sm:$0x1]
        %v759 = vlaneseq
        %v760 = vshrl.u32 %v759, 7
        %v761 = vsub.s32 0, %v760
        %v762 = vrot.slane %v757, %v761
        %v768 = vunpack.c.l.b16 %v753
        %v769 = vunpack.c.l.b16 %v754
        %v770 = vunpack.c.l.b16 %v755
        %v771 = vunpack.c.l.b16 %v756
        %v772 = vpack.c.b16 %v769, %v768
        %v773 = vpack.c.b16 %v771, %v770
        %v777 = vsel %vm429, %v749, 0
        %v780 = vsel %vm429, %v750, 0
        %v783 = vsel %vm429, %v751, 0
        %v786 = vsel %vm429, %v752, 0
        %788 = vmatprep.subr.bf16.mxu0 0
        %789 = vmatpush1.bf16.msra.mxu0 %v772
        %790 = vmatprep.subr.bf16.mxu0 0
        %791 = vmatpush1.bf16.msra.mxu0 %v773
        %792 = vmatprep.subr.bf16.mxu0 0
        %793 = vmatpush1.bf16.msra.mxu0 0
        %794 = vmatprep.subr.bf16.mxu0 0
        %795 = vmatpush1.bf16.msra.mxu0 0
        %796 = vmatprep.subr.bf16.mxu0 0
        %797 = vmatpush1.bf16.msra.mxu0 0
        %798 = vmatprep.subr.bf16.mxu0 0
        %799 = vmatpush1.bf16.msra.mxu0 0
        %800 = vmatprep.subr.bf16.mxu0 0
        %801 = vmatpush1.bf16.msra.mxu0 0
        %802 = vmatprep.subr.bf16.mxu0 0
        %803 = vmatpush1.bf16.msra.mxu0 0
        %804 = vmatprep.subr.bf16.mxu0 0
        %805 = vmatpush1.bf16.msra.mxu0 0
        %806 = vmatprep.subr.bf16.mxu0 0
        %807 = vmatpush1.bf16.msra.mxu0 0
        %808 = vmatprep.subr.bf16.mxu0 0
        %809 = vmatpush1.bf16.msra.mxu0 0
        %810 = vmatprep.subr.bf16.mxu0 0
        %811 = vmatpush1.bf16.msra.mxu0 0
        %812 = vmatprep.subr.bf16.mxu0 0
        %813 = vmatpush1.bf16.msra.mxu0 0
        %814 = vmatprep.subr.bf16.mxu0 0
        %815 = vmatpush1.bf16.msra.mxu0 0
        %816 = vmatprep.subr.bf16.mxu0 0
        %817 = vmatpush1.bf16.msra.mxu0 0
        %818 = vmatprep.subr.bf16.mxu0 0
        %819 = vmatpush1.bf16.msra.mxu0 0
        %820 = vmatprep.mubr.bf16.mxu0 0
        %821 = vmatmul.mubr.bf16.gmra.mrb[0].mxu0 %v777
        %v822 = vpop.f32.mrb[0].mxu0
        %v823 = vadd.f32 %v762, %v822
        %v824 = vpop.f32.mrb[0].mxu0
        %v825 = vpop.f32.mrb[0].mxu0
        %v826 = vadd.f32 %v762, %v825
        %v827 = vpop.f32.mrb[0].mxu0
        %828 = vmatprep.mubr.bf16.mxu0 0
        %829 = vmatmul.mubr.bf16.gmra.mrb[0].mxu0 %v780
        %v830 = vpop.f32.mrb[0].mxu0
        %v831 = vadd.f32 %v762, %v830
        %v832 = vpop.f32.mrb[0].mxu0
        %v833 = vpop.f32.mrb[0].mxu0
        %v834 = vadd.f32 %v762, %v833
        %v835 = vpop.f32.mrb[0].mxu0
        %836 = vmatprep.mubr.bf16.mxu0 0
        %837 = vmatmul.mubr.bf16.gmra.mrb[0].mxu0 %v783
        %v838 = vpop.f32.mrb[0].mxu0
        %v839 = vadd.f32 %v762, %v838
        %v840 = vpop.f32.mrb[0].mxu0
        %v841 = vpop.f32.mrb[0].mxu0
        %v842 = vadd.f32 %v762, %v841
        %v843 = vpop.f32.mrb[0].mxu0
        %844 = vmatprep.mubr.bf16.mxu0 0
        %845 = vmatmul.mubr.bf16.gmra.mrb[0].mxu0 %v786
        %v846 = vpop.f32.mrb[0].mxu0
        %v847 = vadd.f32 %v762, %v846
        %v848 = vpop.f32.mrb[0].mxu0
        %v849 = vpop.f32.mrb[0].mxu0
        %v850 = vadd.f32 %v762, %v849
        %v851 = vpop.f32.mrb[0].mxu0
        %852 = vdwg.mxu0
        %v853 = vpack.c.bf16 %v826, %v823
        %v854 = vpack.c.bf16 %v834, %v831
        %v855 = vpack.c.bf16 %v842, %v839
        %v856 = vpack.c.bf16 %v850, %v847
        %v857 = vsel %vm429, %v823, 0.0
        %v858 = vsel %vm429, %v826, 0.0
        %v859 = vadd.f32 %v857, %v858
        %v860 = vsel %vm429, %v831, 0.0
        %v861 = vadd.f32 %v859, %v860
        %v862 = vsel %vm429, %v834, 0.0
        %v863 = vadd.f32 %v861, %v862
        %v864 = vsel %vm429, %v839, 0.0
        %v865 = vadd.f32 %v863, %v864
        %v866 = vsel %vm429, %v842, 0.0
        %v867 = vadd.f32 %v865, %v866
        %v868 = vsel %vm429, %v847, 0.0
        %v869 = vadd.f32 %v867, %v868
        %v870 = vsel %vm429, %v850, 0.0
        %v871 = vadd.f32 %v869, %v870
        %v872 = vrot.slane %v871, 4
        %v873 = vadd.f32 %v871, %v872
        %v874 = vrot.slane %v873, 2
        %v875 = vadd.f32 %v873, %v874
        %v876 = vrot.slane %v875, 1
        %v877 = vadd.f32 %v875, %v876
        %v878 = vmul.f32 %v877, 0.015625
        %v879 = vld [vmem:[%s7] sm:$0xff]
        %v880 = vld [vmem:[%s7 + $0x8] sm:$0xff]
        %v881 = vld [vmem:[%s7 + $0x10] sm:$0xff]
        %v882 = vld [vmem:[%s7 + $0x18] sm:$0xff]
        %v883 = vld [vmem:[%s8] sm:$0x3]
        %v885 = vsel %vm429, %v878, 0
        %887 = vmatprep.subr.mxu0 0.0
        %888 = vmatpush1.msra.mxu0 %v879
        %889 = vmatprep.subr.mxu0 0.0
        %890 = vmatpush1.msra.mxu0 %v880
        %891 = vmatprep.subr.mxu0 0.0
        %892 = vmatpush1.msra.mxu0 %v881
        %893 = vmatprep.subr.mxu0 0.0
        %894 = vmatpush1.msra.mxu0 %v882
        %895 = vmatprep.subr.mxu0 0.0
        %896 = vmatpush1.msra.mxu0 0.0
        %897 = vmatprep.subr.mxu0 0.0
        %898 = vmatpush1.msra.mxu0 0.0
        %899 = vmatprep.subr.mxu0 0.0
        %900 = vmatpush1.msra.mxu0 0.0
        %901 = vmatprep.subr.mxu0 0.0
        %902 = vmatpush1.msra.mxu0 0.0
        %903 = vmatprep.subr.mxu0 0.0
        %904 = vmatpush1.msra.mxu0 0.0
        %905 = vmatprep.subr.mxu0 0.0
        %906 = vmatpush1.msra.mxu0 0.0
        %907 = vmatprep.subr.mxu0 0.0
        %908 = vmatpush1.msra.mxu0 0.0
        %909 = vmatprep.subr.mxu0 0.0
        %910 = vmatpush1.msra.mxu0 0.0
        %911 = vmatprep.subr.mxu0 0.0
        %912 = vmatpush1.msra.mxu0 0.0
        %913 = vmatprep.subr.mxu0 0.0
        %914 = vmatpush1.msra.mxu0 0.0
        %915 = vmatprep.subr.mxu0 0.0
        %916 = vmatpush1.msra.mxu0 0.0
        %917 = vmatprep.subr.mxu0 0.0
        %918 = vmatpush1.msra.mxu0 0.0
        %919 = vmatprep.subr.mxu0 0.0
        %920 = vmatpush1.msra.mxu0 0.0
        %921 = vmatprep.subr.mxu0 0.0
        %922 = vmatpush1.msra.mxu0 0.0
        %923 = vmatprep.subr.mxu0 0.0
        %924 = vmatpush1.msra.mxu0 0.0
        %925 = vmatprep.subr.mxu0 0.0
        %926 = vmatpush1.msra.mxu0 0.0
        %927 = vmatprep.subr.mxu0 0.0
        %928 = vmatpush1.msra.mxu0 0.0
        %929 = vmatprep.subr.mxu0 0.0
        %930 = vmatpush1.msra.mxu0 0.0
        %931 = vmatprep.subr.mxu0 0.0
        %932 = vmatpush1.msra.mxu0 0.0
        %933 = vmatprep.subr.mxu0 0.0
        %934 = vmatpush1.msra.mxu0 0.0
        %935 = vmatprep.subr.mxu0 0.0
        %936 = vmatpush1.msra.mxu0 0.0
        %937 = vmatprep.subr.mxu0 0.0
        %938 = vmatpush1.msra.mxu0 0.0
        %939 = vmatprep.subr.mxu0 0.0
        %940 = vmatpush1.msra.mxu0 0.0
        %941 = vmatprep.subr.mxu0 0.0
        %942 = vmatpush1.msra.mxu0 0.0
        %943 = vmatprep.subr.mxu0 0.0
        %944 = vmatpush1.msra.mxu0 0.0
        %945 = vmatprep.subr.mxu0 0.0
        %946 = vmatpush1.msra.mxu0 0.0
        %947 = vmatprep.subr.mxu0 0.0
        %948 = vmatpush1.msra.mxu0 0.0
        %949 = vmatprep.subr.mxu0 0.0
        %950 = vmatpush1.msra.mxu0 0.0
        %951 = vmatprep.mubr.f32.mxu0 0.0
        %952 = vmatmul.mubr.f32.gmra.mrb[0].mxu0 %v885
        %v953 = vpop.f32.mrb[0].mxu0
        %v954 = vadd.f32 0.0, %v953
        %v955 = vpop.f32.mrb[0].mxu0
        %956 = vdwg.mxu0
        %v957 = vmax.f32 %v954, 0.0
        %v959 = vsel %vm531, %v957, 0
        %v962 = vsel %vm535, %v883, 0
        %964 = vmatprep.subr.mxu0 0.0
        %965 = vmatpush1.msra.mxu0 %v962
        %966 = vmatprep.subr.mxu0 0.0
        %967 = vmatpush1.msra.mxu0 0.0
        %968 = vmatprep.subr.mxu0 0.0
        %969 = vmatpush1.msra.mxu0 0.0
        %970 = vmatprep.subr.mxu0 0.0
        %971 = vmatpush1.msra.mxu0 0.0
        %972 = vmatprep.subr.mxu0 0.0
        %973 = vmatpush1.msra.mxu0 0.0
        %974 = vmatprep.subr.mxu0 0.0
        %975 = vmatpush1.msra.mxu0 0.0
        %976 = vmatprep.subr.mxu0 0.0
        %977 = vmatpush1.msra.mxu0 0.0
        %978 = vmatprep.subr.mxu0 0.0
        %979 = vmatpush1.msra.mxu0 0.0
        %980 = vmatprep.subr.mxu0 0.0
        %981 = vmatpush1.msra.mxu0 0.0
        %982 = vmatprep.subr.mxu0 0.0
        %983 = vmatpush1.msra.mxu0 0.0
        %984 = vmatprep.subr.mxu0 0.0
        %985 = vmatpush1.msra.mxu0 0.0
        %986 = vmatprep.subr.mxu0 0.0
        %987 = vmatpush1.msra.mxu0 0.0
        %988 = vmatprep.subr.mxu0 0.0
        %989 = vmatpush1.msra.mxu0 0.0
        %990 = vmatprep.subr.mxu0 0.0
        %991 = vmatpush1.msra.mxu0 0.0
        %992 = vmatprep.subr.mxu0 0.0
        %993 = vmatpush1.msra.mxu0 0.0
        %994 = vmatprep.subr.mxu0 0.0
        %995 = vmatpush1.msra.mxu0 0.0
        %996 = vmatprep.subr.mxu0 0.0
        %997 = vmatpush1.msra.mxu0 0.0
        %998 = vmatprep.subr.mxu0 0.0
        %999 = vmatpush1.msra.mxu0 0.0
        %1000 = vmatprep.subr.mxu0 0.0
        %1001 = vmatpush1.msra.mxu0 0.0
        %1002 = vmatprep.subr.mxu0 0.0
        %1003 = vmatpush1.msra.mxu0 0.0
        %1004 = vmatprep.subr.mxu0 0.0
        %1005 = vmatpush1.msra.mxu0 0.0
        %1006 = vmatprep.subr.mxu0 0.0
        %1007 = vmatpush1.msra.mxu0 0.0
        %1008 = vmatprep.subr.mxu0 0.0
        %1009 = vmatpush1.msra.mxu0 0.0
        %1010 = vmatprep.subr.mxu0 0.0
        %1011 = vmatpush1.msra.mxu0 0.0
        %1012 = vmatprep.subr.mxu0 0.0
        %1013 = vmatpush1.msra.mxu0 0.0
        %1014 = vmatprep.subr.mxu0 0.0
        %1015 = vmatpush1.msra.mxu0 0.0
        %1016 = vmatprep.subr.mxu0 0.0
        %1017 = vmatpush1.msra.mxu0 0.0
        %1018 = vmatprep.subr.mxu0 0.0
        %1019 = vmatpush1.msra.mxu0 0.0
        %1020 = vmatprep.subr.mxu0 0.0
        %1021 = vmatpush1.msra.mxu0 0.0
        %1022 = vmatprep.subr.mxu0 0.0
        %1023 = vmatpush1.msra.mxu0 0.0
        %1024 = vmatprep.subr.mxu0 0.0
        %1025 = vmatpush1.msra.mxu0 0.0
        %1026 = vmatprep.subr.mxu0 0.0
        %1027 = vmatpush1.msra.mxu0 0.0
        %1028 = vmatprep.mubr.f32.mxu0 0.0
        %1029 = vmatmul.mubr.f32.gmra.mrb[0].mxu0 %v959
        %v1030 = vpop.f32.mrb[0].mxu0
        %v1031 = vadd.f32 0.0, %v1030
        %v1032 = vpop.f32.mrb[0].mxu0
        %1033 = vdwg.mxu0
        %v1034 = vsub.f32 0.0, %v1031
        %v1035 = vmul.f32 %v1034, 1.442695
        %v1036 = vpow.pop %v1035
        %v1037 = vadd.f32 %v1036, 1.0
        %v1038 = vrcp.pop %v1037
        %v1039 = vmul.f32 1.0, %v1038
        %v1040 = vld [vmem:[%s9] sm:$0xf]
        %v1041 = vld [vmem:[%s9 + $0x4] sm:$0xf]
        %v1042 = vld [vmem:[%s9 + $0x8] sm:$0xf]
        %v1043 = vld [vmem:[%s9 + $0xc] sm:$0xf]
        %v1044 = vld [vmem:[%s9 + $0x10] sm:$0xf]
        %v1045 = vld [vmem:[%s9 + $0x14] sm:$0xf]
        %v1046 = vld [vmem:[%s9 + $0x18] sm:$0xf]
        %v1047 = vld [vmem:[%s9 + $0x1c] sm:$0xf]
        %v1048 = vld [vmem:[%s9 + $0x20] sm:$0xf]
        %v1049 = vld [vmem:[%s9 + $0x24] sm:$0xf]
        %v1050 = vld [vmem:[%s9 + $0x28] sm:$0xf]
        %v1051 = vld [vmem:[%s9 + $0x2c] sm:$0xf]
        %v1052 = vld [vmem:[%s9 + $0x30] sm:$0xf]
        %v1053 = vld [vmem:[%s9 + $0x34] sm:$0xf]
        %v1054 = vld [vmem:[%s9 + $0x38] sm:$0xf]
        %v1055 = vld [vmem:[%s9 + $0x3c] sm:$0xf]
        %v1056 = vpack.c.bf16 %v620, %v620
        %s1058 = vtos %v1056
        %v1059 = vstv %s1058
        %v1060 = vpack.i.b16 %v1059, %v1059
        %v1062 = vmul.bf16 %v1060, %v1040
        %v1063 = vmul.bf16 %v1060, %v1041
        %v1064 = vmul.bf16 %v1060, %v1042
        %v1065 = vmul.bf16 %v1060, %v1043
        %1067 = vrot.lane.b32.xlu0 %v1056, 127
        %v1068 = vpop.permute.xlu0 %1067
        %s1070 = vtos %v1068
        %v1071 = vstv %s1070
        %v1072 = vpack.i.b16 %v1071, %v1071
        %v1074 = vmul.bf16 %v1072, %v1044
        %v1075 = vmul.bf16 %v1072, %v1045
        %v1076 = vmul.bf16 %v1072, %v1046
        %v1077 = vmul.bf16 %v1072, %v1047
        %v1078 = vadd.bf16 %v1062, %v1074
        %v1079 = vadd.bf16 %v1063, %v1075
        %v1080 = vadd.bf16 %v1064, %v1076
        %v1081 = vadd.bf16 %v1065, %v1077
        %1082 = vrot.lane.b32.xlu0 %v1056, 126
        %v1083 = vpop.permute.xlu0 %1082
        %s1085 = vtos %v1083
        %v1086 = vstv %s1085
        %v1087 = vpack.i.b16 %v1086, %v1086
        %v1089 = vmul.bf16 %v1087, %v1048
        %v1090 = vmul.bf16 %v1087, %v1049
        %v1091 = vmul.bf16 %v1087, %v1050
        %v1092 = vmul.bf16 %v1087, %v1051
        %v1093 = vadd.bf16 %v1078, %v1089
        %v1094 = vadd.bf16 %v1079, %v1090
        %v1095 = vadd.bf16 %v1080, %v1091
        %v1096 = vadd.bf16 %v1081, %v1092
        %1097 = vrot.lane.b32.xlu0 %v1056, 125
        %v1098 = vpop.permute.xlu0 %1097
        %s1100 = vtos %v1098
        %v1101 = vstv %s1100
        %v1102 = vpack.i.b16 %v1101, %v1101
        %v1104 = vmul.bf16 %v1102, %v1052
        %v1105 = vmul.bf16 %v1102, %v1053
        %v1106 = vmul.bf16 %v1102, %v1054
        %v1107 = vmul.bf16 %v1102, %v1055
        %v1108 = vadd.bf16 %v1093, %v1104
        %v1109 = vadd.bf16 %v1094, %v1105
        %v1110 = vadd.bf16 %v1095, %v1106
        %v1111 = vadd.bf16 %v1096, %v1107
        %v1112 = vunpack.c.l.bf16 %v853
        %v1113 = vunpack.c.h.bf16 %v853
        %v1114 = vunpack.c.l.bf16 %v854
        %v1115 = vunpack.c.h.bf16 %v854
        %v1116 = vunpack.c.l.bf16 %v855
        %v1117 = vunpack.c.h.bf16 %v855
        %v1118 = vunpack.c.l.bf16 %v856
        %v1119 = vunpack.c.h.bf16 %v856
        %v1120 = vlaneseq
        %v1121 = vshrl.u32 %v1120, 7
        %v1122 = vsub.s32 0, %v1121
        %v1123 = vrot.slane %v1039, %v1122
        %v1124 = vmul.f32 %v1112, %v1123
        %v1125 = vmul.f32 %v1113, %v1123
        %v1126 = vmul.f32 %v1114, %v1123
        %v1127 = vmul.f32 %v1115, %v1123
        %v1128 = vmul.f32 %v1116, %v1123
        %v1129 = vmul.f32 %v1117, %v1123
        %v1130 = vmul.f32 %v1118, %v1123
        %v1131 = vmul.f32 %v1119, %v1123
        %v1136 = vunpack.c.l.b16 %v1108
        %v1137 = vunpack.c.l.b16 %v1109
        %v1138 = vunpack.c.l.b16 %v1110
        %v1139 = vunpack.c.l.b16 %v1111
        %v1140 = vpack.c.b16 %v1137, %v1136
        %v1141 = vpack.c.b16 %v1139, %v1138
        %v1145 = vsel %vm429, %v853, 0
        %v1148 = vsel %vm429, %v854, 0
        %v1151 = vsel %vm429, %v855, 0
        %v1154 = vsel %vm429, %v856, 0
        %1156 = vmatprep.subr.bf16.mxu0 0
        %1157 = vmatpush1.bf16.msra.mxu0 %v1140
        %1158 = vmatprep.subr.bf16.mxu0 0
        %1159 = vmatpush1.bf16.msra.mxu0 %v1141
        %1160 = vmatprep.subr.bf16.mxu0 0
        %1161 = vmatpush1.bf16.msra.mxu0 0
        %1162 = vmatprep.subr.bf16.mxu0 0
        %1163 = vmatpush1.bf16.msra.mxu0 0
        %1164 = vmatprep.subr.bf16.mxu0 0
        %1165 = vmatpush1.bf16.msra.mxu0 0
        %1166 = vmatprep.subr.bf16.mxu0 0
        %1167 = vmatpush1.bf16.msra.mxu0 0
        %1168 = vmatprep.subr.bf16.mxu0 0
        %1169 = vmatpush1.bf16.msra.mxu0 0
        %1170 = vmatprep.subr.bf16.mxu0 0
        %1171 = vmatpush1.bf16.msra.mxu0 0
        %1172 = vmatprep.subr.bf16.mxu0 0
        %1173 = vmatpush1.bf16.msra.mxu0 0
        %1174 = vmatprep.subr.bf16.mxu0 0
        %1175 = vmatpush1.bf16.msra.mxu0 0
        %1176 = vmatprep.subr.bf16.mxu0 0
        %1177 = vmatpush1.bf16.msra.mxu0 0
        %1178 = vmatprep.subr.bf16.mxu0 0
        %1179 = vmatpush1.bf16.msra.mxu0 0
        %1180 = vmatprep.subr.bf16.mxu0 0
        %1181 = vmatpush1.bf16.msra.mxu0 0
        %1182 = vmatprep.subr.bf16.mxu0 0
        %1183 = vmatpush1.bf16.msra.mxu0 0
        %1184 = vmatprep.subr.bf16.mxu0 0
        %1185 = vmatpush1.bf16.msra.mxu0 0
        %1186 = vmatprep.subr.bf16.mxu0 0
        %1187 = vmatpush1.bf16.msra.mxu0 0
        %1188 = vmatprep.mubr.bf16.mxu0 0
        %1189 = vmatmul.mubr.bf16.gmra.mrb[0].mxu0 %v1145
        %v1190 = vpop.f32.mrb[0].mxu0
        %v1191 = vadd.f32 %v1124, %v1190
        %v1192 = vpop.f32.mrb[0].mxu0
        %v1193 = vpop.f32.mrb[0].mxu0
        %v1194 = vadd.f32 %v1125, %v1193
        %v1195 = vpop.f32.mrb[0].mxu0
        %1196 = vmatprep.mubr.bf16.mxu0 0
        %1197 = vmatmul.mubr.bf16.gmra.mrb[0].mxu0 %v1148
        %v1198 = vpop.f32.mrb[0].mxu0
        %v1199 = vadd.f32 %v1126, %v1198
        %v1200 = vpop.f32.mrb[0].mxu0
        %v1201 = vpop.f32.mrb[0].mxu0
        %v1202 = vadd.f32 %v1127, %v1201
        %v1203 = vpop.f32.mrb[0].mxu0
        %1204 = vmatprep.mubr.bf16.mxu0 0
        %1205 = vmatmul.mubr.bf16.gmra.mrb[0].mxu0 %v1151
        %v1206 = vpop.f32.mrb[0].mxu0
        %v1207 = vadd.f32 %v1128, %v1206
        %v1208 = vpop.f32.mrb[0].mxu0
        %v1209 = vpop.f32.mrb[0].mxu0
        %v1210 = vadd.f32 %v1129, %v1209
        %v1211 = vpop.f32.mrb[0].mxu0
        %1212 = vmatprep.mubr.bf16.mxu0 0
        %1213 = vmatmul.mubr.bf16.gmra.mrb[0].mxu0 %v1154
        %v1214 = vpop.f32.mrb[0].mxu0
        %v1215 = vadd.f32 %v1130, %v1214
        %v1216 = vpop.f32.mrb[0].mxu0
        %v1217 = vpop.f32.mrb[0].mxu0
        %v1218 = vadd.f32 %v1131, %v1217
        %v1219 = vpop.f32.mrb[0].mxu0
        %1220 = vdwg.mxu0
        %v1221 = vpack.c.bf16 %v1194, %v1191
        %v1222 = vpack.c.bf16 %v1202, %v1199
        %v1223 = vpack.c.bf16 %v1210, %v1207
        %v1224 = vpack.c.bf16 %v1218, %v1215
        %v1225 = vld [vmem:[%s11] sm:$0x1]
        %v1226 = vld [vmem:[%s10] sm:$0xf]
        %v1227 = vld [vmem:[%s10 + $0x4] sm:$0xf]
        %v1228 = vld [vmem:[%s10 + $0x8] sm:$0xf]
        %v1229 = vld [vmem:[%s10 + $0xc] sm:$0xf]
        %v1231 = vlaneseq
        %v1232 = vshrl.u32 %v1231, 7
        %v1233 = vsub.s32 0, %v1232
        %v1234 = vrot.slane %v1225, %v1233
        %v1240 = vunpack.c.l.b16 %v1226
        %v1241 = vunpack.c.l.b16 %v1227
        %v1242 = vunpack.c.l.b16 %v1228
        %v1243 = vunpack.c.l.b16 %v1229
        %v1244 = vpack.c.b16 %v1241, %v1240
        %v1245 = vpack.c.b16 %v1243, %v1242
        %1248 = vmatprep.subr.bf16.mxu0 0
        %1249 = vmatpush1.bf16.msra.mxu0 %v1244
        %1250 = vmatprep.subr.bf16.mxu0 0
        %1251 = vmatpush1.bf16.msra.mxu0 %v1245
        %1252 = vmatprep.subr.bf16.mxu0 0
        %1253 = vmatpush1.bf16.msra.mxu0 0
        %1254 = vmatprep.subr.bf16.mxu0 0
        %1255 = vmatpush1.bf16.msra.mxu0 0
        %1256 = vmatprep.subr.bf16.mxu0 0
        %1257 = vmatpush1.bf16.msra.mxu0 0
        %1258 = vmatprep.subr.bf16.mxu0 0
        %1259 = vmatpush1.bf16.msra.mxu0 0
        %1260 = vmatprep.subr.bf16.mxu0 0
        %1261 = vmatpush1.bf16.msra.mxu0 0
        %1262 = vmatprep.subr.bf16.mxu0 0
        %1263 = vmatpush1.bf16.msra.mxu0 0
        %1264 = vmatprep.subr.bf16.mxu0 0
        %1265 = vmatpush1.bf16.msra.mxu0 0
        %1266 = vmatprep.subr.bf16.mxu0 0
        %1267 = vmatpush1.bf16.msra.mxu0 0
        %1268 = vmatprep.subr.bf16.mxu0 0
        %1269 = vmatpush1.bf16.msra.mxu0 0
        %1270 = vmatprep.subr.bf16.mxu0 0
        %1271 = vmatpush1.bf16.msra.mxu0 0
        %1272 = vmatprep.subr.bf16.mxu0 0
        %1273 = vmatpush1.bf16.msra.mxu0 0
        %1274 = vmatprep.subr.bf16.mxu0 0
        %1275 = vmatpush1.bf16.msra.mxu0 0
        %1276 = vmatprep.subr.bf16.mxu0 0
        %1277 = vmatpush1.bf16.msra.mxu0 0
        %1278 = vmatprep.subr.bf16.mxu0 0
        %1279 = vmatpush1.bf16.msra.mxu0 0
        %1280 = vmatprep.mubr.bf16.mxu0 0
        %1281 = vmatmul.mubr.bf16.gmra.mrb[0].mxu0 %v665
        %v1282 = vpop.f32.mrb[0].mxu0
        %v1283 = vadd.f32 %v1234, %v1282
        %v1284 = vpop.f32.mrb[0].mxu0
        %v1285 = vpop.f32.mrb[0].mxu0
        %v1286 = vadd.f32 %v1234, %v1285
        %v1287 = vpop.f32.mrb[0].mxu0
        %1288 = vmatprep.mubr.bf16.mxu0 0
        %1289 = vmatmul.mubr.bf16.gmra.mrb[0].mxu0 %v668
        %v1290 = vpop.f32.mrb[0].mxu0
        %v1291 = vadd.f32 %v1234, %v1290
        %v1292 = vpop.f32.mrb[0].mxu0
        %v1293 = vpop.f32.mrb[0].mxu0
        %v1294 = vadd.f32 %v1234, %v1293
        %v1295 = vpop.f32.mrb[0].mxu0
        %1296 = vmatprep.mubr.bf16.mxu0 0
        %1297 = vmatmul.mubr.bf16.gmra.mrb[0].mxu0 %v671
        %v1298 = vpop.f32.mrb[0].mxu0
        %v1299 = vadd.f32 %v1234, %v1298
        %v1300 = vpop.f32.mrb[0].mxu0
        %v1301 = vpop.f32.mrb[0].mxu0
        %v1302 = vadd.f32 %v1234, %v1301
        %v1303 = vpop.f32.mrb[0].mxu0
        %1304 = vmatprep.mubr.bf16.mxu0 0
        %1305 = vmatmul.mubr.bf16.gmra.mrb[0].mxu0 %v674
        %v1306 = vpop.f32.mrb[0].mxu0
        %v1307 = vadd.f32 %v1234, %v1306
        %v1308 = vpop.f32.mrb[0].mxu0
        %v1309 = vpop.f32.mrb[0].mxu0
        %v1310 = vadd.f32 %v1234, %v1309
        %v1311 = vpop.f32.mrb[0].mxu0
        %1312 = vdwg.mxu0
        %v1313 = vld [vmem:[%s10 + $0x10] sm:$0xf]
        %v1314 = vld [vmem:[%s10 + $0x14] sm:$0xf]
        %v1315 = vld [vmem:[%s10 + $0x18] sm:$0xf]
        %v1316 = vld [vmem:[%s10 + $0x1c] sm:$0xf]
        %v1321 = vunpack.c.l.b16 %v1313
        %v1322 = vunpack.c.l.b16 %v1314
        %v1323 = vunpack.c.l.b16 %v1315
        %v1324 = vunpack.c.l.b16 %v1316
        %v1325 = vpack.c.b16 %v1322, %v1321
        %v1326 = vpack.c.b16 %v1324, %v1323
        %v1330 = vsel %vm429, %v1221, 0
        %v1333 = vsel %vm429, %v1222, 0
        %v1336 = vsel %vm429, %v1223, 0
        %v1339 = vsel %vm429, %v1224, 0
        %1341 = vmatprep.subr.bf16.mxu0 0
        %1342 = vmatpush1.bf16.msra.mxu0 %v1325
        %1343 = vmatprep.subr.bf16.mxu0 0
        %1344 = vmatpush1.bf16.msra.mxu0 %v1326
        %1345 = vmatprep.subr.bf16.mxu0 0
        %1346 = vmatpush1.bf16.msra.mxu0 0
        %1347 = vmatprep.subr.bf16.mxu0 0
        %1348 = vmatpush1.bf16.msra.mxu0 0
        %1349 = vmatprep.subr.bf16.mxu0 0
        %1350 = vmatpush1.bf16.msra.mxu0 0
        %1351 = vmatprep.subr.bf16.mxu0 0
        %1352 = vmatpush1.bf16.msra.mxu0 0
        %1353 = vmatprep.subr.bf16.mxu0 0
        %1354 = vmatpush1.bf16.msra.mxu0 0
        %1355 = vmatprep.subr.bf16.mxu0 0
        %1356 = vmatpush1.bf16.msra.mxu0 0
        %1357 = vmatprep.subr.bf16.mxu0 0
        %1358 = vmatpush1.bf16.msra.mxu0 0
        %1359 = vmatprep.subr.bf16.mxu0 0
        %1360 = vmatpush1.bf16.msra.mxu0 0
        %1361 = vmatprep.subr.bf16.mxu0 0
        %1362 = vmatpush1.bf16.msra.mxu0 0
        %1363 = vmatprep.subr.bf16.mxu0 0
        %1364 = vmatpush1.bf16.msra.mxu0 0
        %1365 = vmatprep.subr.bf16.mxu0 0
        %1366 = vmatpush1.bf16.msra.mxu0 0
        %1367 = vmatprep.subr.bf16.mxu0 0
        %1368 = vmatpush1.bf16.msra.mxu0 0
        %1369 = vmatprep.subr.bf16.mxu0 0
        %1370 = vmatpush1.bf16.msra.mxu0 0
        %1371 = vmatprep.subr.bf16.mxu0 0
        %1372 = vmatpush1.bf16.msra.mxu0 0
        %1373 = vmatprep.mubr.bf16.mxu0 0
        %1374 = vmatmul.mubr.bf16.gmra.mrb[0].mxu0 %v1330
        %v1375 = vpop.f32.mrb[0].mxu0
        %v1376 = vadd.f32 0.0, %v1375
        %v1377 = vpop.f32.mrb[0].mxu0
        %v1378 = vpop.f32.mrb[0].mxu0
        %v1379 = vadd.f32 0.0, %v1378
        %v1380 = vpop.f32.mrb[0].mxu0
        %1381 = vmatprep.mubr.bf16.mxu0 0
        %1382 = vmatmul.mubr.bf16.gmra.mrb[0].mxu0 %v1333
        %v1383 = vpop.f32.mrb[0].mxu0
        %v1384 = vadd.f32 0.0, %v1383
        %v1385 = vpop.f32.mrb[0].mxu0
        %v1386 = vpop.f32.mrb[0].mxu0
        %v1387 = vadd.f32 0.0, %v1386
        %v1388 = vpop.f32.mrb[0].mxu0
        %1389 = vmatprep.mubr.bf16.mxu0 0
        %1390 = vmatmul.mubr.bf16.gmra.mrb[0].mxu0 %v1336
        %v1391 = vpop.f32.mrb[0].mxu0
        %v1392 = vadd.f32 0.0, %v1391
        %v1393 = vpop.f32.mrb[0].mxu0
        %v1394 = vpop.f32.mrb[0].mxu0
        %v1395 = vadd.f32 0.0, %v1394
        %v1396 = vpop.f32.mrb[0].mxu0
        %1397 = vmatprep.mubr.bf16.mxu0 0
        %1398 = vmatmul.mubr.bf16.gmra.mrb[0].mxu0 %v1339
        %v1399 = vpop.f32.mrb[0].mxu0
        %v1400 = vadd.f32 0.0, %v1399
        %v1401 = vpop.f32.mrb[0].mxu0
        %v1402 = vpop.f32.mrb[0].mxu0
        %v1403 = vadd.f32 0.0, %v1402
        %v1404 = vpop.f32.mrb[0].mxu0
        %1405 = vdwg.mxu0
        %v1406 = vadd.f32 %v1283, %v1376
        %v1407 = vadd.f32 %v1286, %v1379
        %v1408 = vadd.f32 %v1291, %v1384
        %v1409 = vadd.f32 %v1294, %v1387
        %v1410 = vadd.f32 %v1299, %v1392
        %v1411 = vadd.f32 %v1302, %v1395
        %v1412 = vadd.f32 %v1307, %v1400
        %v1413 = vadd.f32 %v1310, %v1403
        %v1414 = vmax.f32 %v1406, 0.0
        %v1415 = vmax.f32 %v1407, 0.0
        %v1416 = vmax.f32 %v1408, 0.0
        %v1417 = vmax.f32 %v1409, 0.0
        %v1418 = vmax.f32 %v1410, 0.0
        %v1419 = vmax.f32 %v1411, 0.0
        %v1420 = vmax.f32 %v1412, 0.0
        %v1421 = vmax.f32 %v1413, 0.0
        %v1422 = vpack.c.bf16 %v1415, %v1414
        %v1423 = vpack.c.bf16 %v1417, %v1416
        %v1424 = vpack.c.bf16 %v1419, %v1418
        %v1425 = vpack.c.bf16 %v1421, %v1420
        %v1430 = vunpack.c.l.b16 %v1422
        %v1431 = vunpack.c.h.b16 %v1422
        %v1432 = vunpack.c.l.b16 %v1423
        %v1433 = vunpack.c.h.b16 %v1423
        %v1434 = vunpack.c.l.b16 %v1424
        %v1435 = vunpack.c.h.b16 %v1424
        %v1436 = vunpack.c.l.b16 %v1425
        %v1437 = vunpack.c.h.b16 %v1425
        %v1438 = vpack.c.b16 %v1430, %v1430
        %v1439 = vpack.c.b16 %v1431, %v1431
        %v1440 = vpack.c.b16 %v1432, %v1432
        %v1441 = vpack.c.b16 %v1433, %v1433
        %v1442 = vpack.c.b16 %v1434, %v1434
        %v1443 = vpack.c.b16 %v1435, %v1435
        %v1444 = vpack.c.b16 %v1436, %v1436
        %v1445 = vpack.c.b16 %v1437, %v1437
        %1454 = vst [vmem:[%s406] sm:$0xf] %v1438
        %1455 = vst [vmem:[%s406 + $0x4] sm:$0xf] %v1439
        %1456 = vst [vmem:[%s406 + $0x8] sm:$0xf] %v1440
        %1457 = vst [vmem:[%s406 + $0xc] sm:$0xf] %v1441
        %1458 = vst [vmem:[%s406 + $0x10] sm:$0xf] %v1442
        %1459 = vst [vmem:[%s406 + $0x14] sm:$0xf] %v1443
        %1460 = vst [vmem:[%s406 + $0x18] sm:$0xf] %v1444
        %1461 = vst [vmem:[%s406 + $0x1c] sm:$0xf] %v1445
        %s1462 = sand.u32 %s291, 1
        %s1463 = scalar_lea.sflag [#allocation3], %s1462
        %s1464 = sand.u32 %s291, 1
        %s1465 = smul.addr %s1464, 32
        %s1466 = scalar_lea.vmem [#allocation2], %s1465
        // Predicated region
        $region69: #{tpu_custom_call.1} parent=67 // pred_check
          %p1467 = pneg %p301
        $region70: #{tpu_custom_call.1} parent=67 // pred_check_branch
          %1469 = sbr.rel (%p1467) target = $region72
        $region71: #{tpu_custom_call.1} parent=67 // pred_region
          %s1471 = ssub.s32 512, 512
          %1472 = vsyncadd %s1463, %s1471
          %s1473 = smul.addr %s26, 8
          %s1474 = smul.addr %s1473, 64
          %s1475 = scalar_lea.hbm %s12, %s1474
          %s1476 = sshll.u32 %s1466, 4
          %s1477 = int_to_ptr.vmem [resolvable:$true] %s1476
          %1482 = dma.vmem_to_hbm [thread:$0]  %s1477, 512, %s1475, %s1463, 64, 64, 4
        $region72: #{tpu_custom_call.1} parent=67 // pred_fallthru
          _
      $region68: #{tpu_custom_call.1} parent=5 // pred_fallthru
        _
      %p1483 = scmp.le.s32.totalorder 2, %s21
      // Predicated region
      $region73: #{tpu_custom_call.1} parent=5 // pred_check
        %p1484 = pneg %p1483
      $region74: #{tpu_custom_call.1} parent=5 // pred_check_branch
        %1486 = sbr.rel (%p1484) target = $region76
      $region75: #{tpu_custom_call.1} parent=5 // pred_region
        %s1487 = ssub.s32 %s21, 2
        // Predicated region
        $region77: #{tpu_custom_call.1} parent=75 // pred_check
          %p1488 = pneg %p307
        $region78: #{tpu_custom_call.1} parent=75 // pred_check_branch
          %1490 = sbr.rel (%p1488) target = $region80
        $region79: #{tpu_custom_call.1} parent=75 // pred_region
          %s1491 = sand.u32 %s292, 1
          %s1492 = scalar_lea.sflag [#allocation3], %s1491
          %s1493 = sand.u32 %s292, 1
          %s1494 = smul.addr %s1493, 32
          %s1495 = scalar_lea.vmem [#allocation2], %s1494
          %1496 = dma.done %s1492, 512
        $region80: #{tpu_custom_call.1} parent=75 // pred_fallthru
          _
      $region76: #{tpu_custom_call.1} parent=5 // pred_fallthru
        _
    $region6: #{tpu_custom_call.1} parent=1 // loop_footer
      %s25 = sadd.s32 1, %s21
    $region7: #{tpu_custom_call.1} parent=1 // loop_footer_branch
      %20 = sbr.rel target = $region3
    $region8: #{tpu_custom_call.1} parent=1 // loop_exit
      _
    %1497 = vsyncpa [#allocation3], 1
    %s1498 = scalar_lea.sflag [#allocation3], 1
    %1499 = vsyncpa %s1498, 1

// kernel: tpu_custom_call.1
$region0: #{tpu_custom_call.1}
  #allocation0 [shape = 'u32[]', space=smem, size = 0x4, offset = 0x4, fixed_abs, tag = 'smem constant byte address 0x4 - core index']
  #allocation1 [shape = 'u32[144,128]{1,0:T(1,128)}', space=vmem, size = 0x12000, scoped, tag = 'internal scratch']
  %s0 = inlined_call_operand.vmem [shape: bf16[2,64,32], index: 0, kind: input, shape index: {}]
  %s1 = inlined_call_operand.vmem [shape: f32[32,2], index: 1, kind: input, shape index: {}]
  %s2 = inlined_call_operand.vmem [shape: f32[2,4], index: 2, kind: input, shape index: {}]
  %s3 = inlined_call_operand.vmem [shape: bf16[32,32], index: 3, kind: input, shape index: {}]
  %s4 = inlined_call_operand.vmem [shape: f32[1,32], index: 4, kind: input, shape index: {}]
  %s5 = inlined_call_operand.vmem [shape: bf16[32,32], index: 5, kind: input, shape index: {}]
  %s6 = inlined_call_operand.vmem [shape: f32[1,32], index: 6, kind: input, shape index: {}]
  %s7 = inlined_call_operand.vmem [shape: f32[32,2], index: 7, kind: input, shape index: {}]
  %s8 = inlined_call_operand.vmem [shape: f32[2,32], index: 8, kind: input, shape index: {}]
  %s9 = inlined_call_operand.vmem [shape: bf16[4,32,32], index: 9, kind: input, shape index: {}]
  %s10 = inlined_call_operand.vmem [shape: bf16[64,128], index: 10, kind: input, shape index: {}]
  %s11 = inlined_call_operand.vmem [shape: f32[1,128], index: 11, kind: input, shape index: {}]
  %s12 = inlined_call_operand.hbm [shape: bf16[2,64,128], index: 12, kind: output, shape index: {}]
  %s13 = sld [smem:[#allocation0]]
  $region81: #{tpu_custom_call.1} parent=0
    _
  %s15 = ssub.s32 1, %s13
  %s16 = scalar_select 0, %s15, %s13
  $region1: #{tpu_custom_call.1} parent=0
    #allocation2 [shape = 'u8[32768]{0}', space=vmem, size = 0x8000, scoped, tag = 'output window, operand 0']
    #allocation3 [shape = 's32[2]{0}', space=sflag, size = 0x8, scoped, tag = 'scoped memory for tpu_custom_call.1']
    %17 = vsyncpa [#allocation3], 0
    %s18 = scalar_lea.sflag [#allocation3], 1
    %19 = vsyncpa %s18, 0
    loop: start=0, step=1, limit=4
    $region2: #{tpu_custom_call.1} parent=1 // loop_pre_header
      _
    $region3: #{tpu_custom_call.1} parent=1 // loop_header
      %s21 = sphi 0, %s25
      %p22 = scmp.ge.s32.totalorder %s21, 4
      %s31 = sphi 0, %s33
      %s34 = sphi 0, %s31
      %s35 = sphi 0, %s34
      %s51 = sphi 0, %s35
      %s55 = sphi 0, %s55
      %s57 = sphi 0, %s55
      %s58 = sphi 0, %s57
      %s72 = sphi 0, %s58
      %s76 = sphi 0, %s76
      %s78 = sphi 0, %s76
      %s79 = sphi 0, %s78
      %s93 = sphi 0, %s79
      %s97 = sphi 0, %s97
      %s99 = sphi 0, %s97
      %s100 = sphi 0, %s99
      %s114 = sphi 0, %s100
      %s118 = sphi 0, %s118
      %s120 = sphi 0, %s118
      %s121 = sphi 0, %s120
      %s135 = sphi 0, %s121
      %s139 = sphi 0, %s139
      %s141 = sphi 0, %s139
      %s142 = sphi 0, %s141
      %s156 = sphi 0, %s142
      %s160 = sphi 0, %s160
      %s162 = sphi 0, %s160
      %s163 = sphi 0, %s162
      %s177 = sphi 0, %s163
      %s181 = sphi 0, %s181
      %s183 = sphi 0, %s181
      %s184 = sphi 0, %s183
      %s198 = sphi 0, %s184
      %s202 = sphi 0, %s202
      %s204 = sphi 0, %s202
      %s205 = sphi 0, %s204
      %s219 = sphi 0, %s205
      %s223 = sphi 0, %s223
      %s225 = sphi 0, %s223
      %s226 = sphi 0, %s225
      %s240 = sphi 0, %s226
      %s244 = sphi 0, %s244
      %s246 = sphi 0, %s244
      %s247 = sphi 0, %s246
      %s261 = sphi 0, %s247
      %s265 = sphi 0, %s265
      %s267 = sphi 0, %s265
      %s268 = sphi 0, %s267
      %s282 = sphi 0, %s268
      %s288 = sphi 0, %s290
      %s291 = sphi 0, %s288
      %s292 = sphi 0, %s291
      %s308 = sphi 0, %s292
    $region4: #{tpu_custom_call.1} parent=1 // loop_header_branch
      %24 = sbr.rel (%p22) target = $region8
    $region5: #{tpu_custom_call.1} parent=1 // loop_body
      %s26 = ssub.s32 %s21, 1
      %s27 = ssub.s32 %s21, 2
      %s28 = sadd.s32 %s21, 1
      %s29 = ssub.s32 %s21, %s28
      %p30 = scmp.eq.s32.totalorder %s29, 0
      %s32 = sadd.s32 %s31, 1
      %s33 = scalar_select %p30, %s31, %s32
      %p36 = pneg %p30
      %p37 = scmp.eq.s32.totalorder %s21, 1
      %p38 = por %p36, %p37
      %p39 = scmp.ne.s32.totalorder %s31, %s34
      %p40 = scmp.eq.s32.totalorder %s21, 0
      %p41 = por %p39, %p40
      %p42 = scmp.ne.s32.totalorder %s31, %s34
      %p43 = scmp.eq.s32.totalorder %s26, 1
      %p44 = por %p42, %p43
      %p45 = scmp.ne.s32.totalorder %s34, %s35
      %p46 = scmp.eq.s32.totalorder %s26, 0
      %p47 = por %p45, %p46
      %p48 = scmp.ne.s32.totalorder %s34, %s35
      %p49 = scmp.eq.s32.totalorder %s27, 1
      %p50 = por %p48, %p49
      %p52 = scmp.ne.s32.totalorder %s35, %s51
      %p53 = scmp.eq.s32.totalorder %s27, 0
      %p54 = por %p52, %p53
      %s56 = sadd.s32 %s55, 1
      %p59 = scmp.eq.s32.totalorder %s21, 1
      %p60 = scmp.ne.s32.totalorder %s55, %s57
      %p61 = scmp.eq.s32.totalorder %s21, 0
      %p62 = por %p60, %p61
      %p63 = scmp.ne.s32.totalorder %s55, %s57
      %p64 = scmp.eq.s32.totalorder %s26, 1
      %p65 = por %p63, %p64
      %p66 = scmp.ne.s32.totalorder %s57, %s58
      %p67 = scmp.eq.s32.totalorder %s26, 0
      %p68 = por %p66, %p67
      %p69 = scmp.ne.s32.totalorder %s57, %s58
      %p70 = scmp.eq.s32.totalorder %s27, 1
      %p71 = por %p69, %p70
      %p73 = scmp.ne.s32.totalorder %s58, %s72
      %p74 = scmp.eq.s32.totalorder %s27, 0
      %p75 = por %p73, %p74
      %s77 = sadd.s32 %s76, 1
      %p80 = scmp.eq.s32.totalorder %s21, 1
      %p81 = scmp.ne.s32.totalorder %s76, %s78
      %p82 = scmp.eq.s32.totalorder %s21, 0
      %p83 = por %p81, %p82
      %p84 = scmp.ne.s32.totalorder %s76, %s78
      %p85 = scmp.eq.s32.totalorder %s26, 1
      %p86 = por %p84, %p85
      %p87 = scmp.ne.s32.totalorder %s78, %s79
      %p88 = scmp.eq.s32.totalorder %s26, 0
      %p89 = por %p87, %p88
      %p90 = scmp.ne.s32.totalorder %s78, %s79
      %p91 = scmp.eq.s32.totalorder %s27, 1
      %p92 = por %p90, %p91
      %p94 = scmp.ne.s32.totalorder %s79, %s93
      %p95 = scmp.eq.s32.totalorder %s27, 0
      %p96 = por %p94, %p95
      %s98 = sadd.s32 %s97, 1
      %p101 = scmp.eq.s32.totalorder %s21, 1
      %p102 = scmp.ne.s32.totalorder %s97, %s99
      %p103 = scmp.eq.s32.totalorder %s21, 0
      %p104 = por %p102, %p103
      %p105 = scmp.ne.s32.totalorder %s97, %s99
      %p106 = scmp.eq.s32.totalorder %s26, 1
      %p107 = por %p105, %p106
      %p108 = scmp.ne.s32.totalorder %s99, %s100
      %p109 = scmp.eq.s32.totalorder %s26, 0
      %p110 = por %p108, %p109
      %p111 = scmp.ne.s32.totalorder %s99, %s100
      %p112 = scmp.eq.s32.totalorder %s27, 1
      %p113 = por %p111, %p112
      %p115 = scmp.ne.s32.totalorder %s100, %s114
      %p116 = scmp.eq.s32.totalorder %s27, 0
      %p117 = por %p115, %p116
      %s119 = sadd.s32 %s118, 1
      %p122 = scmp.eq.s32.totalorder %s21, 1
      %p123 = scmp.ne.s32.totalorder %s118, %s120
      %p124 = scmp.eq.s32.totalorder %s21, 0
      %p125 = por %p123, %p124
      %p126 = scmp.ne.s32.totalorder %s118, %s120
      %p127 = scmp.eq.s32.totalorder %s26, 1
      %p128 = por %p126, %p127
      %p129 = scmp.ne.s32.totalorder %s120, %s121
      %p130 = scmp.eq.s32.totalorder %s26, 0
      %p131 = por %p129, %p130
      %p132 = scmp.ne.s32.totalorder %s120, %s121
      %p133 = scmp.eq.s32.totalorder %s27, 1
      %p134 = por %p132, %p133
      %p136 = scmp.ne.s32.totalorder %s121, %s135
      %p137 = scmp.eq.s32.totalorder %s27, 0
      %p138 = por %p136, %p137
      %s140 = sadd.s32 %s139, 1
      %p143 = scmp.eq.s32.totalorder %s21, 1
      %p144 = scmp.ne.s32.totalorder %s139, %s141
      %p145 = scmp.eq.s32.totalorder %s21, 0
      %p146 = por %p144, %p145
      %p147 = scmp.ne.s32.totalorder %s139, %s141
      %p148 = scmp.eq.s32.totalorder %s26, 1
      %p149 = por %p147, %p148
      %p150 = scmp.ne.s32.totalorder %s141, %s142
      %p151 = scmp.eq.s32.totalorder %s26, 0
      %p152 = por %p150, %p151
      %p153 = scmp.ne.s32.totalorder %s141, %s142
      %p154 = scmp.eq.s32.totalorder %s27, 1
      %p155 = por %p153, %p154
      %p157 = scmp.ne.s32.totalorder %s142, %s156
      %p158 = scmp.eq.s32.totalorder %s27, 0
      %p159 = por %p157, %p158
      %s161 = sadd.s32 %s160, 1
      %p164 = scmp.eq.s32.totalorder %s21, 1
      %p165 = scmp.ne.s32.totalorder %s160, %s162
      %p166 = scmp.eq.s32.totalorder %s21, 0
      %p167 = por %p165, %p166
      %p168 = scmp.ne.s32.totalorder %s160, %s162
      %p169 = scmp.eq.s32.totalorder %s26, 1
      %p170 = por %p168, %p169
      %p171 = scmp.ne.s32.totalorder %s162, %s163
      %p172 = scmp.eq.s32.totalorder %s26, 0
      %p173 = por %p171, %p172
      %p174 = scmp.ne.s32.totalorder %s162, %s163
      %p175 = scmp.eq.s32.totalorder %s27, 1
      %p176 = por %p174, %p175
      %p178 = scmp.ne.s32.totalorder %s163, %s177
      %p179 = scmp.eq.s32.totalorder %s27, 0
      %p180 = por %p178, %p179
      %s182 = sadd.s32 %s181, 1
      %p185 = scmp.eq.s32.totalorder %s21, 1
      %p186 = scmp.ne.s32.totalorder %s181, %s183
      %p187 = scmp.eq.s32.totalorder %s21, 0
      %p188 = por %p186, %p187
      %p189 = scmp.ne.s32.totalorder %s181, %s183
      %p190 = scmp.eq.s32.totalorder %s26, 1
      %p191 = por %p189, %p190
      %p192 = scmp.ne.s32.totalorder %s183, %s184
      %p193 = scmp.eq.s32.totalorder %s26, 0
      %p194 = por %p192, %p193
      %p195 = scmp.ne.s32.totalorder %s183, %s184
      %p196 = scmp.eq.s32.totalorder %s27, 1
      %p197 = por %p195, %p196
      %p199 = scmp.ne.s32.totalorder %s184, %s198
      %p200 = scmp.eq.s32.totalorder %s27, 0
      %p201 = por %p199, %p200
      %s203 = sadd.s32 %s202, 1
      %p206 = scmp.eq.s32.totalorder %s21, 1
      %p207 = scmp.ne.s32.totalorder %s202, %s204
      %p208 = scmp.eq.s32.totalorder %s21, 0
      %p209 = por %p207, %p208
      %p210 = scmp.ne.s32.totalorder %s202, %s204
      %p211 = scmp.eq.s32.totalorder %s26, 1
      %p212 = por %p210, %p211
      %p213 = scmp.ne.s32.totalorder %s204, %s205
      %p214 = scmp.eq.s32.totalorder %s26, 0
      %p215 = por %p213, %p214
      %p216 = scmp.ne.s32.totalorder %s204, %s205
      %p217 = scmp.eq.s32.totalorder %s27, 1
      %p218 = por %p216, %p217
      %p220 = scmp.ne.s32.totalorder %s205, %s219
      %p221 = scmp.eq.s32.totalorder %s27, 0
      %p222 = por %p220, %p221
      %s224 = sadd.s32 %s223, 1
      %p227 = scmp.eq.s32.totalorder %s21, 1
      %p228 = scmp.ne.s32.totalorder %s223, %s225
      %p229 = scmp.eq.s32.totalorder %s21, 0
      %p230 = por %p228, %p229
      %p231 = scmp.ne.s32.totalorder %s223, %s225
      %p232 = scmp.eq.s32.totalorder %s26, 1
      %p233 = por %p231, %p232
      %p234 = scmp.ne.s32.totalorder %s225, %s226
      %p235 = scmp.eq.s32.totalorder %s26, 0
      %p236 = por %p234, %p235
      %p237 = scmp.ne.s32.totalorder %s225, %s226
      %p238 = scmp.eq.s32.totalorder %s27, 1
      %p239 = por %p237, %p238
      %p241 = scmp.ne.s32.totalorder %s226, %s240
      %p242 = scmp.eq.s32.totalorder %s27, 0
      %p243 = por %p241, %p242
      %s245 = sadd.s32 %s244, 1
      %p248 = scmp.eq.s32.totalorder %s21, 1
      %p249 = scmp.ne.s32.totalorder %s244, %s246
      %p250 = scmp.eq.s32.totalorder %s21, 0
      %p251 = por %p249, %p250
      %p252 = scmp.ne.s32.totalorder %s244, %s246
      %p253 = scmp.eq.s32.totalorder %s26, 1
      %p254 = por %p252, %p253
      %p255 = scmp.ne.s32.totalorder %s246, %s247
      %p256 = scmp.eq.s32.totalorder %s26, 0
      %p257 = por %p255, %p256
      %p258 = scmp.ne.s32.totalorder %s246, %s247
      %p259 = scmp.eq.s32.totalorder %s27, 1
      %p260 = por %p258, %p259
      %p262 = scmp.ne.s32.totalorder %s247, %s261
      %p263 = scmp.eq.s32.totalorder %s27, 0
      %p264 = por %p262, %p263
      %s266 = sadd.s32 %s265, 1
      %p269 = scmp.eq.s32.totalorder %s21, 1
      %p270 = scmp.ne.s32.totalorder %s265, %s267
      %p271 = scmp.eq.s32.totalorder %s21, 0
      %p272 = por %p270, %p271
      %p273 = scmp.ne.s32.totalorder %s265, %s267
      %p274 = scmp.eq.s32.totalorder %s26, 1
      %p275 = por %p273, %p274
      %p276 = scmp.ne.s32.totalorder %s267, %s268
      %p277 = scmp.eq.s32.totalorder %s26, 0
      %p278 = por %p276, %p277
      %p279 = scmp.ne.s32.totalorder %s267, %s268
      %p280 = scmp.eq.s32.totalorder %s27, 1
      %p281 = por %p279, %p280
      %p283 = scmp.ne.s32.totalorder %s268, %s282
      %p284 = scmp.eq.s32.totalorder %s27, 0
      %p285 = por %p283, %p284
      %s286 = ssub.s32 %s21, %s28
      %p287 = scmp.eq.s32.totalorder %s286, 0
      %s289 = sadd.s32 %s288, 1
      %s290 = scalar_select %p287, %s288, %s289
      %p293 = pneg %p287
      %p294 = scmp.eq.s32.totalorder %s21, 1
      %p295 = por %p293, %p294
      %p296 = scmp.ne.s32.totalorder %s288, %s291
      %p297 = scmp.eq.s32.totalorder %s21, 0
      %p298 = por %p296, %p297
      %p299 = scmp.ne.s32.totalorder %s288, %s291
      %p300 = scmp.eq.s32.totalorder %s26, 1
      %p301 = por %p299, %p300
      %p302 = scmp.ne.s32.totalorder %s291, %s292
      %p303 = scmp.eq.s32.totalorder %s26, 0
      %p304 = por %p302, %p303
      %p305 = scmp.ne.s32.totalorder %s291, %s292
      %p306 = scmp.eq.s32.totalorder %s27, 1
      %p307 = por %p305, %p306
      %p309 = scmp.ne.s32.totalorder %s292, %s308
      %p310 = scmp.eq.s32.totalorder %s27, 0
      %p311 = por %p309, %p310
      %p312 = scmp.le.s32.totalorder 1, %s21
      %p313 = scmp.lt.s32.totalorder %s21, 3
      %p314 = pnand %p312, %p313
      %p315 = pneg %p314
      // Predicated region
      $region9: #{tpu_custom_call.1} parent=5 // pred_check
        _
      $region10: #{tpu_custom_call.1} parent=5 // pred_check_branch
        %317 = sbr.rel (%p314) target = $region12
      $region11: #{tpu_custom_call.1} parent=5 // pred_region
        %s318 = ssub.s32 %s21, 1
        // Predicated region
        $region13: #{tpu_custom_call.1} parent=11 // pred_check
          %p319 = pneg %p68
        $region14: #{tpu_custom_call.1} parent=11 // pred_check_branch
          %321 = sbr.rel (%p319) target = $region16
        $region15: #{tpu_custom_call.1} parent=11 // pred_region
          _
        $region16: #{tpu_custom_call.1} parent=11 // pred_fallthru
          _
        // Predicated region
        $region17: #{tpu_custom_call.1} parent=11 // pred_check
          %p322 = pneg %p89
        $region18: #{tpu_custom_call.1} parent=11 // pred_check_branch
          %324 = sbr.rel (%p322) target = $region20
        $region19: #{tpu_custom_call.1} parent=11 // pred_region
          _
        $region20: #{tpu_custom_call.1} parent=11 // pred_fallthru
          _
        // Predicated region
        $region21: #{tpu_custom_call.1} parent=11 // pred_check
          %p325 = pneg %p110
        $region22: #{tpu_custom_call.1} parent=11 // pred_check_branch
          %327 = sbr.rel (%p325) target = $region24
        $region23: #{tpu_custom_call.1} parent=11 // pred_region
          _
        $region24: #{tpu_custom_call.1} parent=11 // pred_fallthru
          _
        // Predicated region
        $region25: #{tpu_custom_call.1} parent=11 // pred_check
          %p328 = pneg %p131
        $region26: #{tpu_custom_call.1} parent=11 // pred_check_branch
          %330 = sbr.rel (%p328) target = $region28
        $region27: #{tpu_custom_call.1} parent=11 // pred_region
          _
        $region28: #{tpu_custom_call.1} parent=11 // pred_fallthru
          _
        // Predicated region
        $region29: #{tpu_custom_call.1} parent=11 // pred_check
          %p331 = pneg %p152
        $region30: #{tpu_custom_call.1} parent=11 // pred_check_branch
          %333 = sbr.rel (%p331) target = $region32
        $region31: #{tpu_custom_call.1} parent=11 // pred_region
          _
        $region32: #{tpu_custom_call.1} parent=11 // pred_fallthru
          _
        // Predicated region
        $region33: #{tpu_custom_call.1} parent=11 // pred_check
          %p334 = pneg %p173
        $region34: #{tpu_custom_call.1} parent=11 // pred_check_branch
          %336 = sbr.rel (%p334) target = $region36
        $region35: #{tpu_custom_call.1} parent=11 // pred_region
          _
        $region36: #{tpu_custom_call.1} parent=11 // pred_fallthru
          _
        // Predicated region
        $region37: #{tpu_custom_call.1} parent=11 // pred_check
          %p337 = pneg %p194
        $region38: #{tpu_custom_call.1} parent=11 // pred_check_branch
          %339 = sbr.rel (%p337) target = $region40
        $region39: #{tpu_custom_call.1} parent=11 // pred_region
          _
        $region40: #{tpu_custom_call.1} parent=11 // pred_fallthru
          _
        // Predicated region
        $region41: #{tpu_custom_call.1} parent=11 // pred_check
          %p340 = pneg %p215
        $region42: #{tpu_custom_call.1} parent=11 // pred_check_branch
          %342 = sbr.rel (%p340) target = $region44
        $region43: #{tpu_custom_call.1} parent=11 // pred_region
          _
        $region44: #{tpu_custom_call.1} parent=11 // pred_fallthru
          _
        // Predicated region
        $region45: #{tpu_custom_call.1} parent=11 // pred_check
          %p343 = pneg %p236
        $region46: #{tpu_custom_call.1} parent=11 // pred_check_branch
          %345 = sbr.rel (%p343) target = $region48
        $region47: #{tpu_custom_call.1} parent=11 // pred_region
          _
        $region48: #{tpu_custom_call.1} parent=11 // pred_fallthru
          _
        // Predicated region
        $region49: #{tpu_custom_call.1} parent=11 // pred_check
          %p346 = pneg %p257
        $region50: #{tpu_custom_call.1} parent=11 // pred_check_branch
          %348 = sbr.rel (%p346) target = $region52
        $region51: #{tpu_custom_call.1} parent=11 // pred_region
          _
        $region52: #{tpu_custom_call.1} parent=11 // pred_fallthru
          _
        // Predicated region
        $region53: #{tpu_custom_call.1} parent=11 // pred_check
          %p349 = pneg %p278
        $region54: #{tpu_custom_call.1} parent=11 // pred_check_branch
          %351 = sbr.rel (%p349) target = $region56
        $region55: #{tpu_custom_call.1} parent=11 // pred_region
          _
        $region56: #{tpu_custom_call.1} parent=11 // pred_fallthru
          _
      $region12: #{tpu_custom_call.1} parent=5 // pred_fallthru
        _
      %p352 = scmp.lt.s32.totalorder %s21, 2
      // Predicated region
      $region57: #{tpu_custom_call.1} parent=5 // pred_check
        %p353 = pneg %p352
      $region58: #{tpu_custom_call.1} parent=5 // pred_check_branch
        %355 = sbr.rel (%p353) target = $region60
      $region59: #{tpu_custom_call.1} parent=5 // pred_region
        // Predicated region
        $region61: #{tpu_custom_call.1} parent=59 // pred_check
          %p356 = pneg %p41
        $region62: #{tpu_custom_call.1} parent=59 // pred_check_branch
          %358 = sbr.rel (%p356) target = $region64
        $region63: #{tpu_custom_call.1} parent=59 // pred_region
          %p359 = scmp.lt.s32.totalorder %s21, 1
          %s360 = scalar_select %p359, %s21, 1
          %s361 = smul.addr %s360, 8
          %s362 = smul.addr %s361, 4
          %s363 = scalar_lea.vmem %s0, %s362
        $region64: #{tpu_custom_call.1} parent=59 // pred_fallthru
          _
      $region60: #{tpu_custom_call.1} parent=5 // pred_fallthru
        _
      %p364 = scmp.le.s32.totalorder 1, %s21
      %p365 = scmp.lt.s32.totalorder %s21, 3
      %p366 = pnand %p364, %p365
      %p367 = pneg %p366
      // Predicated region
      $region65: #{tpu_custom_call.1} parent=5 // pred_check
        _
      $region66: #{tpu_custom_call.1} parent=5 // pred_check_branch
        %369 = sbr.rel (%p366) target = $region68
      $region67: #{tpu_custom_call.1} parent=5 // pred_region
        %s370 = ssub.s32 %s21, 1
        %p371 = scmp.lt.s32.totalorder %s26, 1
        %s372 = scalar_select %p371, %s26, 1
        %s373 = smul.addr %s372, 8
        %s374 = smul.addr %s373, 4
        %s375 = scalar_lea.vmem %s0, %s374
        %p376 = pneg %p47
        %p377 = pneg %p44
        %p378 = pneg %p68
        %p379 = pneg %p65
        %p380 = pneg %p89
        %p381 = pneg %p86
        %p382 = pneg %p110
        %p383 = pneg %p107
        %p384 = pneg %p131
        %p385 = pneg %p128
        %p386 = pneg %p152
        %p387 = pneg %p149
        %p388 = pneg %p173
        %p389 = pneg %p170
        %p390 = pneg %p194
        %p391 = pneg %p191
        %p392 = pneg %p215
        %p393 = pneg %p212
        %p394 = pneg %p236
        %p395 = pneg %p233
        %p396 = pneg %p257
        %p397 = pneg %p254
        %p398 = pneg %p278
        %p399 = pneg %p275
        %p400 = pneg %p304
        %p401 = pneg %p301
        %s402 = sand.u32 %s291, 1
        %s403 = scalar_lea.sflag [#allocation3], %s402
        %s404 = sand.u32 %s291, 1
        %s405 = smul.addr %s404, 32
        %s406 = scalar_lea.vmem [#allocation2], %s405
        %p407 = scmp.lt.s32.totalorder %s26, 1
        %s408 = scalar_select %p407, %s26, 1
        %s409 = smul.addr %s408, 8
        %s410 = smul.addr %s409, 4
        %s411 = scalar_lea.vmem %s0, %s410
        %v413 = vld [vmem:[%s411] sm:$0xf]
        %v414 = vld [vmem:[%s411 + $0x4] sm:$0xf]
        %v415 = vld [vmem:[%s411 + $0x8] sm:$0xf]
        %v416 = vld [vmem:[%s411 + $0xc] sm:$0xf]
        %v417 = vld [vmem:[%s411 + $0x10] sm:$0xf]
        %v418 = vld [vmem:[%s411 + $0x14] sm:$0xf]
        %v419 = vld [vmem:[%s411 + $0x18] sm:$0xf]
        %v420 = vld [vmem:[%s411 + $0x1c] sm:$0xf]
        %v421 = vunpack.c.l.bf16 %v413
        %v422 = vunpack.c.l.bf16 %v414
        %v423 = vunpack.c.l.bf16 %v415
        %v424 = vunpack.c.l.bf16 %v416
        %v425 = vunpack.c.l.bf16 %v417
        %v426 = vunpack.c.l.bf16 %v418
        %v427 = vunpack.c.l.bf16 %v419
        %v428 = vunpack.c.l.bf16 %v420
        %vm429 = vcmask 261120
        %v430 = vsel %vm429, %v421, 0.0
        %v431 = vsel %vm429, %v422, 0.0
        %v432 = vadd.f32 %v430, %v431
        %v433 = vsel %vm429, %v423, 0.0
        %v434 = vadd.f32 %v432, %v433
        %v435 = vsel %vm429, %v424, 0.0
        %v436 = vadd.f32 %v434, %v435
        %v437 = vsel %vm429, %v425, 0.0
        %v438 = vadd.f32 %v436, %v437
        %v439 = vsel %vm429, %v426, 0.0
        %v440 = vadd.f32 %v438, %v439
        %v441 = vsel %vm429, %v427, 0.0
        %v442 = vadd.f32 %v440, %v441
        %v443 = vsel %vm429, %v428, 0.0
        %v444 = vadd.f32 %v442, %v443
        %v445 = vrot.slane %v444, 4
        %v446 = vadd.f32 %v444, %v445
        %v447 = vrot.slane %v446, 2
        %v448 = vadd.f32 %v446, %v447
        %v449 = vrot.slane %v448, 1
        %v450 = vadd.f32 %v448, %v449
        %v451 = vmul.f32 %v450, 0.015625
        %v452 = vld [vmem:[%s1] sm:$0xff]
        %v453 = vld [vmem:[%s1 + $0x8] sm:$0xff]
        %v454 = vld [vmem:[%s1 + $0x10] sm:$0xff]
        %v455 = vld [vmem:[%s1 + $0x18] sm:$0xff]
        %v456 = vld [vmem:[%s2] sm:$0x3]
        %v458 = vsel %vm429, %v451, 0
        %460 = vmatprep.subr.mxu0 0.0
        %461 = vmatpush1.msra.mxu0 %v452
        %462 = vmatprep.subr.mxu0 0.0
        %463 = vmatpush1.msra.mxu0 %v453
        %464 = vmatprep.subr.mxu0 0.0
        %465 = vmatpush1.msra.mxu0 %v454
        %466 = vmatprep.subr.mxu0 0.0
        %467 = vmatpush1.msra.mxu0 %v455
        %468 = vmatprep.subr.mxu0 0.0
        %469 = vmatpush1.msra.mxu0 0.0
        %470 = vmatprep.subr.mxu0 0.0
        %471 = vmatpush1.msra.mxu0 0.0
        %472 = vmatprep.subr.mxu0 0.0
        %473 = vmatpush1.msra.mxu0 0.0
        %474 = vmatprep.subr.mxu0 0.0
        %475 = vmatpush1.msra.mxu0 0.0
        %476 = vmatprep.subr.mxu0 0.0
        %477 = vmatpush1.msra.mxu0 0.0
        %478 = vmatprep.subr.mxu0 0.0
        %479 = vmatpush1.msra.mxu0 0.0
        %480 = vmatprep.subr.mxu0 0.0
        %481 = vmatpush1.msra.mxu0 0.0
        %482 = vmatprep.subr.mxu0 0.0
        %483 = vmatpush1.msra.mxu0 0.0
        %484 = vmatprep.subr.mxu0 0.0
        %485 = vmatpush1.msra.mxu0 0.0
        %486 = vmatprep.subr.mxu0 0.0
        %487 = vmatpush1.msra.mxu0 0.0
        %488 = vmatprep.subr.mxu0 0.0
        %489 = vmatpush1.msra.mxu0 0.0
        %490 = vmatprep.subr.mxu0 0.0
        %491 = vmatpush1.msra.mxu0 0.0
        %492 = vmatprep.subr.mxu0 0.0
        %493 = vmatpush1.msra.mxu0 0.0
        %494 = vmatprep.subr.mxu0 0.0
        %495 = vmatpush1.msra.mxu0 0.0
        %496 = vmatprep.subr.mxu0 0.0
        %497 = vmatpush1.msra.mxu0 0.0
        %498 = vmatprep.subr.mxu0 0.0
        %499 = vmatpush1.msra.mxu0 0.0
        %500 = vmatprep.subr.mxu0 0.0
        %501 = vmatpush1.msra.mxu0 0.0
        %502 = vmatprep.subr.mxu0 0.0
        %503 = vmatpush1.msra.mxu0 0.0
        %504 = vmatprep.subr.mxu0 0.0
        %505 = vmatpush1.msra.mxu0 0.0
        %506 = vmatprep.subr.mxu0 0.0
        %507 = vmatpush1.msra.mxu0 0.0
        %508 = vmatprep.subr.mxu0 0.0
        %509 = vmatpush1.msra.mxu0 0.0
        %510 = vmatprep.subr.mxu0 0.0
        %511 = vmatpush1.msra.mxu0 0.0
        %512 = vmatprep.subr.mxu0 0.0
        %513 = vmatpush1.msra.mxu0 0.0
        %514 = vmatprep.subr.mxu0 0.0
        %515 = vmatpush1.msra.mxu0 0.0
        %516 = vmatprep.subr.mxu0 0.0
        %517 = vmatpush1.msra.mxu0 0.0
        %518 = vmatprep.subr.mxu0 0.0
        %519 = vmatpush1.msra.mxu0 0.0
        %520 = vmatprep.subr.mxu0 0.0
        %521 = vmatpush1.msra.mxu0 0.0
        %522 = vmatprep.subr.mxu0 0.0
        %523 = vmatpush1.msra.mxu0 0.0
        %524 = vmatprep.mubr.f32.mxu0 0.0
        %525 = vmatmul.mubr.f32.gmra.mrb[0].mxu0 %v458
        %v526 = vpop.f32.mrb[0].mxu0
        %v527 = vadd.f32 0.0, %v526
        %v528 = vpop.f32.mrb[0].mxu0
        %529 = vdwg.mxu0
        %v530 = vmax.f32 %v527, 0.0
        %vm531 = vcmask 15360
        %v533 = vsel %vm531, %v530, 0
        %vm535 = vcmask 1041408
        %v537 = vsel %vm535, %v456, 0
        %539 = vmatprep.subr.mxu0 0.0
        %540 = vmatpush1.msra.mxu0 %v537
        %541 = vmatprep.subr.mxu0 0.0
        %542 = vmatpush1.msra.mxu0 0.0
        %543 = vmatprep.subr.mxu0 0.0
        %544 = vmatpush1.msra.mxu0 0.0
        %545 = vmatprep.subr.mxu0 0.0
        %546 = vmatpush1.msra.mxu0 0.0
        %547 = vmatprep.subr.mxu0 0.0
        %548 = vmatpush1.msra.mxu0 0.0
        %549 = vmatprep.subr.mxu0 0.0
        %550 = vmatpush1.msra.mxu0 0.0
        %551 = vmatprep.subr.mxu0 0.0
        %552 = vmatpush1.msra.mxu0 0.0
        %553 = vmatprep.subr.mxu0 0.0
        %554 = vmatpush1.msra.mxu0 0.0
        %555 = vmatprep.subr.mxu0 0.0
        %556 = vmatpush1.msra.mxu0 0.0
        %557 = vmatprep.subr.mxu0 0.0
        %558 = vmatpush1.msra.mxu0 0.0
        %559 = vmatprep.subr.mxu0 0.0
        %560 = vmatpush1.msra.mxu0 0.0
        %561 = vmatprep.subr.mxu0 0.0
        %562 = vmatpush1.msra.mxu0 0.0
        %563 = vmatprep.subr.mxu0 0.0
        %564 = vmatpush1.msra.mxu0 0.0
        %565 = vmatprep.subr.mxu0 0.0
        %566 = vmatpush1.msra.mxu0 0.0
        %567 = vmatprep.subr.mxu0 0.0
        %568 = vmatpush1.msra.mxu0 0.0
        %569 = vmatprep.subr.mxu0 0.0
        %570 = vmatpush1.msra.mxu0 0.0
        %571 = vmatprep.subr.mxu0 0.0
        %572 = vmatpush1.msra.mxu0 0.0
        %573 = vmatprep.subr.mxu0 0.0
        %574 = vmatpush1.msra.mxu0 0.0
        %575 = vmatprep.subr.mxu0 0.0
        %576 = vmatpush1.msra.mxu0 0.0
        %577 = vmatprep.subr.mxu0 0.0
        %578 = vmatpush1.msra.mxu0 0.0
        %579 = vmatprep.subr.mxu0 0.0
        %580 = vmatpush1.msra.mxu0 0.0
        %581 = vmatprep.subr.mxu0 0.0
        %582 = vmatpush1.msra.mxu0 0.0
        %583 = vmatprep.subr.mxu0 0.0
        %584 = vmatpush1.msra.mxu0 0.0
        %585 = vmatprep.subr.mxu0 0.0
        %586 = vmatpush1.msra.mxu0 0.0
        %587 = vmatprep.subr.mxu0 0.0
        %588 = vmatpush1.msra.mxu0 0.0
        %589 = vmatprep.subr.mxu0 0.0
        %590 = vmatpush1.msra.mxu0 0.0
        %591 = vmatprep.subr.mxu0 0.0
        %592 = vmatpush1.msra.mxu0 0.0
        %593 = vmatprep.subr.mxu0 0.0
        %594 = vmatpush1.msra.mxu0 0.0
        %595 = vmatprep.subr.mxu0 0.0
        %596 = vmatpush1.msra.mxu0 0.0
        %597 = vmatprep.subr.mxu0 0.0
        %598 = vmatpush1.msra.mxu0 0.0
        %599 = vmatprep.subr.mxu0 0.0
        %600 = vmatpush1.msra.mxu0 0.0
        %601 = vmatprep.subr.mxu0 0.0
        %602 = vmatpush1.msra.mxu0 0.0
        %603 = vmatprep.mubr.f32.mxu0 0.0
        %604 = vmatmul.mubr.f32.gmra.mrb[0].mxu0 %v533
        %v605 = vpop.f32.mrb[0].mxu0
        %v606 = vadd.f32 0.0, %v605
        %v607 = vpop.f32.mrb[0].mxu0
        %608 = vdwg.mxu0
        %vm609 = vcmask 24576
        %v610 = vsel %vm609, %v606, -inf
        %611 = vmax.xlane.f32.xlu0 %v610
        %v612 = vpop.xlane.xlu0 %611
        %v613 = vsub.f32 %v606, %v612
        %v614 = vmul.f32 %v613, 1.442695
        %v615 = vpow.pop %v614
        %v616 = vsel %vm609, %v615, 0.0
        %617 = vadd.xlane.f32.xlu0 %v616
        %v618 = vpop.xlane.xlu0 %617
        %v619 = vrcp.pop %v618
        %v620 = vmul.f32 %v615, %v619
        %v621 = vld [vmem:[%s3] sm:$0xf]
        %v622 = vld [vmem:[%s3 + $0x4] sm:$0xf]
        %v623 = vld [vmem:[%s3 + $0x8] sm:$0xf]
        %v624 = vld [vmem:[%s3 + $0xc] sm:$0xf]
        %v625 = vld [vmem:[%s4] sm:$0x1]
        %v627 = vlaneseq
        %v628 = vshrl.u32 %v627, 7
        %v629 = vsub.s32 0, %v628
        %v630 = vrot.slane %v625, %v629
        %v640 = vunpack.c.l.b16 %v413
        %v641 = vunpack.c.l.b16 %v414
        %v642 = vunpack.c.l.b16 %v415
        %v643 = vunpack.c.l.b16 %v416
        %v644 = vunpack.c.l.b16 %v417
        %v645 = vunpack.c.l.b16 %v418
        %v646 = vunpack.c.l.b16 %v419
        %v647 = vunpack.c.l.b16 %v420
        %v648 = vpack.c.b16 %v641, %v640
        %v649 = vpack.c.b16 %v643, %v642
        %v650 = vpack.c.b16 %v645, %v644
        %v651 = vpack.c.b16 %v647, %v646
        %v656 = vunpack.c.l.b16 %v621
        %v657 = vunpack.c.l.b16 %v622
        %v658 = vunpack.c.l.b16 %v623
        %v659 = vunpack.c.l.b16 %v624
        %v660 = vpack.c.b16 %v657, %v656
        %v661 = vpack.c.b16 %v659, %v658
        %v665 = vsel %vm429, %v648, 0
        %v668 = vsel %vm429, %v649, 0
        %v671 = vsel %vm429, %v650, 0
        %v674 = vsel %vm429, %v651, 0
        %676 = vmatprep.subr.bf16.mxu0 0
        %677 = vmatpush1.bf16.msra.mxu0 %v660
        %678 = vmatprep.subr.bf16.mxu0 0
        %679 = vmatpush1.bf16.msra.mxu0 %v661
        %680 = vmatprep.subr.bf16.mxu0 0
        %681 = vmatpush1.bf16.msra.mxu0 0
        %682 = vmatprep.subr.bf16.mxu0 0
        %683 = vmatpush1.bf16.msra.mxu0 0
        %684 = vmatprep.subr.bf16.mxu0 0
        %685 = vmatpush1.bf16.msra.mxu0 0
        %686 = vmatprep.subr.bf16.mxu0 0
        %687 = vmatpush1.bf16.msra.mxu0 0
        %688 = vmatprep.subr.bf16.mxu0 0
        %689 = vmatpush1.bf16.msra.mxu0 0
        %690 = vmatprep.subr.bf16.mxu0 0
        %691 = vmatpush1.bf16.msra.mxu0 0
        %692 = vmatprep.subr.bf16.mxu0 0
        %693 = vmatpush1.bf16.msra.mxu0 0
        %694 = vmatprep.subr.bf16.mxu0 0
        %695 = vmatpush1.bf16.msra.mxu0 0
        %696 = vmatprep.subr.bf16.mxu0 0
        %697 = vmatpush1.bf16.msra.mxu0 0
        %698 = vmatprep.subr.bf16.mxu0 0
        %699 = vmatpush1.bf16.msra.mxu0 0
        %700 = vmatprep.subr.bf16.mxu0 0
        %701 = vmatpush1.bf16.msra.mxu0 0
        %702 = vmatprep.subr.bf16.mxu0 0
        %703 = vmatpush1.bf16.msra.mxu0 0
        %704 = vmatprep.subr.bf16.mxu0 0
        %705 = vmatpush1.bf16.msra.mxu0 0
        %706 = vmatprep.subr.bf16.mxu0 0
        %707 = vmatpush1.bf16.msra.mxu0 0
        %708 = vmatprep.mubr.bf16.mxu0 0
        %709 = vmatmul.mubr.bf16.gmra.mrb[0].mxu0 %v665
        %v710 = vpop.f32.mrb[0].mxu0
        %v711 = vadd.f32 %v630, %v710
        %v712 = vpop.f32.mrb[0].mxu0
        %v713 = vpop.f32.mrb[0].mxu0
        %v714 = vadd.f32 %v630, %v713
        %v715 = vpop.f32.mrb[0].mxu0
        %716 = vmatprep.mubr.bf16.mxu0 0
        %717 = vmatmul.mubr.bf16.gmra.mrb[0].mxu0 %v668
        %v718 = vpop.f32.mrb[0].mxu0
        %v719 = vadd.f32 %v630, %v718
        %v720 = vpop.f32.mrb[0].mxu0
        %v721 = vpop.f32.mrb[0].mxu0
        %v722 = vadd.f32 %v630, %v721
        %v723 = vpop.f32.mrb[0].mxu0
        %724 = vmatprep.mubr.bf16.mxu0 0
        %725 = vmatmul.mubr.bf16.gmra.mrb[0].mxu0 %v671
        %v726 = vpop.f32.mrb[0].mxu0
        %v727 = vadd.f32 %v630, %v726
        %v728 = vpop.f32.mrb[0].mxu0
        %v729 = vpop.f32.mrb[0].mxu0
        %v730 = vadd.f32 %v630, %v729
        %v731 = vpop.f32.mrb[0].mxu0
        %732 = vmatprep.mubr.bf16.mxu0 0
        %733 = vmatmul.mubr.bf16.gmra.mrb[0].mxu0 %v674
        %v734 = vpop.f32.mrb[0].mxu0
        %v735 = vadd.f32 %v630, %v734
        %v736 = vpop.f32.mrb[0].mxu0
        %v737 = vpop.f32.mrb[0].mxu0
        %v738 = vadd.f32 %v630, %v737
        %v739 = vpop.f32.mrb[0].mxu0
        %740 = vdwg.mxu0
        %v741 = vmax.f32 %v711, 0.0
        %v742 = vmax.f32 %v714, 0.0
        %v743 = vmax.f32 %v719, 0.0
        %v744 = vmax.f32 %v722, 0.0
        %v745 = vmax.f32 %v727, 0.0
        %v746 = vmax.f32 %v730, 0.0
        %v747 = vmax.f32 %v735, 0.0
        %v748 = vmax.f32 %v738, 0.0
        %v749 = vpack.c.bf16 %v742, %v741
        %v750 = vpack.c.bf16 %v744, %v743
        %v751 = vpack.c.bf16 %v746, %v745
        %v752 = vpack.c.bf16 %v748, %v747
        %v753 = vld [vmem:[%s5] sm:$0xf]
        %v754 = vld [vmem:[%s5 + $0x4] sm:$0xf]
        %v755 = vld [vmem:[%s5 + $0x8] sm:$0xf]
        %v756 = vld [vmem:[%s5 + $0xc] sm:$0xf]
        %v757 = vld [vmem:[%s6] sm:$0x1]
        %v759 = vlaneseq
        %v760 = vshrl.u32 %v759, 7
        %v761 = vsub.s32 0, %v760
        %v762 = vrot.slane %v757, %v761
        %v768 = vunpack.c.l.b16 %v753
        %v769 = vunpack.c.l.b16 %v754
        %v770 = vunpack.c.l.b16 %v755
        %v771 = vunpack.c.l.b16 %v756
        %v772 = vpack.c.b16 %v769, %v768
        %v773 = vpack.c.b16 %v771, %v770
        %v777 = vsel %vm429, %v749, 0
        %v780 = vsel %vm429, %v750, 0
        %v783 = vsel %vm429, %v751, 0
        %v786 = vsel %vm429, %v752, 0
        %788 = vmatprep.subr.bf16.mxu0 0
        %789 = vmatpush1.bf16.msra.mxu0 %v772
        %790 = vmatprep.subr.bf16.mxu0 0
        %791 = vmatpush1.bf16.msra.mxu0 %v773
        %792 = vmatprep.subr.bf16.mxu0 0
        %793 = vmatpush1.bf16.msra.mxu0 0
        %794 = vmatprep.subr.bf16.mxu0 0
        %795 = vmatpush1.bf16.msra.mxu0 0
        %796 = vmatprep.subr.bf16.mxu0 0
        %797 = vmatpush1.bf16.msra.mxu0 0
        %798 = vmatprep.subr.bf16.mxu0 0
        %799 = vmatpush1.bf16.msra.mxu0 0
        %800 = vmatprep.subr.bf16.mxu0 0
        %801 = vmatpush1.bf16.msra.mxu0 0
        %802 = vmatprep.subr.bf16.mxu0 0
        %803 = vmatpush1.bf16.msra.mxu0 0
        %804 = vmatprep.subr.bf16.mxu0 0
        %805 = vmatpush1.bf16.msra.mxu0 0
        %806 = vmatprep.subr.bf16.mxu0 0
        %807 = vmatpush1.bf16.msra.mxu0 0
        %808 = vmatprep.subr.bf16.mxu0 0
        %809 = vmatpush1.bf16.msra.mxu0 0
        %810 = vmatprep.subr.bf16.mxu0 0
        %811 = vmatpush1.bf16.msra.mxu0 0
        %812 = vmatprep.subr.bf16.mxu0 0
        %813 = vmatpush1.bf16.msra.mxu0 0
        %814 = vmatprep.subr.bf16.mxu0 0
        %815 = vmatpush1.bf16.msra.mxu0 0
        %816 = vmatprep.subr.bf16.mxu0 0
        %817 = vmatpush1.bf16.msra.mxu0 0
        %818 = vmatprep.subr.bf16.mxu0 0
        %819 = vmatpush1.bf16.msra.mxu0 0
        %820 = vmatprep.mubr.bf16.mxu0 0
        %821 = vmatmul.mubr.bf16.gmra.mrb[0].mxu0 %v777
        %v822 = vpop.f32.mrb[0].mxu0
        %v823 = vadd.f32 %v762, %v822
        %v824 = vpop.f32.mrb[0].mxu0
        %v825 = vpop.f32.mrb[0].mxu0
        %v826 = vadd.f32 %v762, %v825
        %v827 = vpop.f32.mrb[0].mxu0
        %828 = vmatprep.mubr.bf16.mxu0 0
        %829 = vmatmul.mubr.bf16.gmra.mrb[0].mxu0 %v780
        %v830 = vpop.f32.mrb[0].mxu0
        %v831 = vadd.f32 %v762, %v830
        %v832 = vpop.f32.mrb[0].mxu0
        %v833 = vpop.f32.mrb[0].mxu0
        %v834 = vadd.f32 %v762, %v833
        %v835 = vpop.f32.mrb[0].mxu0
        %836 = vmatprep.mubr.bf16.mxu0 0
        %837 = vmatmul.mubr.bf16.gmra.mrb[0].mxu0 %v783
        %v838 = vpop.f32.mrb[0].mxu0
        %v839 = vadd.f32 %v762, %v838
        %v840 = vpop.f32.mrb[0].mxu0
        %v841 = vpop.f32.mrb[0].mxu0
        %v842 = vadd.f32 %v762, %v841
        %v843 = vpop.f32.mrb[0].mxu0
        %844 = vmatprep.mubr.bf16.mxu0 0
        %845 = vmatmul.mubr.bf16.gmra.mrb[0].mxu0 %v786
        %v846 = vpop.f32.mrb[0].mxu0
        %v847 = vadd.f32 %v762, %v846
        %v848 = vpop.f32.mrb[0].mxu0
        %v849 = vpop.f32.mrb[0].mxu0
        %v850 = vadd.f32 %v762, %v849
        %v851 = vpop.f32.mrb[0].mxu0
        %852 = vdwg.mxu0
        %v853 = vpack.c.bf16 %v826, %v823
        %v854 = vpack.c.bf16 %v834, %v831
        %v855 = vpack.c.bf16 %v842, %v839
        %v856 = vpack.c.bf16 %v850, %v847
        %v857 = vsel %vm429, %v823, 0.0
        %v858 = vsel %vm429, %v826, 0.0
        %v859 = vadd.f32 %v857, %v858
        %v860 = vsel %vm429, %v831, 0.0
        %v861 = vadd.f32 %v859, %v860
        %v862 = vsel %vm429, %v834, 0.0
        %v863 = vadd.f32 %v861, %v862
        %v864 = vsel %vm429, %v839, 0.0
        %v865 = vadd.f32 %v863, %v864
        %v866 = vsel %vm429, %v842, 0.0
        %v867 = vadd.f32 %v865, %v866
        %v868 = vsel %vm429, %v847, 0.0
        %v869 = vadd.f32 %v867, %v868
        %v870 = vsel %vm429, %v850, 0.0
        %v871 = vadd.f32 %v869, %v870
        %v872 = vrot.slane %v871, 4
        %v873 = vadd.f32 %v871, %v872
        %v874 = vrot.slane %v873, 2
        %v875 = vadd.f32 %v873, %v874
        %v876 = vrot.slane %v875, 1
        %v877 = vadd.f32 %v875, %v876
        %v878 = vmul.f32 %v877, 0.015625
        %v879 = vld [vmem:[%s7] sm:$0xff]
        %v880 = vld [vmem:[%s7 + $0x8] sm:$0xff]
        %v881 = vld [vmem:[%s7 + $0x10] sm:$0xff]
        %v882 = vld [vmem:[%s7 + $0x18] sm:$0xff]
        %v883 = vld [vmem:[%s8] sm:$0x3]
        %v885 = vsel %vm429, %v878, 0
        %887 = vmatprep.subr.mxu0 0.0
        %888 = vmatpush1.msra.mxu0 %v879
        %889 = vmatprep.subr.mxu0 0.0
        %890 = vmatpush1.msra.mxu0 %v880
        %891 = vmatprep.subr.mxu0 0.0
        %892 = vmatpush1.msra.mxu0 %v881
        %893 = vmatprep.subr.mxu0 0.0
        %894 = vmatpush1.msra.mxu0 %v882
        %895 = vmatprep.subr.mxu0 0.0
        %896 = vmatpush1.msra.mxu0 0.0
        %897 = vmatprep.subr.mxu0 0.0
        %898 = vmatpush1.msra.mxu0 0.0
        %899 = vmatprep.subr.mxu0 0.0
        %900 = vmatpush1.msra.mxu0 0.0
        %901 = vmatprep.subr.mxu0 0.0
        %902 = vmatpush1.msra.mxu0 0.0
        %903 = vmatprep.subr.mxu0 0.0
        %904 = vmatpush1.msra.mxu0 0.0
        %905 = vmatprep.subr.mxu0 0.0
        %906 = vmatpush1.msra.mxu0 0.0
        %907 = vmatprep.subr.mxu0 0.0
        %908 = vmatpush1.msra.mxu0 0.0
        %909 = vmatprep.subr.mxu0 0.0
        %910 = vmatpush1.msra.mxu0 0.0
        %911 = vmatprep.subr.mxu0 0.0
        %912 = vmatpush1.msra.mxu0 0.0
        %913 = vmatprep.subr.mxu0 0.0
        %914 = vmatpush1.msra.mxu0 0.0
        %915 = vmatprep.subr.mxu0 0.0
        %916 = vmatpush1.msra.mxu0 0.0
        %917 = vmatprep.subr.mxu0 0.0
        %918 = vmatpush1.msra.mxu0 0.0
        %919 = vmatprep.subr.mxu0 0.0
        %920 = vmatpush1.msra.mxu0 0.0
        %921 = vmatprep.subr.mxu0 0.0
        %922 = vmatpush1.msra.mxu0 0.0
        %923 = vmatprep.subr.mxu0 0.0
        %924 = vmatpush1.msra.mxu0 0.0
        %925 = vmatprep.subr.mxu0 0.0
        %926 = vmatpush1.msra.mxu0 0.0
        %927 = vmatprep.subr.mxu0 0.0
        %928 = vmatpush1.msra.mxu0 0.0
        %929 = vmatprep.subr.mxu0 0.0
        %930 = vmatpush1.msra.mxu0 0.0
        %931 = vmatprep.subr.mxu0 0.0
        %932 = vmatpush1.msra.mxu0 0.0
        %933 = vmatprep.subr.mxu0 0.0
        %934 = vmatpush1.msra.mxu0 0.0
        %935 = vmatprep.subr.mxu0 0.0
        %936 = vmatpush1.msra.mxu0 0.0
        %937 = vmatprep.subr.mxu0 0.0
        %938 = vmatpush1.msra.mxu0 0.0
        %939 = vmatprep.subr.mxu0 0.0
        %940 = vmatpush1.msra.mxu0 0.0
        %941 = vmatprep.subr.mxu0 0.0
        %942 = vmatpush1.msra.mxu0 0.0
        %943 = vmatprep.subr.mxu0 0.0
        %944 = vmatpush1.msra.mxu0 0.0
        %945 = vmatprep.subr.mxu0 0.0
        %946 = vmatpush1.msra.mxu0 0.0
        %947 = vmatprep.subr.mxu0 0.0
        %948 = vmatpush1.msra.mxu0 0.0
        %949 = vmatprep.subr.mxu0 0.0
        %950 = vmatpush1.msra.mxu0 0.0
        %951 = vmatprep.mubr.f32.mxu0 0.0
        %952 = vmatmul.mubr.f32.gmra.mrb[0].mxu0 %v885
        %v953 = vpop.f32.mrb[0].mxu0
        %v954 = vadd.f32 0.0, %v953
        %v955 = vpop.f32.mrb[0].mxu0
        %956 = vdwg.mxu0
        %v957 = vmax.f32 %v954, 0.0
        %v959 = vsel %vm531, %v957, 0
        %v962 = vsel %vm535, %v883, 0
        %964 = vmatprep.subr.mxu0 0.0
        %965 = vmatpush1.msra.mxu0 %v962
        %966 = vmatprep.subr.mxu0 0.0
        %967 = vmatpush1.msra.mxu0 0.0
        %968 = vmatprep.subr.mxu0 0.0
        %969 = vmatpush1.msra.mxu0 0.0
        %970 = vmatprep.subr.mxu0 0.0
        %971 = vmatpush1.msra.mxu0 0.0
        %972 = vmatprep.subr.mxu0 0.0
        %973 = vmatpush1.msra.mxu0 0.0
        %974 = vmatprep.subr.mxu0 0.0
        %975 = vmatpush1.msra.mxu0 0.0
        %976 = vmatprep.subr.mxu0 0.0
        %977 = vmatpush1.msra.mxu0 0.0
        %978 = vmatprep.subr.mxu0 0.0
        %979 = vmatpush1.msra.mxu0 0.0
        %980 = vmatprep.subr.mxu0 0.0
        %981 = vmatpush1.msra.mxu0 0.0
        %982 = vmatprep.subr.mxu0 0.0
        %983 = vmatpush1.msra.mxu0 0.0
        %984 = vmatprep.subr.mxu0 0.0
        %985 = vmatpush1.msra.mxu0 0.0
        %986 = vmatprep.subr.mxu0 0.0
        %987 = vmatpush1.msra.mxu0 0.0
        %988 = vmatprep.subr.mxu0 0.0
        %989 = vmatpush1.msra.mxu0 0.0
        %990 = vmatprep.subr.mxu0 0.0
        %991 = vmatpush1.msra.mxu0 0.0
        %992 = vmatprep.subr.mxu0 0.0
        %993 = vmatpush1.msra.mxu0 0.0
        %994 = vmatprep.subr.mxu0 0.0
        %995 = vmatpush1.msra.mxu0 0.0
        %996 = vmatprep.subr.mxu0 0.0
        %997 = vmatpush1.msra.mxu0 0.0
        %998 = vmatprep.subr.mxu0 0.0
        %999 = vmatpush1.msra.mxu0 0.0
        %1000 = vmatprep.subr.mxu0 0.0
        %1001 = vmatpush1.msra.mxu0 0.0
        %1002 = vmatprep.subr.mxu0 0.0
        %1003 = vmatpush1.msra.mxu0 0.0
        %1004 = vmatprep.subr.mxu0 0.0
        %1005 = vmatpush1.msra.mxu0 0.0
        %1006 = vmatprep.subr.mxu0 0.0
        %1007 = vmatpush1.msra.mxu0 0.0
        %1008 = vmatprep.subr.mxu0 0.0
        %1009 = vmatpush1.msra.mxu0 0.0
        %1010 = vmatprep.subr.mxu0 0.0
        %1011 = vmatpush1.msra.mxu0 0.0
        %1012 = vmatprep.subr.mxu0 0.0
        %1013 = vmatpush1.msra.mxu0 0.0
        %1014 = vmatprep.subr.mxu0 0.0
        %1015 = vmatpush1.msra.mxu0 0.0
        %1016 = vmatprep.subr.mxu0 0.0
        %1017 = vmatpush1.msra.mxu0 0.0
        %1018 = vmatprep.subr.mxu0 0.0
        %1019 = vmatpush1.msra.mxu0 0.0
        %1020 = vmatprep.subr.mxu0 0.0
        %1021 = vmatpush1.msra.mxu0 0.0
        %1022 = vmatprep.subr.mxu0 0.0
        %1023 = vmatpush1.msra.mxu0 0.0
        %1024 = vmatprep.subr.mxu0 0.0
        %1025 = vmatpush1.msra.mxu0 0.0
        %1026 = vmatprep.subr.mxu0 0.0
        %1027 = vmatpush1.msra.mxu0 0.0
        %1028 = vmatprep.mubr.f32.mxu0 0.0
        %1029 = vmatmul.mubr.f32.gmra.mrb[0].mxu0 %v959
        %v1030 = vpop.f32.mrb[0].mxu0
        %v1031 = vadd.f32 0.0, %v1030
        %v1032 = vpop.f32.mrb[0].mxu0
        %1033 = vdwg.mxu0
        %v1034 = vsub.f32 0.0, %v1031
        %v1035 = vmul.f32 %v1034, 1.442695
        %v1036 = vpow.pop %v1035
        %v1037 = vadd.f32 %v1036, 1.0
        %v1038 = vrcp.pop %v1037
        %v1039 = vmul.f32 1.0, %v1038
        %v1040 = vld [vmem:[%s9] sm:$0xf]
        %v1041 = vld [vmem:[%s9 + $0x4] sm:$0xf]
        %v1042 = vld [vmem:[%s9 + $0x8] sm:$0xf]
        %v1043 = vld [vmem:[%s9 + $0xc] sm:$0xf]
        %v1044 = vld [vmem:[%s9 + $0x10] sm:$0xf]
        %v1045 = vld [vmem:[%s9 + $0x14] sm:$0xf]
        %v1046 = vld [vmem:[%s9 + $0x18] sm:$0xf]
        %v1047 = vld [vmem:[%s9 + $0x1c] sm:$0xf]
        %v1048 = vld [vmem:[%s9 + $0x20] sm:$0xf]
        %v1049 = vld [vmem:[%s9 + $0x24] sm:$0xf]
        %v1050 = vld [vmem:[%s9 + $0x28] sm:$0xf]
        %v1051 = vld [vmem:[%s9 + $0x2c] sm:$0xf]
        %v1052 = vld [vmem:[%s9 + $0x30] sm:$0xf]
        %v1053 = vld [vmem:[%s9 + $0x34] sm:$0xf]
        %v1054 = vld [vmem:[%s9 + $0x38] sm:$0xf]
        %v1055 = vld [vmem:[%s9 + $0x3c] sm:$0xf]
        %v1056 = vpack.c.bf16 %v620, %v620
        %s1058 = vtos %v1056
        %v1059 = vstv %s1058
        %v1060 = vpack.i.b16 %v1059, %v1059
        %v1062 = vmul.bf16 %v1060, %v1040
        %v1063 = vmul.bf16 %v1060, %v1041
        %v1064 = vmul.bf16 %v1060, %v1042
        %v1065 = vmul.bf16 %v1060, %v1043
        %1067 = vrot.lane.b32.xlu0 %v1056, 127
        %v1068 = vpop.permute.xlu0 %1067
        %s1070 = vtos %v1068
        %v1071 = vstv %s1070
        %v1072 = vpack.i.b16 %v1071, %v1071
        %v1074 = vmul.bf16 %v1072, %v1044
        %v1075 = vmul.bf16 %v1072, %v1045
        %v1076 = vmul.bf16 %v1072, %v1046
        %v1077 = vmul.bf16 %v1072, %v1047
        %v1078 = vadd.bf16 %v1062, %v1074
        %v1079 = vadd.bf16 %v1063, %v1075
        %v1080 = vadd.bf16 %v1064, %v1076
        %v1081 = vadd.bf16 %v1065, %v1077
        %1082 = vrot.lane.b32.xlu0 %v1056, 126
        %v1083 = vpop.permute.xlu0 %1082
        %s1085 = vtos %v1083
        %v1086 = vstv %s1085
        %v1087 = vpack.i.b16 %v1086, %v1086
        %v1089 = vmul.bf16 %v1087, %v1048
        %v1090 = vmul.bf16 %v1087, %v1049
        %v1091 = vmul.bf16 %v1087, %v1050
        %v1092 = vmul.bf16 %v1087, %v1051
        %v1093 = vadd.bf16 %v1078, %v1089
        %v1094 = vadd.bf16 %v1079, %v1090
        %v1095 = vadd.bf16 %v1080, %v1091
        %v1096 = vadd.bf16 %v1081, %v1092
        %1097 = vrot.lane.b32.xlu0 %v1056, 125
        %v1098 = vpop.permute.xlu0 %1097
        %s1100 = vtos %v1098
        %v1101 = vstv %s1100
        %v1102 = vpack.i.b16 %v1101, %v1101
        %v1104 = vmul.bf16 %v1102, %v1052
        %v1105 = vmul.bf16 %v1102, %v1053
        %v1106 = vmul.bf16 %v1102, %v1054
        %v1107 = vmul.bf16 %v1102, %v1055
        %v1108 = vadd.bf16 %v1093, %v1104
        %v1109 = vadd.bf16 %v1094, %v1105
        %v1110 = vadd.bf16 %v1095, %v1106
        %v1111 = vadd.bf16 %v1096, %v1107
        %v1112 = vunpack.c.l.bf16 %v853
        %v1113 = vunpack.c.h.bf16 %v853
        %v1114 = vunpack.c.l.bf16 %v854
        %v1115 = vunpack.c.h.bf16 %v854
        %v1116 = vunpack.c.l.bf16 %v855
        %v1117 = vunpack.c.h.bf16 %v855
        %v1118 = vunpack.c.l.bf16 %v856
        %v1119 = vunpack.c.h.bf16 %v856
        %v1120 = vlaneseq
        %v1121 = vshrl.u32 %v1120, 7
        %v1122 = vsub.s32 0, %v1121
        %v1123 = vrot.slane %v1039, %v1122
        %v1124 = vmul.f32 %v1112, %v1123
        %v1125 = vmul.f32 %v1113, %v1123
        %v1126 = vmul.f32 %v1114, %v1123
        %v1127 = vmul.f32 %v1115, %v1123
        %v1128 = vmul.f32 %v1116, %v1123
        %v1129 = vmul.f32 %v1117, %v1123
        %v1130 = vmul.f32 %v1118, %v1123
        %v1131 = vmul.f32 %v1119, %v1123
        %v1136 = vunpack.c.l.b16 %v1108
        %v1137 = vunpack.c.l.b16 %v1109
        %v1138 = vunpack.c.l.b16 %v1110
        %v1139 = vunpack.c.l.b16 %v1111
        %v1140 = vpack.c.b16 %v1137, %v1136
        %v1141 = vpack.c.b16 %v1139, %v1138
        %v1145 = vsel %vm429, %v853, 0
        %v1148 = vsel %vm429, %v854, 0
        %v1151 = vsel %vm429, %v855, 0
        %v1154 = vsel %vm429, %v856, 0
        %1156 = vmatprep.subr.bf16.mxu0 0
        %1157 = vmatpush1.bf16.msra.mxu0 %v1140
        %1158 = vmatprep.subr.bf16.mxu0 0
        %1159 = vmatpush1.bf16.msra.mxu0 %v1141
        %1160 = vmatprep.subr.bf16.mxu0 0
        %1161 = vmatpush1.bf16.msra.mxu0 0
        %1162 = vmatprep.subr.bf16.mxu0 0
        %1163 = vmatpush1.bf16.msra.mxu0 0
        %1164 = vmatprep.subr.bf16.mxu0 0
        %1165 = vmatpush1.bf16.msra.mxu0 0
        %1166 = vmatprep.subr.bf16.mxu0 0
        %1167 = vmatpush1.bf16.msra.mxu0 0
        %1168 = vmatprep.subr.bf16.mxu0 0
        %1169 = vmatpush1.bf16.msra.mxu0 0
        %1170 = vmatprep.subr.bf16.mxu0 0
        %1171 = vmatpush1.bf16.msra.mxu0 0
        %1172 = vmatprep.subr.bf16.mxu0 0
        %1173 = vmatpush1.bf16.msra.mxu0 0
        %1174 = vmatprep.subr.bf16.mxu0 0
        %1175 = vmatpush1.bf16.msra.mxu0 0
        %1176 = vmatprep.subr.bf16.mxu0 0
        %1177 = vmatpush1.bf16.msra.mxu0 0
        %1178 = vmatprep.subr.bf16.mxu0 0
        %1179 = vmatpush1.bf16.msra.mxu0 0
        %1180 = vmatprep.subr.bf16.mxu0 0
        %1181 = vmatpush1.bf16.msra.mxu0 0
        %1182 = vmatprep.subr.bf16.mxu0 0
        %1183 = vmatpush1.bf16.msra.mxu0 0
        %1184 = vmatprep.subr.bf16.mxu0 0
        %1185 = vmatpush1.bf16.msra.mxu0 0
        %1186 = vmatprep.subr.bf16.mxu0 0
        %1187 = vmatpush1.bf16.msra.mxu0 0
        %1188 = vmatprep.mubr.bf16.mxu0 0
        %1189 = vmatmul.mubr.bf16.gmra.mrb[0].mxu0 %v1145
        %v1190 = vpop.f32.mrb[0].mxu0
        %v1191 = vadd.f32 %v1124, %v1190
        %v1192 = vpop.f32.mrb[0].mxu0
        %v1193 = vpop.f32.mrb[0].mxu0
        %v1194 = vadd.f32 %v1125, %v1193
        %v1195 = vpop.f32.mrb[0].mxu0
        %1196 = vmatprep.mubr.bf16.mxu0 0
        %1197 = vmatmul.mubr.bf16.gmra.mrb[0].mxu0 %v1148
        %v1198 = vpop.f32.mrb[0].mxu0
        %v1199 = vadd.f32 %v1126, %v1198
        %v1200 = vpop.f32.mrb[0].mxu0
        %v1201 = vpop.f32.mrb[0].mxu0
        %v1202 = vadd.f32 %v1127, %v1201
        %v1203 = vpop.f32.mrb[0].mxu0
        %1204 = vmatprep.mubr.bf16.mxu0 0
        %1205 = vmatmul.mubr.bf16.gmra.mrb[0].mxu0 %v1151
        %v1206 = vpop.f32.mrb[0].mxu0
        %v1207 = vadd.f32 %v1128, %v1206
        %v1208 = vpop.f32.mrb[0].mxu0
        %v1209 = vpop.f32.mrb[0].mxu0
        %v1210 = vadd.f32 %v1129, %v1209
        %v1211 = vpop.f32.mrb[0].mxu0
        %1212 = vmatprep.mubr.bf16.mxu0 0
        %1213 = vmatmul.mubr.bf16.gmra.mrb[0].mxu0 %v1154
        %v1214 = vpop.f32.mrb[0].mxu0
        %v1215 = vadd.f32 %v1130, %v1214
        %v1216 = vpop.f32.mrb[0].mxu0
        %v1217 = vpop.f32.mrb[0].mxu0
        %v1218 = vadd.f32 %v1131, %v1217
        %v1219 = vpop.f32.mrb[0].mxu0
        %1220 = vdwg.mxu0
        %v1221 = vpack.c.bf16 %v1194, %v1191
        %v1222 = vpack.c.bf16 %v1202, %v1199
        %v1223 = vpack.c.bf16 %v1210, %v1207
        %v1224 = vpack.c.bf16 %v1218, %v1215
        %v1225 = vld [vmem:[%s11] sm:$0x1]
        %v1226 = vld [vmem:[%s10] sm:$0xf]
        %v1227 = vld [vmem:[%s10 + $0x4] sm:$0xf]
        %v1228 = vld [vmem:[%s10 + $0x8] sm:$0xf]
        %v1229 = vld [vmem:[%s10 + $0xc] sm:$0xf]
        %v1231 = vlaneseq
        %v1232 = vshrl.u32 %v1231, 7
        %v1233 = vsub.s32 0, %v1232
        %v1234 = vrot.slane %v1225, %v1233
        %v1240 = vunpack.c.l.b16 %v1226
        %v1241 = vunpack.c.l.b16 %v1227
        %v1242 = vunpack.c.l.b16 %v1228
        %v1243 = vunpack.c.l.b16 %v1229
        %v1244 = vpack.c.b16 %v1241, %v1240
        %v1245 = vpack.c.b16 %v1243, %v1242
        %1248 = vmatprep.subr.bf16.mxu0 0
        %1249 = vmatpush1.bf16.msra.mxu0 %v1244
        %1250 = vmatprep.subr.bf16.mxu0 0
        %1251 = vmatpush1.bf16.msra.mxu0 %v1245
        %1252 = vmatprep.subr.bf16.mxu0 0
        %1253 = vmatpush1.bf16.msra.mxu0 0
        %1254 = vmatprep.subr.bf16.mxu0 0
        %1255 = vmatpush1.bf16.msra.mxu0 0
        %1256 = vmatprep.subr.bf16.mxu0 0
        %1257 = vmatpush1.bf16.msra.mxu0 0
        %1258 = vmatprep.subr.bf16.mxu0 0
        %1259 = vmatpush1.bf16.msra.mxu0 0
        %1260 = vmatprep.subr.bf16.mxu0 0
        %1261 = vmatpush1.bf16.msra.mxu0 0
        %1262 = vmatprep.subr.bf16.mxu0 0
        %1263 = vmatpush1.bf16.msra.mxu0 0
        %1264 = vmatprep.subr.bf16.mxu0 0
        %1265 = vmatpush1.bf16.msra.mxu0 0
        %1266 = vmatprep.subr.bf16.mxu0 0
        %1267 = vmatpush1.bf16.msra.mxu0 0
        %1268 = vmatprep.subr.bf16.mxu0 0
        %1269 = vmatpush1.bf16.msra.mxu0 0
        %1270 = vmatprep.subr.bf16.mxu0 0
        %1271 = vmatpush1.bf16.msra.mxu0 0
        %1272 = vmatprep.subr.bf16.mxu0 0
        %1273 = vmatpush1.bf16.msra.mxu0 0
        %1274 = vmatprep.subr.bf16.mxu0 0
        %1275 = vmatpush1.bf16.msra.mxu0 0
        %1276 = vmatprep.subr.bf16.mxu0 0
        %1277 = vmatpush1.bf16.msra.mxu0 0
        %1278 = vmatprep.subr.bf16.mxu0 0
        %1279 = vmatpush1.bf16.msra.mxu0 0
        %1280 = vmatprep.mubr.bf16.mxu0 0
        %1281 = vmatmul.mubr.bf16.gmra.mrb[0].mxu0 %v665
        %v1282 = vpop.f32.mrb[0].mxu0
        %v1283 = vadd.f32 %v1234, %v1282
        %v1284 = vpop.f32.mrb[0].mxu0
        %v1285 = vpop.f32.mrb[0].mxu0
        %v1286 = vadd.f32 %v1234, %v1285
        %v1287 = vpop.f32.mrb[0].mxu0
        %1288 = vmatprep.mubr.bf16.mxu0 0
        %1289 = vmatmul.mubr.bf16.gmra.mrb[0].mxu0 %v668
        %v1290 = vpop.f32.mrb[0].mxu0
        %v1291 = vadd.f32 %v1234, %v1290
        %v1292 = vpop.f32.mrb[0].mxu0
        %v1293 = vpop.f32.mrb[0].mxu0
        %v1294 = vadd.f32 %v1234, %v1293
        %v1295 = vpop.f32.mrb[0].mxu0
        %1296 = vmatprep.mubr.bf16.mxu0 0
        %1297 = vmatmul.mubr.bf16.gmra.mrb[0].mxu0 %v671
        %v1298 = vpop.f32.mrb[0].mxu0
        %v1299 = vadd.f32 %v1234, %v1298
        %v1300 = vpop.f32.mrb[0].mxu0
        %v1301 = vpop.f32.mrb[0].mxu0
        %v1302 = vadd.f32 %v1234, %v1301
        %v1303 = vpop.f32.mrb[0].mxu0
        %1304 = vmatprep.mubr.bf16.mxu0 0
        %1305 = vmatmul.mubr.bf16.gmra.mrb[0].mxu0 %v674
        %v1306 = vpop.f32.mrb[0].mxu0
        %v1307 = vadd.f32 %v1234, %v1306
        %v1308 = vpop.f32.mrb[0].mxu0
        %v1309 = vpop.f32.mrb[0].mxu0
        %v1310 = vadd.f32 %v1234, %v1309
        %v1311 = vpop.f32.mrb[0].mxu0
        %1312 = vdwg.mxu0
        %v1313 = vld [vmem:[%s10 + $0x10] sm:$0xf]
        %v1314 = vld [vmem:[%s10 + $0x14] sm:$0xf]
        %v1315 = vld [vmem:[%s10 + $0x18] sm:$0xf]
        %v1316 = vld [vmem:[%s10 + $0x1c] sm:$0xf]
        %v1321 = vunpack.c.l.b16 %v1313
        %v1322 = vunpack.c.l.b16 %v1314
        %v1323 = vunpack.c.l.b16 %v1315
        %v1324 = vunpack.c.l.b16 %v1316
        %v1325 = vpack.c.b16 %v1322, %v1321
        %v1326 = vpack.c.b16 %v1324, %v1323
        %v1330 = vsel %vm429, %v1221, 0
        %v1333 = vsel %vm429, %v1222, 0
        %v1336 = vsel %vm429, %v1223, 0
        %v1339 = vsel %vm429, %v1224, 0
        %1341 = vmatprep.subr.bf16.mxu0 0
        %1342 = vmatpush1.bf16.msra.mxu0 %v1325
        %1343 = vmatprep.subr.bf16.mxu0 0
        %1344 = vmatpush1.bf16.msra.mxu0 %v1326
        %1345 = vmatprep.subr.bf16.mxu0 0
        %1346 = vmatpush1.bf16.msra.mxu0 0
        %1347 = vmatprep.subr.bf16.mxu0 0
        %1348 = vmatpush1.bf16.msra.mxu0 0
        %1349 = vmatprep.subr.bf16.mxu0 0
        %1350 = vmatpush1.bf16.msra.mxu0 0
        %1351 = vmatprep.subr.bf16.mxu0 0
        %1352 = vmatpush1.bf16.msra.mxu0 0
        %1353 = vmatprep.subr.bf16.mxu0 0
        %1354 = vmatpush1.bf16.msra.mxu0 0
        %1355 = vmatprep.subr.bf16.mxu0 0
        %1356 = vmatpush1.bf16.msra.mxu0 0
        %1357 = vmatprep.subr.bf16.mxu0 0
        %1358 = vmatpush1.bf16.msra.mxu0 0
        %1359 = vmatprep.subr.bf16.mxu0 0
        %1360 = vmatpush1.bf16.msra.mxu0 0
        %1361 = vmatprep.subr.bf16.mxu0 0
        %1362 = vmatpush1.bf16.msra.mxu0 0
        %1363 = vmatprep.subr.bf16.mxu0 0
        %1364 = vmatpush1.bf16.msra.mxu0 0
        %1365 = vmatprep.subr.bf16.mxu0 0
        %1366 = vmatpush1.bf16.msra.mxu0 0
        %1367 = vmatprep.subr.bf16.mxu0 0
        %1368 = vmatpush1.bf16.msra.mxu0 0
        %1369 = vmatprep.subr.bf16.mxu0 0
        %1370 = vmatpush1.bf16.msra.mxu0 0
        %1371 = vmatprep.subr.bf16.mxu0 0
        %1372 = vmatpush1.bf16.msra.mxu0 0
        %1373 = vmatprep.mubr.bf16.mxu0 0
        %1374 = vmatmul.mubr.bf16.gmra.mrb[0].mxu0 %v1330
        %v1375 = vpop.f32.mrb[0].mxu0
        %v1376 = vadd.f32 0.0, %v1375
        %v1377 = vpop.f32.mrb[0].mxu0
        %v1378 = vpop.f32.mrb[0].mxu0
        %v1379 = vadd.f32 0.0, %v1378
        %v1380 = vpop.f32.mrb[0].mxu0
        %1381 = vmatprep.mubr.bf16.mxu0 0
        %1382 = vmatmul.mubr.bf16.gmra.mrb[0].mxu0 %v1333
        %v1383 = vpop.f32.mrb[0].mxu0
        %v1384 = vadd.f32 0.0, %v1383
        %v1385 = vpop.f32.mrb[0].mxu0
        %v1386 = vpop.f32.mrb[0].mxu0
        %v1387 = vadd.f32 0.0, %v1386
        %v1388 = vpop.f32.mrb[0].mxu0
        %1389 = vmatprep.mubr.bf16.mxu0 0
        %1390 = vmatmul.mubr.bf16.gmra.mrb[0].mxu0 %v1336
        %v1391 = vpop.f32.mrb[0].mxu0
        %v1392 = vadd.f32 0.0, %v1391
        %v1393 = vpop.f32.mrb[0].mxu0
        %v1394 = vpop.f32.mrb[0].mxu0
        %v1395 = vadd.f32 0.0, %v1394
        %v1396 = vpop.f32.mrb[0].mxu0
        %1397 = vmatprep.mubr.bf16.mxu0 0
        %1398 = vmatmul.mubr.bf16.gmra.mrb[0].mxu0 %v1339
        %v1399 = vpop.f32.mrb[0].mxu0
        %v1400 = vadd.f32 0.0, %v1399
        %v1401 = vpop.f32.mrb[0].mxu0
        %v1402 = vpop.f32.mrb[0].mxu0
        %v1403 = vadd.f32 0.0, %v1402
        %v1404 = vpop.f32.mrb[0].mxu0
        %1405 = vdwg.mxu0
        %v1406 = vadd.f32 %v1283, %v1376
        %v1407 = vadd.f32 %v1286, %v1379
        %v1408 = vadd.f32 %v1291, %v1384
        %v1409 = vadd.f32 %v1294, %v1387
        %v1410 = vadd.f32 %v1299, %v1392
        %v1411 = vadd.f32 %v1302, %v1395
        %v1412 = vadd.f32 %v1307, %v1400
        %v1413 = vadd.f32 %v1310, %v1403
        %v1414 = vmax.f32 %v1406, 0.0
        %v1415 = vmax.f32 %v1407, 0.0
        %v1416 = vmax.f32 %v1408, 0.0
        %v1417 = vmax.f32 %v1409, 0.0
        %v1418 = vmax.f32 %v1410, 0.0
        %v1419 = vmax.f32 %v1411, 0.0
        %v1420 = vmax.f32 %v1412, 0.0
        %v1421 = vmax.f32 %v1413, 0.0
        %v1422 = vpack.c.bf16 %v1415, %v1414
        %v1423 = vpack.c.bf16 %v1417, %v1416
        %v1424 = vpack.c.bf16 %v1419, %v1418
        %v1425 = vpack.c.bf16 %v1421, %v1420
        %v1430 = vunpack.c.l.b16 %v1422
        %v1431 = vunpack.c.h.b16 %v1422
        %v1432 = vunpack.c.l.b16 %v1423
        %v1433 = vunpack.c.h.b16 %v1423
        %v1434 = vunpack.c.l.b16 %v1424
        %v1435 = vunpack.c.h.b16 %v1424
        %v1436 = vunpack.c.l.b16 %v1425
        %v1437 = vunpack.c.h.b16 %v1425
        %v1438 = vpack.c.b16 %v1430, %v1430
        %v1439 = vpack.c.b16 %v1431, %v1431
        %v1440 = vpack.c.b16 %v1432, %v1432
        %v1441 = vpack.c.b16 %v1433, %v1433
        %v1442 = vpack.c.b16 %v1434, %v1434
        %v1443 = vpack.c.b16 %v1435, %v1435
        %v1444 = vpack.c.b16 %v1436, %v1436
        %v1445 = vpack.c.b16 %v1437, %v1437
        %1454 = vst [vmem:[%s406] sm:$0xf] %v1438
        %1455 = vst [vmem:[%s406 + $0x4] sm:$0xf] %v1439
        %1456 = vst [vmem:[%s406 + $0x8] sm:$0xf] %v1440
        %1457 = vst [vmem:[%s406 + $0xc] sm:$0xf] %v1441
        %1458 = vst [vmem:[%s406 + $0x10] sm:$0xf] %v1442
        %1459 = vst [vmem:[%s406 + $0x14] sm:$0xf] %v1443
        %1460 = vst [vmem:[%s406 + $0x18] sm:$0xf] %v1444
        %1461 = vst [vmem:[%s406 + $0x1c] sm:$0xf] %v1445
        %s1462 = sand.u32 %s291, 1
        %s1463 = scalar_lea.sflag [#allocation3], %s1462
        %s1464 = sand.u32 %s291, 1
        %s1465 = smul.addr %s1464, 32
        %s1466 = scalar_lea.vmem [#allocation2], %s1465
        // Predicated region
        $region69: #{tpu_custom_call.1} parent=67 // pred_check
          %p1467 = pneg %p301
        $region70: #{tpu_custom_call.1} parent=67 // pred_check_branch
          %1469 = sbr.rel (%p1467) target = $region72
        $region71: #{tpu_custom_call.1} parent=67 // pred_region
          %s1471 = ssub.s32 512, 512
          %1472 = vsyncadd %s1463, %s1471
          %s1473 = smul.addr %s26, 8
          %s1474 = smul.addr %s1473, 64
          %s1475 = scalar_lea.hbm %s12, %s1474
          %s1476 = sshll.u32 %s1466, 4
          %s1477 = int_to_ptr.vmem [resolvable:$true] %s1476
          %1482 = dma.vmem_to_hbm [thread:$0]  %s1477, 512, %s1475, %s1463, 64, 64, 4
        $region72: #{tpu_custom_call.1} parent=67 // pred_fallthru
          _
      $region68: #{tpu_custom_call.1} parent=5 // pred_fallthru
        _
      %p1483 = scmp.le.s32.totalorder 2, %s21
      // Predicated region
      $region73: #{tpu_custom_call.1} parent=5 // pred_check
        %p1484 = pneg %p1483
      $region74: #{tpu_custom_call.1} parent=5 // pred_check_branch
        %1486 = sbr.rel (%p1484) target = $region76
      $region75: #{tpu_custom_call.1} parent=5 // pred_region
        %s1487 = ssub.s32 %s21, 2
        // Predicated region
        $region77: #{tpu_custom_call.1} parent=75 // pred_check
          %p1488 = pneg %p307
        $region78: #{tpu_custom_call.1} parent=75 // pred_check_branch
          %1490 = sbr.rel (%p1488) target = $region80
        $region79: #{tpu_custom_call.1} parent=75 // pred_region
          %s1491 = sand.u32 %s292, 1
          %s1492 = scalar_lea.sflag [#allocation3], %s1491
          %s1493 = sand.u32 %s292, 1
          %s1494 = smul.addr %s1493, 32
          %s1495 = scalar_lea.vmem [#allocation2], %s1494
          %1496 = dma.done %s1492, 512
        $region80: #{tpu_custom_call.1} parent=75 // pred_fallthru
          _
      $region76: #{tpu_custom_call.1} parent=5 // pred_fallthru
        _
    $region6: #{tpu_custom_call.1} parent=1 // loop_footer
      %s25 = sadd.s32 1, %s21
    $region7: #{tpu_custom_call.1} parent=1 // loop_footer_branch
      %20 = sbr.rel target = $region3
    $region8: #{tpu_custom_call.1} parent=1 // loop_exit
      _
    %1497 = vsyncpa [#allocation3], 1
    %s1498 = scalar_lea.sflag [#allocation3], 1
    %1499 = vsyncpa %s1498, 1

</llo_original>
